<compile_context>
chip_gen: v7x
topology: tpu7x:2x2x1
jax: 0.10.0
libtpu: 0.0.40
codegen_flags: <defaults>
</compile_context>

<pallas_src>
import numpy as np
import jax
import jax.numpy as jnp
from jax import lax
from jax.experimental import pallas as pl
from jax.experimental.pallas import tpu as pltpu

D_MODEL = 128
H_GRU = 32
LIN_OUT = 16
K_CONV = 4
LRELU_SLOPE = 0.01
LN_EPS = 1e-5


def _make_kernel(T):
    f32 = jnp.float32
    H = H_GRU

    def kernel(
        xim_ref, wcp_ref, bconv_ref,
        wqkv_ref, bqkv_ref, wo_ref, bo_ref,
        g1_ref, be1_ref, wff1_ref, bff1_ref, wff2_ref, bff2_ref, g2_ref, be2_ref,
        wlg_ref, blg_ref, wgru_ref, bgru_ref,
        wfc1_ref, wfc2_ref, wfc3_ref,
        out_ref,
        xi_ref, gru_ref,
    ):
        # ---- Conv1d + AvgPool1d folded into a single matmul, then ReLU -------
        h = jnp.maximum(
            jnp.dot(xim_ref[...], wcp_ref[...], preferred_element_type=f32)
            + bconv_ref[...], 0.0)                                 # (T, 128)
        # Dropout(0.1): identity in eval mode.

        # ---- TransformerEncoderLayer (post-norm, nhead=1, ReLU FF) -----------
        def layernorm(x, g, b):
            mu = jnp.mean(x, axis=-1, keepdims=True)
            var = jnp.mean((x - mu) ** 2, axis=-1, keepdims=True)
            return (x - mu) * lax.rsqrt(var + LN_EPS) * g + b

        qkv = jnp.dot(h, wqkv_ref[...], preferred_element_type=f32) + bqkv_ref[...]
        q = qkv[:, 0:128]
        k = qkv[:, 128:256]
        v = qkv[:, 256:384]
        # q @ k^T without materializing the transpose.
        scores = lax.dot_general(q, k, (((1,), (1,)), ((), ())),
                                 preferred_element_type=f32) * (1.0 / np.sqrt(D_MODEL))
        scores = scores - jnp.max(scores, axis=-1, keepdims=True)
        e = jnp.exp(scores)
        # approx=True -> EUP vrcp; ~1e-3-level rel. perturbation, fine for inference.
        attn = e * pl.reciprocal(jnp.sum(e, axis=-1, keepdims=True), approx=True)
        a = jnp.dot(attn, v, preferred_element_type=f32)
        sa = jnp.dot(a, wo_ref[...], preferred_element_type=f32) + bo_ref[...]
        h = layernorm(h + sa, g1_ref[...], be1_ref[...])

        ff = jnp.maximum(
            jnp.dot(h, wff1_ref[...], preferred_element_type=f32) + bff1_ref[...], 0.0)
        ff = jnp.dot(ff, wff2_ref[...], preferred_element_type=f32) + bff2_ref[...]
        h = layernorm(h + ff, g2_ref[...], be2_ref[...])

        # ---- Linear(128->16) fused with GRU layer-0 input projection ---------
        # xi[t] = (h[t] @ wlin) @ W_ih0 + b_ih0  ==  h[t] @ (wlin @ W_ih0) + b_ih0
        xi_ref[...] = (jnp.dot(h, wlg_ref[...], preferred_element_type=f32)
                       + blg_ref[...])                              # (T, 96)

        wgru = wgru_ref[...]      # (64, 224) merged per-step weight (resident)
        bgru = bgru_ref[...]      # (1, 224)

        def layer0_cell(xi, hp, hprev):
            # gate order [r, z, n]; xi already contains b_ih0, hp contains b_hh0
            r = jax.nn.sigmoid(xi[:, 0:H] + hp[:, 0:H])
            z = jax.nn.sigmoid(xi[:, H:2 * H] + hp[:, H:2 * H])
            n = jnp.tanh(xi[:, 2 * H:3 * H] + r * hp[:, 2 * H:3 * H])
            return (1.0 - z) * n + z * hprev

        def layer1_cell(m, hprev):
            # m cols: 96..159 = r|z (x+h parts summed), 160..191 = x_n, 192..223 = h_n
            r = jax.nn.sigmoid(m[:, 96:128])
            z = jax.nn.sigmoid(m[:, 128:160])
            n = jnp.tanh(m[:, 160:192] + r * m[:, 192:224])
            return (1.0 - z) * n + z * hprev

        # Peeled layer-0 step 0: h0_prev = 0 -> hidden projection is just b_hh0.
        h0 = layer0_cell(xi_ref[pl.ds(0, 1), :], bgru[:, 0:96],
                         jnp.zeros((1, H), f32))
        h1 = jnp.zeros((1, H), f32)

        # Software-pipelined recurrence: iteration i does layer-0 step i and
        # layer-1 step i-1 with ONE merged (1,64)@(64,224) matmul (both parts
        # depend only on the carried h0_{i-1}, h1_{i-2}).
        def body(i, carry):
            h0, h1 = carry
            xh = jnp.concatenate([h0, h1], axis=1)                  # (1, 64)
            m = jnp.dot(xh, wgru, preferred_element_type=f32) + bgru  # (1, 224)
            h0n = layer0_cell(xi_ref[pl.ds(i, 1), :], m[:, 0:96], h0)
            h1n = layer1_cell(m, h1)
            gru_ref[pl.ds(i - 1, 1), :] = h1n
            return (h0n, h1n)

        h0, h1 = lax.fori_loop(1, T, body, (h0, h1), unroll=True)

        # Peeled final layer-1 step (processes layer-0 output at t = T-1).
        xh = jnp.concatenate([h0, h1], axis=1)
        m = jnp.dot(xh, wgru, preferred_element_type=f32) + bgru
        gru_ref[pl.ds(T - 1, 1), :] = layer1_cell(m, h1)

        # ---- fc1/fc2/fc3 (no bias) with LeakyReLU, then global mean ----------
        def lrelu(x):
            return jnp.where(x > 0, x, LRELU_SLOPE * x)

        g = gru_ref[...]                                             # (T, 32)
        y = lrelu(jnp.dot(g, wfc1_ref[...], preferred_element_type=f32))   # (T, 128)
        y = lrelu(jnp.dot(y, wfc2_ref[...], preferred_element_type=f32))   # (T, 64)
        y = lrelu(jnp.dot(y, wfc3_ref[...], preferred_element_type=f32))   # (T, 1)
        out_ref[...] = jnp.mean(y).reshape(1, 1)

    return kernel


PARAM_ORDER = [
    'w_cp', 'b_conv', 'wqkv', 'bqkv', 'wo', 'bo',
    'g1', 'be1', 'wff1', 'bff1', 'wff2', 'bff2', 'g2', 'be2',
    'w_lin_gru', 'b_lin_gru', 'w_gru', 'b_gru',
    'wfc1', 'wfc2', 'wfc3',
]


def make_params(key, n_in):
    """Builds module-equivalent parameters, then the inference-time fused forms."""
    d = D_MODEL
    H = H_GRU
    keys = iter(jax.random.split(key, 48))

    def u(shape, fan_in):
        b = 1.0 / np.sqrt(fan_in)
        return jax.random.uniform(next(keys), shape, jnp.float32, -b, b)

    # ---- raw parameters (stored transposed so that y = x @ W + b) -----------
    w_conv = u((K_CONV, n_in, d), n_in * K_CONV)          # (k, in, out)
    b_conv = u((1, d), n_in * K_CONV)
    wq = u((d, d), d); wk = u((d, d), d); wv = u((d, d), d); wo = u((d, d), d)
    bq = u((1, d), d); bk = u((1, d), d); bv = u((1, d), d); bo = u((1, d), d)
    g1 = jnp.ones((1, d), jnp.float32); be1 = jnp.zeros((1, d), jnp.float32)
    g2 = jnp.ones((1, d), jnp.float32); be2 = jnp.zeros((1, d), jnp.float32)
    wff1 = u((d, d), d); bff1 = u((1, d), d)
    wff2 = u((d, d), d); bff2 = u((1, d), d)
    wlin = u((d, LIN_OUT), d)
    # GRU (transposed, gate order [r, z, n]); both update-gate biases set to
    # -1e10 exactly as DsPredict.__init__ does (bias_ih/bias_hh [32:64]).
    gw0i = u((LIN_OUT, 3 * H), H)
    gw0h = u((H, 3 * H), H)
    gb0i = u((1, 3 * H), H).at[0, H:2 * H].set(-1e10)
    gb0h = u((1, 3 * H), H).at[0, H:2 * H].set(-1e10)
    gw1i = u((H, 3 * H), H)
    gw1h = u((H, 3 * H), H)
    gb1i = u((1, 3 * H), H).at[0, H:2 * H].set(-1e10)
    gb1h = u((1, 3 * H), H).at[0, H:2 * H].set(-1e10)
    wfc1 = u((H, 128), H)
    wfc2 = u((128, 64), 128)
    wfc3 = u((64, 1), 64)

    # ---- fusion 1: Conv1d(k=4,p=2) + AvgPool1d(4,4) -> (7*n_in, 128) --------
    # pooled[t] = b + sum_{o=0..6} x_pad[4t+o] @ (0.25 * sum_{k in S(o)} W_k)
    rows = []
    for o in range(7):
        acc = sum(w_conv[kk] for kk in range(K_CONV) if 0 <= o - kk <= K_CONV - 1)
        rows.append(0.25 * acc)
    w_cp = jnp.concatenate(rows, axis=0)                  # (7*n_in, 128)

    # ---- fusion 2: Q|K|V in-projection -> one (128, 384) matmul -------------
    wqkv = jnp.concatenate([wq, wk, wv], axis=1)
    bqkv = jnp.concatenate([bq, bk, bv], axis=1)

    # ---- fusion 3: Linear(128->16, no bias) into GRU layer-0 input proj -----
    w_lin_gru = jnp.dot(wlin, gw0i)                       # (128, 96)
    b_lin_gru = gb0i                                      # (1, 96)

    # ---- fusion 4: merged per-step GRU weight, input [h0 | h1] (1, 64) ------
    #   cols   0.. 95 : layer-0 hidden projection      h0 @ gw0h
    #   cols  96..159 : layer-1 r,z (x+h summed)        h0 @ gw1i[:, :64] + h1 @ gw1h[:, :64]
    #   cols 160..191 : layer-1 x_n                     h0 @ gw1i[:, 64:96]
    #   cols 192..223 : layer-1 h_n                     h1 @ gw1h[:, 64:96]
    w_gru = jnp.zeros((2 * H, 224), jnp.float32)
    w_gru = w_gru.at[0:H, 0:96].set(gw0h)
    w_gru = w_gru.at[0:H, 96:160].set(gw1i[:, 0:2 * H])
    w_gru = w_gru.at[H:2 * H, 96:160].set(gw1h[:, 0:2 * H])
    w_gru = w_gru.at[0:H, 160:192].set(gw1i[:, 2 * H:3 * H])
    w_gru = w_gru.at[H:2 * H, 192:224].set(gw1h[:, 2 * H:3 * H])
    b_gru = jnp.concatenate(
        [gb0h, gb1i[:, 0:2 * H] + gb1h[:, 0:2 * H],
         gb1i[:, 2 * H:3 * H], gb1h[:, 2 * H:3 * H]], axis=1)   # (1, 224)

    return dict(
        w_cp=w_cp, b_conv=b_conv, wqkv=wqkv, bqkv=bqkv, wo=wo, bo=bo,
        g1=g1, be1=be1, wff1=wff1, bff1=bff1, wff2=wff2, bff2=bff2,
        g2=g2, be2=be2, w_lin_gru=w_lin_gru, b_lin_gru=b_lin_gru,
        w_gru=w_gru, b_gru=b_gru, wfc1=wfc1, wfc2=wfc2, wfc3=wfc3)


@jax.jit
def ds_predict_forward(x, params):
    # x: (L, C_in) f32, same as the tensor passed to DsPredict.forward.
    # TODO(synk): AvgPool1d(ceil_mode=True) partial last window not handled;
    #             this path requires (L + 1) % 4 == 0.
    L, C = x.shape
    T = (L + 1) // 4
    x_pad = jnp.pad(x.astype(jnp.float32), ((2, 2), (0, 0)))      # Conv1d padding=2
    # im2col for the fused conv+pool matmul: row t = x_pad[4t : 4t+7] flattened
    # (column block o holds x_pad[4t + o]).
    im2col = jnp.concatenate([x_pad[o:o + 4 * T:4, :] for o in range(7)], axis=1)

    args = [im2col] + [params[n] for n in PARAM_ORDER]
    out = pl.pallas_call(
        _make_kernel(T),
        out_shape=jax.ShapeDtypeStruct((1, 1), jnp.float32),
        in_specs=[pl.BlockSpec(memory_space=pltpu.MemorySpace.VMEM)] * len(args),
        out_specs=pl.BlockSpec(memory_space=pltpu.MemorySpace.VMEM),
        scratch_shapes=[pltpu.VMEM((T, 3 * H_GRU), jnp.float32),   # GRU input proj
                        pltpu.VMEM((T, H_GRU), jnp.float32)],      # GRU outputs
    )(*args)
    return out[0, 0]


if __name__ == "__main__":
    key = jax.random.PRNGKey(0)
    kx, kp = jax.random.split(key)
    in_channels = 4
    L = 63                                  # (L + 1) = 64 conv outputs -> 16 pooled steps
    x = jax.random.normal(kx, (L, in_channels), jnp.float32)
    params = make_params(kp, in_channels)
    y = ds_predict_forward(x, params)
    y = jax.block_until_ready(y)
    assert bool(jnp.isfinite(y)), "non-finite output"
    print("KERNEL_OK")
</pallas_src>

<mosaic_0001>
module attributes {stable_mosaic.version = 11 : i64} {
  func.func @kernel(%arg0: memref<16x28xf32, #tpu.memory_space<vmem>>, %arg1: memref<28x128xf32, #tpu.memory_space<vmem>>, %arg2: memref<1x128xf32, #tpu.memory_space<vmem>>, %arg3: memref<128x384xf32, #tpu.memory_space<vmem>>, %arg4: memref<1x384xf32, #tpu.memory_space<vmem>>, %arg5: memref<128x128xf32, #tpu.memory_space<vmem>>, %arg6: memref<1x128xf32, #tpu.memory_space<vmem>>, %arg7: memref<1x128xf32, #tpu.memory_space<vmem>>, %arg8: memref<1x128xf32, #tpu.memory_space<vmem>>, %arg9: memref<128x128xf32, #tpu.memory_space<vmem>>, %arg10: memref<1x128xf32, #tpu.memory_space<vmem>>, %arg11: memref<128x128xf32, #tpu.memory_space<vmem>>, %arg12: memref<1x128xf32, #tpu.memory_space<vmem>>, %arg13: memref<1x128xf32, #tpu.memory_space<vmem>>, %arg14: memref<1x128xf32, #tpu.memory_space<vmem>>, %arg15: memref<128x96xf32, #tpu.memory_space<vmem>>, %arg16: memref<1x96xf32, #tpu.memory_space<vmem>>, %arg17: memref<64x224xf32, #tpu.memory_space<vmem>>, %arg18: memref<1x224xf32, #tpu.memory_space<vmem>>, %arg19: memref<32x128xf32, #tpu.memory_space<vmem>>, %arg20: memref<128x64xf32, #tpu.memory_space<vmem>>, %arg21: memref<64x1xf32, #tpu.memory_space<vmem>>, %arg22: memref<1x1xf32, #tpu.memory_space<vmem>>, %arg23: memref<16x96xf32, #tpu.memory_space<vmem>>, %arg24: memref<16x32xf32, #tpu.memory_space<vmem>>) attributes {dimension_semantics = [], scalar_prefetch = 0 : i64, scratch_operands = 2 : i64, tpu.core_type = #tpu.core_type<tc>} {
    %c0 = arith.constant 0 : index
    %c0_0 = arith.constant 0 : index
    %0 = vector.load %arg0[%c0, %c0_0] : memref<16x28xf32, #tpu.memory_space<vmem>>, vector<16x28xf32>
    %c0_1 = arith.constant 0 : index
    %c0_2 = arith.constant 0 : index
    %1 = vector.load %arg1[%c0_1, %c0_2] : memref<28x128xf32, #tpu.memory_space<vmem>>, vector<28x128xf32>
    %cst = arith.constant dense<0.000000e+00> : vector<16x128xf32>
    %2 = tpu.matmul %0, %1, %cst {dimension_numbers = #tpu.dot_dimension_numbers<[1], [0], [0], [1], [0, 0, 1, 1], [], []>} : vector<16x28xf32>, vector<28x128xf32>, vector<16x128xf32> -> vector<16x128xf32>
    %c0_3 = arith.constant 0 : index
    %c0_4 = arith.constant 0 : index
    %3 = vector.load %arg2[%c0_3, %c0_4] : memref<1x128xf32, #tpu.memory_space<vmem>>, vector<1x128xf32>
    %4 = vector.broadcast %3 : vector<1x128xf32> to vector<16x128xf32>
    %5 = arith.addf %2, %4 : vector<16x128xf32>
    %cst_5 = arith.constant 0.000000e+00 : f32
    %6 = vector.broadcast %cst_5 : f32 to vector<16x128xf32>
    %7 = arith.maximumf %5, %6 : vector<16x128xf32>
    %c0_6 = arith.constant 0 : index
    %c0_7 = arith.constant 0 : index
    %8 = vector.load %arg3[%c0_6, %c0_7] : memref<128x384xf32, #tpu.memory_space<vmem>>, vector<128x384xf32>
    %cst_8 = arith.constant dense<0.000000e+00> : vector<16x384xf32>
    %9 = tpu.matmul %7, %8, %cst_8 {dimension_numbers = #tpu.dot_dimension_numbers<[1], [0], [0], [1], [0, 0, 1, 1], [], []>} : vector<16x128xf32>, vector<128x384xf32>, vector<16x384xf32> -> vector<16x384xf32>
    %c0_9 = arith.constant 0 : index
    %c0_10 = arith.constant 0 : index
    %10 = vector.load %arg4[%c0_9, %c0_10] : memref<1x384xf32, #tpu.memory_space<vmem>>, vector<1x384xf32>
    %11 = vector.broadcast %10 : vector<1x384xf32> to vector<16x384xf32>
    %12 = arith.addf %9, %11 : vector<16x384xf32>
    %13 = vector.extract_strided_slice %12 {offsets = [0, 0], sizes = [16, 128], strides = [1, 1]} : vector<16x384xf32> to vector<16x128xf32>
    %14 = vector.extract_strided_slice %12 {offsets = [0, 128], sizes = [16, 128], strides = [1, 1]} : vector<16x384xf32> to vector<16x128xf32>
    %15 = vector.extract_strided_slice %12 {offsets = [0, 256], sizes = [16, 128], strides = [1, 1]} : vector<16x384xf32> to vector<16x128xf32>
    %cst_11 = arith.constant dense<0.000000e+00> : vector<16x16xf32>
    %16 = tpu.matmul %13, %14, %cst_11 {dimension_numbers = #tpu.dot_dimension_numbers<[1], [1], [0], [0], [0, 0, 1, 0], [], []>} : vector<16x128xf32>, vector<16x128xf32>, vector<16x16xf32> -> vector<16x16xf32>
    %cst_12 = arith.constant 0.0883883461 : f32
    %17 = vector.broadcast %cst_12 : f32 to vector<16x16xf32>
    %18 = arith.mulf %16, %17 : vector<16x16xf32>
    %cst_13 = arith.constant dense<0xFF800000> : vector<16xf32>
    %19 = vector.multi_reduction <maximumf>, %18, %cst_13 [1] : vector<16x16xf32> to vector<16xf32>
    %20 = vector.shape_cast %19 : vector<16xf32> to vector<16x1xf32>
    %21 = vector.broadcast %20 : vector<16x1xf32> to vector<16x16xf32>
    %22 = arith.subf %18, %21 : vector<16x16xf32>
    %23 = math.exp %22 : vector<16x16xf32>
    %cst_14 = arith.constant dense<0.000000e+00> : vector<16xf32>
    %24 = vector.multi_reduction <add>, %23, %cst_14 [1] : vector<16x16xf32> to vector<16xf32>
    %25 = vector.shape_cast %24 : vector<16xf32> to vector<16x1xf32>
    %26 = tpu.reciprocal %25 {approx = true} : vector<16x1xf32> -> vector<16x1xf32>
    %27 = vector.broadcast %26 : vector<16x1xf32> to vector<16x16xf32>
    %28 = arith.mulf %23, %27 : vector<16x16xf32>
    %cst_15 = arith.constant dense<0.000000e+00> : vector<16x128xf32>
    %29 = tpu.matmul %28, %15, %cst_15 {dimension_numbers = #tpu.dot_dimension_numbers<[1], [0], [0], [1], [0, 0, 1, 1], [], []>} : vector<16x16xf32>, vector<16x128xf32>, vector<16x128xf32> -> vector<16x128xf32>
    %c0_16 = arith.constant 0 : index
    %c0_17 = arith.constant 0 : index
    %30 = vector.load %arg5[%c0_16, %c0_17] : memref<128x128xf32, #tpu.memory_space<vmem>>, vector<128x128xf32>
    %cst_18 = arith.constant dense<0.000000e+00> : vector<16x128xf32>
    %31 = tpu.matmul %29, %30, %cst_18 {dimension_numbers = #tpu.dot_dimension_numbers<[1], [0], [0], [1], [0, 0, 1, 1], [], []>} : vector<16x128xf32>, vector<128x128xf32>, vector<16x128xf32> -> vector<16x128xf32>
    %c0_19 = arith.constant 0 : index
    %c0_20 = arith.constant 0 : index
    %32 = vector.load %arg6[%c0_19, %c0_20] : memref<1x128xf32, #tpu.memory_space<vmem>>, vector<1x128xf32>
    %33 = vector.broadcast %32 : vector<1x128xf32> to vector<16x128xf32>
    %34 = arith.addf %31, %33 : vector<16x128xf32>
    %35 = arith.addf %7, %34 : vector<16x128xf32>
    %c0_21 = arith.constant 0 : index
    %c0_22 = arith.constant 0 : index
    %36 = vector.load %arg7[%c0_21, %c0_22] : memref<1x128xf32, #tpu.memory_space<vmem>>, vector<1x128xf32>
    %c0_23 = arith.constant 0 : index
    %c0_24 = arith.constant 0 : index
    %37 = vector.load %arg8[%c0_23, %c0_24] : memref<1x128xf32, #tpu.memory_space<vmem>>, vector<1x128xf32>
    %cst_25 = arith.constant dense<0.000000e+00> : vector<16xf32>
    %38 = vector.multi_reduction <add>, %35, %cst_25 [1] : vector<16x128xf32> to vector<16xf32>
    %39 = vector.shape_cast %38 : vector<16xf32> to vector<16x1xf32>
    %cst_26 = arith.constant 1.280000e+02 : f32
    %40 = vector.broadcast %cst_26 : f32 to vector<16x1xf32>
    %41 = arith.divf %39, %40 : vector<16x1xf32>
    %42 = vector.broadcast %41 : vector<16x1xf32> to vector<16x128xf32>
    %43 = arith.subf %35, %42 : vector<16x128xf32>
    %44 = arith.mulf %43, %43 : vector<16x128xf32>
    %cst_27 = arith.constant dense<0.000000e+00> : vector<16xf32>
    %45 = vector.multi_reduction <add>, %44, %cst_27 [1] : vector<16x128xf32> to vector<16xf32>
    %46 = vector.shape_cast %45 : vector<16xf32> to vector<16x1xf32>
    %cst_28 = arith.constant 1.280000e+02 : f32
    %47 = vector.broadcast %cst_28 : f32 to vector<16x1xf32>
    %48 = arith.divf %46, %47 : vector<16x1xf32>
    %49 = vector.broadcast %41 : vector<16x1xf32> to vector<16x128xf32>
    %50 = arith.subf %35, %49 : vector<16x128xf32>
    %cst_29 = arith.constant 9.99999974E-6 : f32
    %51 = vector.broadcast %cst_29 : f32 to vector<16x1xf32>
    %52 = arith.addf %48, %51 : vector<16x1xf32>
    %53 = math.rsqrt %52 : vector<16x1xf32>
    %54 = vector.broadcast %53 : vector<16x1xf32> to vector<16x128xf32>
    %55 = arith.mulf %50, %54 : vector<16x128xf32>
    %56 = vector.broadcast %36 : vector<1x128xf32> to vector<16x128xf32>
    %57 = arith.mulf %55, %56 : vector<16x128xf32>
    %58 = vector.broadcast %37 : vector<1x128xf32> to vector<16x128xf32>
    %59 = arith.addf %57, %58 : vector<16x128xf32>
    %c0_30 = arith.constant 0 : index
    %c0_31 = arith.constant 0 : index
    %60 = vector.load %arg9[%c0_30, %c0_31] : memref<128x128xf32, #tpu.memory_space<vmem>>, vector<128x128xf32>
    %cst_32 = arith.constant dense<0.000000e+00> : vector<16x128xf32>
    %61 = tpu.matmul %59, %60, %cst_32 {dimension_numbers = #tpu.dot_dimension_numbers<[1], [0], [0], [1], [0, 0, 1, 1], [], []>} : vector<16x128xf32>, vector<128x128xf32>, vector<16x128xf32> -> vector<16x128xf32>
    %c0_33 = arith.constant 0 : index
    %c0_34 = arith.constant 0 : index
    %62 = vector.load %arg10[%c0_33, %c0_34] : memref<1x128xf32, #tpu.memory_space<vmem>>, vector<1x128xf32>
    %63 = vector.broadcast %62 : vector<1x128xf32> to vector<16x128xf32>
    %64 = arith.addf %61, %63 : vector<16x128xf32>
    %cst_35 = arith.constant 0.000000e+00 : f32
    %65 = vector.broadcast %cst_35 : f32 to vector<16x128xf32>
    %66 = arith.maximumf %64, %65 : vector<16x128xf32>
    %c0_36 = arith.constant 0 : index
    %c0_37 = arith.constant 0 : index
    %67 = vector.load %arg11[%c0_36, %c0_37] : memref<128x128xf32, #tpu.memory_space<vmem>>, vector<128x128xf32>
    %cst_38 = arith.constant dense<0.000000e+00> : vector<16x128xf32>
    %68 = tpu.matmul %66, %67, %cst_38 {dimension_numbers = #tpu.dot_dimension_numbers<[1], [0], [0], [1], [0, 0, 1, 1], [], []>} : vector<16x128xf32>, vector<128x128xf32>, vector<16x128xf32> -> vector<16x128xf32>
    %c0_39 = arith.constant 0 : index
    %c0_40 = arith.constant 0 : index
    %69 = vector.load %arg12[%c0_39, %c0_40] : memref<1x128xf32, #tpu.memory_space<vmem>>, vector<1x128xf32>
    %70 = vector.broadcast %69 : vector<1x128xf32> to vector<16x128xf32>
    %71 = arith.addf %68, %70 : vector<16x128xf32>
    %72 = arith.addf %59, %71 : vector<16x128xf32>
    %c0_41 = arith.constant 0 : index
    %c0_42 = arith.constant 0 : index
    %73 = vector.load %arg13[%c0_41, %c0_42] : memref<1x128xf32, #tpu.memory_space<vmem>>, vector<1x128xf32>
    %c0_43 = arith.constant 0 : index
    %c0_44 = arith.constant 0 : index
    %74 = vector.load %arg14[%c0_43, %c0_44] : memref<1x128xf32, #tpu.memory_space<vmem>>, vector<1x128xf32>
    %cst_45 = arith.constant dense<0.000000e+00> : vector<16xf32>
    %75 = vector.multi_reduction <add>, %72, %cst_45 [1] : vector<16x128xf32> to vector<16xf32>
    %76 = vector.shape_cast %75 : vector<16xf32> to vector<16x1xf32>
    %cst_46 = arith.constant 1.280000e+02 : f32
    %77 = vector.broadcast %cst_46 : f32 to vector<16x1xf32>
    %78 = arith.divf %76, %77 : vector<16x1xf32>
    %79 = vector.broadcast %78 : vector<16x1xf32> to vector<16x128xf32>
    %80 = arith.subf %72, %79 : vector<16x128xf32>
    %81 = arith.mulf %80, %80 : vector<16x128xf32>
    %cst_47 = arith.constant dense<0.000000e+00> : vector<16xf32>
    %82 = vector.multi_reduction <add>, %81, %cst_47 [1] : vector<16x128xf32> to vector<16xf32>
    %83 = vector.shape_cast %82 : vector<16xf32> to vector<16x1xf32>
    %cst_48 = arith.constant 1.280000e+02 : f32
    %84 = vector.broadcast %cst_48 : f32 to vector<16x1xf32>
    %85 = arith.divf %83, %84 : vector<16x1xf32>
    %86 = vector.broadcast %78 : vector<16x1xf32> to vector<16x128xf32>
    %87 = arith.subf %72, %86 : vector<16x128xf32>
    %cst_49 = arith.constant 9.99999974E-6 : f32
    %88 = vector.broadcast %cst_49 : f32 to vector<16x1xf32>
    %89 = arith.addf %85, %88 : vector<16x1xf32>
    %90 = math.rsqrt %89 : vector<16x1xf32>
    %91 = vector.broadcast %90 : vector<16x1xf32> to vector<16x128xf32>
    %92 = arith.mulf %87, %91 : vector<16x128xf32>
    %93 = vector.broadcast %73 : vector<1x128xf32> to vector<16x128xf32>
    %94 = arith.mulf %92, %93 : vector<16x128xf32>
    %95 = vector.broadcast %74 : vector<1x128xf32> to vector<16x128xf32>
    %96 = arith.addf %94, %95 : vector<16x128xf32>
    %c0_50 = arith.constant 0 : index
    %c0_51 = arith.constant 0 : index
    %97 = vector.load %arg15[%c0_50, %c0_51] : memref<128x96xf32, #tpu.memory_space<vmem>>, vector<128x96xf32>
    %cst_52 = arith.constant dense<0.000000e+00> : vector<16x96xf32>
    %98 = tpu.matmul %96, %97, %cst_52 {dimension_numbers = #tpu.dot_dimension_numbers<[1], [0], [0], [1], [0, 0, 1, 1], [], []>} : vector<16x128xf32>, vector<128x96xf32>, vector<16x96xf32> -> vector<16x96xf32>
    %c0_53 = arith.constant 0 : index
    %c0_54 = arith.constant 0 : index
    %99 = vector.load %arg16[%c0_53, %c0_54] : memref<1x96xf32, #tpu.memory_space<vmem>>, vector<1x96xf32>
    %100 = vector.broadcast %99 : vector<1x96xf32> to vector<16x96xf32>
    %101 = arith.addf %98, %100 : vector<16x96xf32>
    %c0_55 = arith.constant 0 : index
    %c0_56 = arith.constant 0 : index
    %102 = vector.load %arg23[%c0_55, %c0_56] : memref<16x96xf32, #tpu.memory_space<vmem>>, vector<16x96xf32>
    tpu.vector_store %arg23[%c0_55, %c0_56], %101 {strides = array<i32>} : memref<16x96xf32, #tpu.memory_space<vmem>>, vector<16x96xf32>,
    %c0_57 = arith.constant 0 : index
    %c0_58 = arith.constant 0 : index
    %103 = vector.load %arg17[%c0_57, %c0_58] : memref<64x224xf32, #tpu.memory_space<vmem>>, vector<64x224xf32>
    %c0_59 = arith.constant 0 : index
    %c0_60 = arith.constant 0 : index
    %104 = vector.load %arg18[%c0_59, %c0_60] : memref<1x224xf32, #tpu.memory_space<vmem>>, vector<1x224xf32>
    %c0_61 = arith.constant 0 : index
    %c0_62 = arith.constant 0 : index
    %105 = vector.load %arg23[%c0_61, %c0_62] : memref<16x96xf32, #tpu.memory_space<vmem>>, vector<1x96xf32>
    %106 = vector.extract_strided_slice %104 {offsets = [0, 0], sizes = [1, 96], strides = [1, 1]} : vector<1x224xf32> to vector<1x96xf32>
    %cst_63 = arith.constant 0.000000e+00 : f32
    %107 = vector.broadcast %cst_63 : f32 to vector<1x32xf32>
    %108 = vector.extract_strided_slice %105 {offsets = [0, 0], sizes = [1, 32], strides = [1, 1]} : vector<1x96xf32> to vector<1x32xf32>
    %109 = vector.extract_strided_slice %106 {offsets = [0, 0], sizes = [1, 32], strides = [1, 1]} : vector<1x96xf32> to vector<1x32xf32>
    %110 = arith.addf %108, %109 : vector<1x32xf32>
    %111 = arith.negf %110 : vector<1x32xf32>
    %112 = math.exp %111 : vector<1x32xf32>
    %cst_64 = arith.constant 1.000000e+00 : f32
    %113 = vector.broadcast %cst_64 : f32 to vector<1x32xf32>
    %114 = arith.addf %113, %112 : vector<1x32xf32>
    %115 = arith.divf %113, %114 : vector<1x32xf32>
    %116 = vector.extract_strided_slice %105 {offsets = [0, 32], sizes = [1, 32], strides = [1, 1]} : vector<1x96xf32> to vector<1x32xf32>
    %117 = vector.extract_strided_slice %106 {offsets = [0, 32], sizes = [1, 32], strides = [1, 1]} : vector<1x96xf32> to vector<1x32xf32>
    %118 = arith.addf %116, %117 : vector<1x32xf32>
    %119 = arith.negf %118 : vector<1x32xf32>
    %120 = math.exp %119 : vector<1x32xf32>
    %cst_65 = arith.constant 1.000000e+00 : f32
    %121 = vector.broadcast %cst_65 : f32 to vector<1x32xf32>
    %122 = arith.addf %121, %120 : vector<1x32xf32>
    %123 = arith.divf %121, %122 : vector<1x32xf32>
    %124 = vector.extract_strided_slice %105 {offsets = [0, 64], sizes = [1, 32], strides = [1, 1]} : vector<1x96xf32> to vector<1x32xf32>
    %125 = vector.extract_strided_slice %106 {offsets = [0, 64], sizes = [1, 32], strides = [1, 1]} : vector<1x96xf32> to vector<1x32xf32>
    %126 = arith.mulf %115, %125 : vector<1x32xf32>
    %127 = arith.addf %124, %126 : vector<1x32xf32>
    %128 = math.tanh %127 : vector<1x32xf32>
    %cst_66 = arith.constant 1.000000e+00 : f32
    %129 = vector.broadcast %cst_66 : f32 to vector<1x32xf32>
    %130 = arith.subf %129, %123 : vector<1x32xf32>
    %131 = arith.mulf %130, %128 : vector<1x32xf32>
    %132 = arith.mulf %123, %107 : vector<1x32xf32>
    %133 = arith.addf %131, %132 : vector<1x32xf32>
    %cst_67 = arith.constant 0.000000e+00 : f32
    %134 = vector.broadcast %cst_67 : f32 to vector<1x32xf32>
    %c1_i32 = arith.constant 1 : i32
    %135 = tpu.concatenate %133, %134 in 1 : vector<1x32xf32>, vector<1x32xf32> -> vector<1x64xf32>
    %cst_68 = arith.constant dense<0.000000e+00> : vector<1x224xf32>
    %136 = tpu.matmul %135, %103, %cst_68 {dimension_numbers = #tpu.dot_dimension_numbers<[1], [0], [0], [1], [0, 0, 1, 1], [], []>} : vector<1x64xf32>, vector<64x224xf32>, vector<1x224xf32> -> vector<1x224xf32>
    %137 = arith.addf %136, %104 : vector<1x224xf32>
    %138 = arith.index_cast %c1_i32 : i32 to index
    %c0_69 = arith.constant 0 : index
    %139 = vector.load %arg23[%138, %c0_69] : memref<16x96xf32, #tpu.memory_space<vmem>>, vector<1x96xf32>
    %140 = vector.extract_strided_slice %137 {offsets = [0, 0], sizes = [1, 96], strides = [1, 1]} : vector<1x224xf32> to vector<1x96xf32>
    %141 = vector.extract_strided_slice %139 {offsets = [0, 0], sizes = [1, 32], strides = [1, 1]} : vector<1x96xf32> to vector<1x32xf32>
    %142 = vector.extract_strided_slice %140 {offsets = [0, 0], sizes = [1, 32], strides = [1, 1]} : vector<1x96xf32> to vector<1x32xf32>
    %143 = arith.addf %141, %142 : vector<1x32xf32>
    %144 = arith.negf %143 : vector<1x32xf32>
    %145 = math.exp %144 : vector<1x32xf32>
    %cst_70 = arith.constant 1.000000e+00 : f32
    %146 = vector.broadcast %cst_70 : f32 to vector<1x32xf32>
    %147 = arith.addf %146, %145 : vector<1x32xf32>
    %148 = arith.divf %146, %147 : vector<1x32xf32>
    %149 = vector.extract_strided_slice %139 {offsets = [0, 32], sizes = [1, 32], strides = [1, 1]} : vector<1x96xf32> to vector<1x32xf32>
    %150 = vector.extract_strided_slice %140 {offsets = [0, 32], sizes = [1, 32], strides = [1, 1]} : vector<1x96xf32> to vector<1x32xf32>
    %151 = arith.addf %149, %150 : vector<1x32xf32>
    %152 = arith.negf %151 : vector<1x32xf32>
    %153 = math.exp %152 : vector<1x32xf32>
    %cst_71 = arith.constant 1.000000e+00 : f32
    %154 = vector.broadcast %cst_71 : f32 to vector<1x32xf32>
    %155 = arith.addf %154, %153 : vector<1x32xf32>
    %156 = arith.divf %154, %155 : vector<1x32xf32>
    %157 = vector.extract_strided_slice %139 {offsets = [0, 64], sizes = [1, 32], strides = [1, 1]} : vector<1x96xf32> to vector<1x32xf32>
    %158 = vector.extract_strided_slice %140 {offsets = [0, 64], sizes = [1, 32], strides = [1, 1]} : vector<1x96xf32> to vector<1x32xf32>
    %159 = arith.mulf %148, %158 : vector<1x32xf32>
    %160 = arith.addf %157, %159 : vector<1x32xf32>
    %161 = math.tanh %160 : vector<1x32xf32>
    %cst_72 = arith.constant 1.000000e+00 : f32
    %162 = vector.broadcast %cst_72 : f32 to vector<1x32xf32>
    %163 = arith.subf %162, %156 : vector<1x32xf32>
    %164 = arith.mulf %163, %161 : vector<1x32xf32>
    %165 = arith.mulf %156, %133 : vector<1x32xf32>
    %166 = arith.addf %164, %165 : vector<1x32xf32>
    %167 = vector.extract_strided_slice %137 {offsets = [0, 96], sizes = [1, 32], strides = [1, 1]} : vector<1x224xf32> to vector<1x32xf32>
    %168 = arith.negf %167 : vector<1x32xf32>
    %169 = math.exp %168 : vector<1x32xf32>
    %cst_73 = arith.constant 1.000000e+00 : f32
    %170 = vector.broadcast %cst_73 : f32 to vector<1x32xf32>
    %171 = arith.addf %170, %169 : vector<1x32xf32>
    %172 = arith.divf %170, %171 : vector<1x32xf32>
    %173 = vector.extract_strided_slice %137 {offsets = [0, 128], sizes = [1, 32], strides = [1, 1]} : vector<1x224xf32> to vector<1x32xf32>
    %174 = arith.negf %173 : vector<1x32xf32>
    %175 = math.exp %174 : vector<1x32xf32>
    %cst_74 = arith.constant 1.000000e+00 : f32
    %176 = vector.broadcast %cst_74 : f32 to vector<1x32xf32>
    %177 = arith.addf %176, %175 : vector<1x32xf32>
    %178 = arith.divf %176, %177 : vector<1x32xf32>
    %179 = vector.extract_strided_slice %137 {offsets = [0, 160], sizes = [1, 32], strides = [1, 1]} : vector<1x224xf32> to vector<1x32xf32>
    %180 = vector.extract_strided_slice %137 {offsets = [0, 192], sizes = [1, 32], strides = [1, 1]} : vector<1x224xf32> to vector<1x32xf32>
    %181 = arith.mulf %172, %180 : vector<1x32xf32>
    %182 = arith.addf %179, %181 : vector<1x32xf32>
    %183 = math.tanh %182 : vector<1x32xf32>
    %cst_75 = arith.constant 1.000000e+00 : f32
    %184 = vector.broadcast %cst_75 : f32 to vector<1x32xf32>
    %185 = arith.subf %184, %178 : vector<1x32xf32>
    %186 = arith.mulf %185, %183 : vector<1x32xf32>
    %187 = arith.mulf %178, %134 : vector<1x32xf32>
    %188 = arith.addf %186, %187 : vector<1x32xf32>
    %c1_i32_76 = arith.constant 1 : i32
    %189 = arith.subi %c1_i32, %c1_i32_76 : i32
    %190 = arith.index_cast %189 : i32 to index
    %c0_77 = arith.constant 0 : index
    %191 = vector.load %arg24[%190, %c0_77] : memref<16x32xf32, #tpu.memory_space<vmem>>, vector<1x32xf32>
    tpu.vector_store %arg24[%190, %c0_77], %188 {strides = array<i32>} : memref<16x32xf32, #tpu.memory_space<vmem>>, vector<1x32xf32>,
    %c2_i32 = arith.constant 2 : i32
    %192 = tpu.concatenate %166, %188 in 1 : vector<1x32xf32>, vector<1x32xf32> -> vector<1x64xf32>
    %cst_78 = arith.constant dense<0.000000e+00> : vector<1x224xf32>
    %193 = tpu.matmul %192, %103, %cst_78 {dimension_numbers = #tpu.dot_dimension_numbers<[1], [0], [0], [1], [0, 0, 1, 1], [], []>} : vector<1x64xf32>, vector<64x224xf32>, vector<1x224xf32> -> vector<1x224xf32>
    %194 = arith.addf %193, %104 : vector<1x224xf32>
    %195 = arith.index_cast %c2_i32 : i32 to index
    %c0_79 = arith.constant 0 : index
    %196 = vector.load %arg23[%195, %c0_79] : memref<16x96xf32, #tpu.memory_space<vmem>>, vector<1x96xf32>
    %197 = vector.extract_strided_slice %194 {offsets = [0, 0], sizes = [1, 96], strides = [1, 1]} : vector<1x224xf32> to vector<1x96xf32>
    %198 = vector.extract_strided_slice %196 {offsets = [0, 0], sizes = [1, 32], strides = [1, 1]} : vector<1x96xf32> to vector<1x32xf32>
    %199 = vector.extract_strided_slice %197 {offsets = [0, 0], sizes = [1, 32], strides = [1, 1]} : vector<1x96xf32> to vector<1x32xf32>
    %200 = arith.addf %198, %199 : vector<1x32xf32>
    %201 = arith.negf %200 : vector<1x32xf32>
    %202 = math.exp %201 : vector<1x32xf32>
    %cst_80 = arith.constant 1.000000e+00 : f32
    %203 = vector.broadcast %cst_80 : f32 to vector<1x32xf32>
    %204 = arith.addf %203, %202 : vector<1x32xf32>
    %205 = arith.divf %203, %204 : vector<1x32xf32>
    %206 = vector.extract_strided_slice %196 {offsets = [0, 32], sizes = [1, 32], strides = [1, 1]} : vector<1x96xf32> to vector<1x32xf32>
    %207 = vector.extract_strided_slice %197 {offsets = [0, 32], sizes = [1, 32], strides = [1, 1]} : vector<1x96xf32> to vector<1x32xf32>
    %208 = arith.addf %206, %207 : vector<1x32xf32>
    %209 = arith.negf %208 : vector<1x32xf32>
    %210 = math.exp %209 : vector<1x32xf32>
    %cst_81 = arith.constant 1.000000e+00 : f32
    %211 = vector.broadcast %cst_81 : f32 to vector<1x32xf32>
    %212 = arith.addf %211, %210 : vector<1x32xf32>
    %213 = arith.divf %211, %212 : vector<1x32xf32>
    %214 = vector.extract_strided_slice %196 {offsets = [0, 64], sizes = [1, 32], strides = [1, 1]} : vector<1x96xf32> to vector<1x32xf32>
    %215 = vector.extract_strided_slice %197 {offsets = [0, 64], sizes = [1, 32], strides = [1, 1]} : vector<1x96xf32> to vector<1x32xf32>
    %216 = arith.mulf %205, %215 : vector<1x32xf32>
    %217 = arith.addf %214, %216 : vector<1x32xf32>
    %218 = math.tanh %217 : vector<1x32xf32>
    %cst_82 = arith.constant 1.000000e+00 : f32
    %219 = vector.broadcast %cst_82 : f32 to vector<1x32xf32>
    %220 = arith.subf %219, %213 : vector<1x32xf32>
    %221 = arith.mulf %220, %218 : vector<1x32xf32>
    %222 = arith.mulf %213, %166 : vector<1x32xf32>
    %223 = arith.addf %221, %222 : vector<1x32xf32>
    %224 = vector.extract_strided_slice %194 {offsets = [0, 96], sizes = [1, 32], strides = [1, 1]} : vector<1x224xf32> to vector<1x32xf32>
    %225 = arith.negf %224 : vector<1x32xf32>
    %226 = math.exp %225 : vector<1x32xf32>
    %cst_83 = arith.constant 1.000000e+00 : f32
    %227 = vector.broadcast %cst_83 : f32 to vector<1x32xf32>
    %228 = arith.addf %227, %226 : vector<1x32xf32>
    %229 = arith.divf %227, %228 : vector<1x32xf32>
    %230 = vector.extract_strided_slice %194 {offsets = [0, 128], sizes = [1, 32], strides = [1, 1]} : vector<1x224xf32> to vector<1x32xf32>
    %231 = arith.negf %230 : vector<1x32xf32>
    %232 = math.exp %231 : vector<1x32xf32>
    %cst_84 = arith.constant 1.000000e+00 : f32
    %233 = vector.broadcast %cst_84 : f32 to vector<1x32xf32>
    %234 = arith.addf %233, %232 : vector<1x32xf32>
    %235 = arith.divf %233, %234 : vector<1x32xf32>
    %236 = vector.extract_strided_slice %194 {offsets = [0, 160], sizes = [1, 32], strides = [1, 1]} : vector<1x224xf32> to vector<1x32xf32>
    %237 = vector.extract_strided_slice %194 {offsets = [0, 192], sizes = [1, 32], strides = [1, 1]} : vector<1x224xf32> to vector<1x32xf32>
    %238 = arith.mulf %229, %237 : vector<1x32xf32>
    %239 = arith.addf %236, %238 : vector<1x32xf32>
    %240 = math.tanh %239 : vector<1x32xf32>
    %cst_85 = arith.constant 1.000000e+00 : f32
    %241 = vector.broadcast %cst_85 : f32 to vector<1x32xf32>
    %242 = arith.subf %241, %235 : vector<1x32xf32>
    %243 = arith.mulf %242, %240 : vector<1x32xf32>
    %244 = arith.mulf %235, %188 : vector<1x32xf32>
    %245 = arith.addf %243, %244 : vector<1x32xf32>
    %c1_i32_86 = arith.constant 1 : i32
    %246 = arith.subi %c2_i32, %c1_i32_86 : i32
    %247 = arith.index_cast %246 : i32 to index
    %c0_87 = arith.constant 0 : index
    %248 = vector.load %arg24[%247, %c0_87] : memref<16x32xf32, #tpu.memory_space<vmem>>, vector<1x32xf32>
    tpu.vector_store %arg24[%247, %c0_87], %245 {strides = array<i32>} : memref<16x32xf32, #tpu.memory_space<vmem>>, vector<1x32xf32>,
    %c3_i32 = arith.constant 3 : i32
    %249 = tpu.concatenate %223, %245 in 1 : vector<1x32xf32>, vector<1x32xf32> -> vector<1x64xf32>
    %cst_88 = arith.constant dense<0.000000e+00> : vector<1x224xf32>
    %250 = tpu.matmul %249, %103, %cst_88 {dimension_numbers = #tpu.dot_dimension_numbers<[1], [0], [0], [1], [0, 0, 1, 1], [], []>} : vector<1x64xf32>, vector<64x224xf32>, vector<1x224xf32> -> vector<1x224xf32>
    %251 = arith.addf %250, %104 : vector<1x224xf32>
    %252 = arith.index_cast %c3_i32 : i32 to index
    %c0_89 = arith.constant 0 : index
    %253 = vector.load %arg23[%252, %c0_89] : memref<16x96xf32, #tpu.memory_space<vmem>>, vector<1x96xf32>
    %254 = vector.extract_strided_slice %251 {offsets = [0, 0], sizes = [1, 96], strides = [1, 1]} : vector<1x224xf32> to vector<1x96xf32>
    %255 = vector.extract_strided_slice %253 {offsets = [0, 0], sizes = [1, 32], strides = [1, 1]} : vector<1x96xf32> to vector<1x32xf32>
    %256 = vector.extract_strided_slice %254 {offsets = [0, 0], sizes = [1, 32], strides = [1, 1]} : vector<1x96xf32> to vector<1x32xf32>
    %257 = arith.addf %255, %256 : vector<1x32xf32>
    %258 = arith.negf %257 : vector<1x32xf32>
    %259 = math.exp %258 : vector<1x32xf32>
    %cst_90 = arith.constant 1.000000e+00 : f32
    %260 = vector.broadcast %cst_90 : f32 to vector<1x32xf32>
    %261 = arith.addf %260, %259 : vector<1x32xf32>
    %262 = arith.divf %260, %261 : vector<1x32xf32>
    %263 = vector.extract_strided_slice %253 {offsets = [0, 32], sizes = [1, 32], strides = [1, 1]} : vector<1x96xf32> to vector<1x32xf32>
    %264 = vector.extract_strided_slice %254 {offsets = [0, 32], sizes = [1, 32], strides = [1, 1]} : vector<1x96xf32> to vector<1x32xf32>
    %265 = arith.addf %263, %264 : vector<1x32xf32>
    %266 = arith.negf %265 : vector<1x32xf32>
    %267 = math.exp %266 : vector<1x32xf32>
    %cst_91 = arith.constant 1.000000e+00 : f32
    %268 = vector.broadcast %cst_91 : f32 to vector<1x32xf32>
    %269 = arith.addf %268, %267 : vector<1x32xf32>
    %270 = arith.divf %268, %269 : vector<1x32xf32>
    %271 = vector.extract_strided_slice %253 {offsets = [0, 64], sizes = [1, 32], strides = [1, 1]} : vector<1x96xf32> to vector<1x32xf32>
    %272 = vector.extract_strided_slice %254 {offsets = [0, 64], sizes = [1, 32], strides = [1, 1]} : vector<1x96xf32> to vector<1x32xf32>
    %273 = arith.mulf %262, %272 : vector<1x32xf32>
    %274 = arith.addf %271, %273 : vector<1x32xf32>
    %275 = math.tanh %274 : vector<1x32xf32>
    %cst_92 = arith.constant 1.000000e+00 : f32
    %276 = vector.broadcast %cst_92 : f32 to vector<1x32xf32>
    %277 = arith.subf %276, %270 : vector<1x32xf32>
    %278 = arith.mulf %277, %275 : vector<1x32xf32>
    %279 = arith.mulf %270, %223 : vector<1x32xf32>
    %280 = arith.addf %278, %279 : vector<1x32xf32>
    %281 = vector.extract_strided_slice %251 {offsets = [0, 96], sizes = [1, 32], strides = [1, 1]} : vector<1x224xf32> to vector<1x32xf32>
    %282 = arith.negf %281 : vector<1x32xf32>
    %283 = math.exp %282 : vector<1x32xf32>
    %cst_93 = arith.constant 1.000000e+00 : f32
    %284 = vector.broadcast %cst_93 : f32 to vector<1x32xf32>
    %285 = arith.addf %284, %283 : vector<1x32xf32>
    %286 = arith.divf %284, %285 : vector<1x32xf32>
    %287 = vector.extract_strided_slice %251 {offsets = [0, 128], sizes = [1, 32], strides = [1, 1]} : vector<1x224xf32> to vector<1x32xf32>
    %288 = arith.negf %287 : vector<1x32xf32>
    %289 = math.exp %288 : vector<1x32xf32>
    %cst_94 = arith.constant 1.000000e+00 : f32
    %290 = vector.broadcast %cst_94 : f32 to vector<1x32xf32>
    %291 = arith.addf %290, %289 : vector<1x32xf32>
    %292 = arith.divf %290, %291 : vector<1x32xf32>
    %293 = vector.extract_strided_slice %251 {offsets = [0, 160], sizes = [1, 32], strides = [1, 1]} : vector<1x224xf32> to vector<1x32xf32>
    %294 = vector.extract_strided_slice %251 {offsets = [0, 192], sizes = [1, 32], strides = [1, 1]} : vector<1x224xf32> to vector<1x32xf32>
    %295 = arith.mulf %286, %294 : vector<1x32xf32>
    %296 = arith.addf %293, %295 : vector<1x32xf32>
    %297 = math.tanh %296 : vector<1x32xf32>
    %cst_95 = arith.constant 1.000000e+00 : f32
    %298 = vector.broadcast %cst_95 : f32 to vector<1x32xf32>
    %299 = arith.subf %298, %292 : vector<1x32xf32>
    %300 = arith.mulf %299, %297 : vector<1x32xf32>
    %301 = arith.mulf %292, %245 : vector<1x32xf32>
    %302 = arith.addf %300, %301 : vector<1x32xf32>
    %c1_i32_96 = arith.constant 1 : i32
    %303 = arith.subi %c3_i32, %c1_i32_96 : i32
    %304 = arith.index_cast %303 : i32 to index
    %c0_97 = arith.constant 0 : index
    %305 = vector.load %arg24[%304, %c0_97] : memref<16x32xf32, #tpu.memory_space<vmem>>, vector<1x32xf32>
    tpu.vector_store %arg24[%304, %c0_97], %302 {strides = array<i32>} : memref<16x32xf32, #tpu.memory_space<vmem>>, vector<1x32xf32>,
    %c4_i32 = arith.constant 4 : i32
    %306 = tpu.concatenate %280, %302 in 1 : vector<1x32xf32>, vector<1x32xf32> -> vector<1x64xf32>
    %cst_98 = arith.constant dense<0.000000e+00> : vector<1x224xf32>
    %307 = tpu.matmul %306, %103, %cst_98 {dimension_numbers = #tpu.dot_dimension_numbers<[1], [0], [0], [1], [0, 0, 1, 1], [], []>} : vector<1x64xf32>, vector<64x224xf32>, vector<1x224xf32> -> vector<1x224xf32>
    %308 = arith.addf %307, %104 : vector<1x224xf32>
    %309 = arith.index_cast %c4_i32 : i32 to index
    %c0_99 = arith.constant 0 : index
    %310 = vector.load %arg23[%309, %c0_99] : memref<16x96xf32, #tpu.memory_space<vmem>>, vector<1x96xf32>
    %311 = vector.extract_strided_slice %308 {offsets = [0, 0], sizes = [1, 96], strides = [1, 1]} : vector<1x224xf32> to vector<1x96xf32>
    %312 = vector.extract_strided_slice %310 {offsets = [0, 0], sizes = [1, 32], strides = [1, 1]} : vector<1x96xf32> to vector<1x32xf32>
    %313 = vector.extract_strided_slice %311 {offsets = [0, 0], sizes = [1, 32], strides = [1, 1]} : vector<1x96xf32> to vector<1x32xf32>
    %314 = arith.addf %312, %313 : vector<1x32xf32>
    %315 = arith.negf %314 : vector<1x32xf32>
    %316 = math.exp %315 : vector<1x32xf32>
    %cst_100 = arith.constant 1.000000e+00 : f32
    %317 = vector.broadcast %cst_100 : f32 to vector<1x32xf32>
    %318 = arith.addf %317, %316 : vector<1x32xf32>
    %319 = arith.divf %317, %318 : vector<1x32xf32>
    %320 = vector.extract_strided_slice %310 {offsets = [0, 32], sizes = [1, 32], strides = [1, 1]} : vector<1x96xf32> to vector<1x32xf32>
    %321 = vector.extract_strided_slice %311 {offsets = [0, 32], sizes = [1, 32], strides = [1, 1]} : vector<1x96xf32> to vector<1x32xf32>
    %322 = arith.addf %320, %321 : vector<1x32xf32>
    %323 = arith.negf %322 : vector<1x32xf32>
    %324 = math.exp %323 : vector<1x32xf32>
    %cst_101 = arith.constant 1.000000e+00 : f32
    %325 = vector.broadcast %cst_101 : f32 to vector<1x32xf32>
    %326 = arith.addf %325, %324 : vector<1x32xf32>
    %327 = arith.divf %325, %326 : vector<1x32xf32>
    %328 = vector.extract_strided_slice %310 {offsets = [0, 64], sizes = [1, 32], strides = [1, 1]} : vector<1x96xf32> to vector<1x32xf32>
    %329 = vector.extract_strided_slice %311 {offsets = [0, 64], sizes = [1, 32], strides = [1, 1]} : vector<1x96xf32> to vector<1x32xf32>
    %330 = arith.mulf %319, %329 : vector<1x32xf32>
    %331 = arith.addf %328, %330 : vector<1x32xf32>
    %332 = math.tanh %331 : vector<1x32xf32>
    %cst_102 = arith.constant 1.000000e+00 : f32
    %333 = vector.broadcast %cst_102 : f32 to vector<1x32xf32>
    %334 = arith.subf %333, %327 : vector<1x32xf32>
    %335 = arith.mulf %334, %332 : vector<1x32xf32>
    %336 = arith.mulf %327, %280 : vector<1x32xf32>
    %337 = arith.addf %335, %336 : vector<1x32xf32>
    %338 = vector.extract_strided_slice %308 {offsets = [0, 96], sizes = [1, 32], strides = [1, 1]} : vector<1x224xf32> to vector<1x32xf32>
    %339 = arith.negf %338 : vector<1x32xf32>
    %340 = math.exp %339 : vector<1x32xf32>
    %cst_103 = arith.constant 1.000000e+00 : f32
    %341 = vector.broadcast %cst_103 : f32 to vector<1x32xf32>
    %342 = arith.addf %341, %340 : vector<1x32xf32>
    %343 = arith.divf %341, %342 : vector<1x32xf32>
    %344 = vector.extract_strided_slice %308 {offsets = [0, 128], sizes = [1, 32], strides = [1, 1]} : vector<1x224xf32> to vector<1x32xf32>
    %345 = arith.negf %344 : vector<1x32xf32>
    %346 = math.exp %345 : vector<1x32xf32>
    %cst_104 = arith.constant 1.000000e+00 : f32
    %347 = vector.broadcast %cst_104 : f32 to vector<1x32xf32>
    %348 = arith.addf %347, %346 : vector<1x32xf32>
    %349 = arith.divf %347, %348 : vector<1x32xf32>
    %350 = vector.extract_strided_slice %308 {offsets = [0, 160], sizes = [1, 32], strides = [1, 1]} : vector<1x224xf32> to vector<1x32xf32>
    %351 = vector.extract_strided_slice %308 {offsets = [0, 192], sizes = [1, 32], strides = [1, 1]} : vector<1x224xf32> to vector<1x32xf32>
    %352 = arith.mulf %343, %351 : vector<1x32xf32>
    %353 = arith.addf %350, %352 : vector<1x32xf32>
    %354 = math.tanh %353 : vector<1x32xf32>
    %cst_105 = arith.constant 1.000000e+00 : f32
    %355 = vector.broadcast %cst_105 : f32 to vector<1x32xf32>
    %356 = arith.subf %355, %349 : vector<1x32xf32>
    %357 = arith.mulf %356, %354 : vector<1x32xf32>
    %358 = arith.mulf %349, %302 : vector<1x32xf32>
    %359 = arith.addf %357, %358 : vector<1x32xf32>
    %c1_i32_106 = arith.constant 1 : i32
    %360 = arith.subi %c4_i32, %c1_i32_106 : i32
    %361 = arith.index_cast %360 : i32 to index
    %c0_107 = arith.constant 0 : index
    %362 = vector.load %arg24[%361, %c0_107] : memref<16x32xf32, #tpu.memory_space<vmem>>, vector<1x32xf32>
    tpu.vector_store %arg24[%361, %c0_107], %359 {strides = array<i32>} : memref<16x32xf32, #tpu.memory_space<vmem>>, vector<1x32xf32>,
    %c5_i32 = arith.constant 5 : i32
    %363 = tpu.concatenate %337, %359 in 1 : vector<1x32xf32>, vector<1x32xf32> -> vector<1x64xf32>
    %cst_108 = arith.constant dense<0.000000e+00> : vector<1x224xf32>
    %364 = tpu.matmul %363, %103, %cst_108 {dimension_numbers = #tpu.dot_dimension_numbers<[1], [0], [0], [1], [0, 0, 1, 1], [], []>} : vector<1x64xf32>, vector<64x224xf32>, vector<1x224xf32> -> vector<1x224xf32>
    %365 = arith.addf %364, %104 : vector<1x224xf32>
    %366 = arith.index_cast %c5_i32 : i32 to index
    %c0_109 = arith.constant 0 : index
    %367 = vector.load %arg23[%366, %c0_109] : memref<16x96xf32, #tpu.memory_space<vmem>>, vector<1x96xf32>
    %368 = vector.extract_strided_slice %365 {offsets = [0, 0], sizes = [1, 96], strides = [1, 1]} : vector<1x224xf32> to vector<1x96xf32>
    %369 = vector.extract_strided_slice %367 {offsets = [0, 0], sizes = [1, 32], strides = [1, 1]} : vector<1x96xf32> to vector<1x32xf32>
    %370 = vector.extract_strided_slice %368 {offsets = [0, 0], sizes = [1, 32], strides = [1, 1]} : vector<1x96xf32> to vector<1x32xf32>
    %371 = arith.addf %369, %370 : vector<1x32xf32>
    %372 = arith.negf %371 : vector<1x32xf32>
    %373 = math.exp %372 : vector<1x32xf32>
    %cst_110 = arith.constant 1.000000e+00 : f32
    %374 = vector.broadcast %cst_110 : f32 to vector<1x32xf32>
    %375 = arith.addf %374, %373 : vector<1x32xf32>
    %376 = arith.divf %374, %375 : vector<1x32xf32>
    %377 = vector.extract_strided_slice %367 {offsets = [0, 32], sizes = [1, 32], strides = [1, 1]} : vector<1x96xf32> to vector<1x32xf32>
    %378 = vector.extract_strided_slice %368 {offsets = [0, 32], sizes = [1, 32], strides = [1, 1]} : vector<1x96xf32> to vector<1x32xf32>
    %379 = arith.addf %377, %378 : vector<1x32xf32>
    %380 = arith.negf %379 : vector<1x32xf32>
    %381 = math.exp %380 : vector<1x32xf32>
    %cst_111 = arith.constant 1.000000e+00 : f32
    %382 = vector.broadcast %cst_111 : f32 to vector<1x32xf32>
    %383 = arith.addf %382, %381 : vector<1x32xf32>
    %384 = arith.divf %382, %383 : vector<1x32xf32>
    %385 = vector.extract_strided_slice %367 {offsets = [0, 64], sizes = [1, 32], strides = [1, 1]} : vector<1x96xf32> to vector<1x32xf32>
    %386 = vector.extract_strided_slice %368 {offsets = [0, 64], sizes = [1, 32], strides = [1, 1]} : vector<1x96xf32> to vector<1x32xf32>
    %387 = arith.mulf %376, %386 : vector<1x32xf32>
    %388 = arith.addf %385, %387 : vector<1x32xf32>
    %389 = math.tanh %388 : vector<1x32xf32>
    %cst_112 = arith.constant 1.000000e+00 : f32
    %390 = vector.broadcast %cst_112 : f32 to vector<1x32xf32>
    %391 = arith.subf %390, %384 : vector<1x32xf32>
    %392 = arith.mulf %391, %389 : vector<1x32xf32>
    %393 = arith.mulf %384, %337 : vector<1x32xf32>
    %394 = arith.addf %392, %393 : vector<1x32xf32>
    %395 = vector.extract_strided_slice %365 {offsets = [0, 96], sizes = [1, 32], strides = [1, 1]} : vector<1x224xf32> to vector<1x32xf32>
    %396 = arith.negf %395 : vector<1x32xf32>
    %397 = math.exp %396 : vector<1x32xf32>
    %cst_113 = arith.constant 1.000000e+00 : f32
    %398 = vector.broadcast %cst_113 : f32 to vector<1x32xf32>
    %399 = arith.addf %398, %397 : vector<1x32xf32>
    %400 = arith.divf %398, %399 : vector<1x32xf32>
    %401 = vector.extract_strided_slice %365 {offsets = [0, 128], sizes = [1, 32], strides = [1, 1]} : vector<1x224xf32> to vector<1x32xf32>
    %402 = arith.negf %401 : vector<1x32xf32>
    %403 = math.exp %402 : vector<1x32xf32>
    %cst_114 = arith.constant 1.000000e+00 : f32
    %404 = vector.broadcast %cst_114 : f32 to vector<1x32xf32>
    %405 = arith.addf %404, %403 : vector<1x32xf32>
    %406 = arith.divf %404, %405 : vector<1x32xf32>
    %407 = vector.extract_strided_slice %365 {offsets = [0, 160], sizes = [1, 32], strides = [1, 1]} : vector<1x224xf32> to vector<1x32xf32>
    %408 = vector.extract_strided_slice %365 {offsets = [0, 192], sizes = [1, 32], strides = [1, 1]} : vector<1x224xf32> to vector<1x32xf32>
    %409 = arith.mulf %400, %408 : vector<1x32xf32>
    %410 = arith.addf %407, %409 : vector<1x32xf32>
    %411 = math.tanh %410 : vector<1x32xf32>
    %cst_115 = arith.constant 1.000000e+00 : f32
    %412 = vector.broadcast %cst_115 : f32 to vector<1x32xf32>
    %413 = arith.subf %412, %406 : vector<1x32xf32>
    %414 = arith.mulf %413, %411 : vector<1x32xf32>
    %415 = arith.mulf %406, %359 : vector<1x32xf32>
    %416 = arith.addf %414, %415 : vector<1x32xf32>
    %c1_i32_116 = arith.constant 1 : i32
    %417 = arith.subi %c5_i32, %c1_i32_116 : i32
    %418 = arith.index_cast %417 : i32 to index
    %c0_117 = arith.constant 0 : index
    %419 = vector.load %arg24[%418, %c0_117] : memref<16x32xf32, #tpu.memory_space<vmem>>, vector<1x32xf32>
    tpu.vector_store %arg24[%418, %c0_117], %416 {strides = array<i32>} : memref<16x32xf32, #tpu.memory_space<vmem>>, vector<1x32xf32>,
    %c6_i32 = arith.constant 6 : i32
    %420 = tpu.concatenate %394, %416 in 1 : vector<1x32xf32>, vector<1x32xf32> -> vector<1x64xf32>
    %cst_118 = arith.constant dense<0.000000e+00> : vector<1x224xf32>
    %421 = tpu.matmul %420, %103, %cst_118 {dimension_numbers = #tpu.dot_dimension_numbers<[1], [0], [0], [1], [0, 0, 1, 1], [], []>} : vector<1x64xf32>, vector<64x224xf32>, vector<1x224xf32> -> vector<1x224xf32>
    %422 = arith.addf %421, %104 : vector<1x224xf32>
    %423 = arith.index_cast %c6_i32 : i32 to index
    %c0_119 = arith.constant 0 : index
    %424 = vector.load %arg23[%423, %c0_119] : memref<16x96xf32, #tpu.memory_space<vmem>>, vector<1x96xf32>
    %425 = vector.extract_strided_slice %422 {offsets = [0, 0], sizes = [1, 96], strides = [1, 1]} : vector<1x224xf32> to vector<1x96xf32>
    %426 = vector.extract_strided_slice %424 {offsets = [0, 0], sizes = [1, 32], strides = [1, 1]} : vector<1x96xf32> to vector<1x32xf32>
    %427 = vector.extract_strided_slice %425 {offsets = [0, 0], sizes = [1, 32], strides = [1, 1]} : vector<1x96xf32> to vector<1x32xf32>
    %428 = arith.addf %426, %427 : vector<1x32xf32>
    %429 = arith.negf %428 : vector<1x32xf32>
    %430 = math.exp %429 : vector<1x32xf32>
    %cst_120 = arith.constant 1.000000e+00 : f32
    %431 = vector.broadcast %cst_120 : f32 to vector<1x32xf32>
    %432 = arith.addf %431, %430 : vector<1x32xf32>
    %433 = arith.divf %431, %432 : vector<1x32xf32>
    %434 = vector.extract_strided_slice %424 {offsets = [0, 32], sizes = [1, 32], strides = [1, 1]} : vector<1x96xf32> to vector<1x32xf32>
    %435 = vector.extract_strided_slice %425 {offsets = [0, 32], sizes = [1, 32], strides = [1, 1]} : vector<1x96xf32> to vector<1x32xf32>
    %436 = arith.addf %434, %435 : vector<1x32xf32>
    %437 = arith.negf %436 : vector<1x32xf32>
    %438 = math.exp %437 : vector<1x32xf32>
    %cst_121 = arith.constant 1.000000e+00 : f32
    %439 = vector.broadcast %cst_121 : f32 to vector<1x32xf32>
    %440 = arith.addf %439, %438 : vector<1x32xf32>
    %441 = arith.divf %439, %440 : vector<1x32xf32>
    %442 = vector.extract_strided_slice %424 {offsets = [0, 64], sizes = [1, 32], strides = [1, 1]} : vector<1x96xf32> to vector<1x32xf32>
    %443 = vector.extract_strided_slice %425 {offsets = [0, 64], sizes = [1, 32], strides = [1, 1]} : vector<1x96xf32> to vector<1x32xf32>
    %444 = arith.mulf %433, %443 : vector<1x32xf32>
    %445 = arith.addf %442, %444 : vector<1x32xf32>
    %446 = math.tanh %445 : vector<1x32xf32>
    %cst_122 = arith.constant 1.000000e+00 : f32
    %447 = vector.broadcast %cst_122 : f32 to vector<1x32xf32>
    %448 = arith.subf %447, %441 : vector<1x32xf32>
    %449 = arith.mulf %448, %446 : vector<1x32xf32>
    %450 = arith.mulf %441, %394 : vector<1x32xf32>
    %451 = arith.addf %449, %450 : vector<1x32xf32>
    %452 = vector.extract_strided_slice %422 {offsets = [0, 96], sizes = [1, 32], strides = [1, 1]} : vector<1x224xf32> to vector<1x32xf32>
    %453 = arith.negf %452 : vector<1x32xf32>
    %454 = math.exp %453 : vector<1x32xf32>
    %cst_123 = arith.constant 1.000000e+00 : f32
    %455 = vector.broadcast %cst_123 : f32 to vector<1x32xf32>
    %456 = arith.addf %455, %454 : vector<1x32xf32>
    %457 = arith.divf %455, %456 : vector<1x32xf32>
    %458 = vector.extract_strided_slice %422 {offsets = [0, 128], sizes = [1, 32], strides = [1, 1]} : vector<1x224xf32> to vector<1x32xf32>
    %459 = arith.negf %458 : vector<1x32xf32>
    %460 = math.exp %459 : vector<1x32xf32>
    %cst_124 = arith.constant 1.000000e+00 : f32
    %461 = vector.broadcast %cst_124 : f32 to vector<1x32xf32>
    %462 = arith.addf %461, %460 : vector<1x32xf32>
    %463 = arith.divf %461, %462 : vector<1x32xf32>
    %464 = vector.extract_strided_slice %422 {offsets = [0, 160], sizes = [1, 32], strides = [1, 1]} : vector<1x224xf32> to vector<1x32xf32>
    %465 = vector.extract_strided_slice %422 {offsets = [0, 192], sizes = [1, 32], strides = [1, 1]} : vector<1x224xf32> to vector<1x32xf32>
    %466 = arith.mulf %457, %465 : vector<1x32xf32>
    %467 = arith.addf %464, %466 : vector<1x32xf32>
    %468 = math.tanh %467 : vector<1x32xf32>
    %cst_125 = arith.constant 1.000000e+00 : f32
    %469 = vector.broadcast %cst_125 : f32 to vector<1x32xf32>
    %470 = arith.subf %469, %463 : vector<1x32xf32>
    %471 = arith.mulf %470, %468 : vector<1x32xf32>
    %472 = arith.mulf %463, %416 : vector<1x32xf32>
    %473 = arith.addf %471, %472 : vector<1x32xf32>
    %c1_i32_126 = arith.constant 1 : i32
    %474 = arith.subi %c6_i32, %c1_i32_126 : i32
    %475 = arith.index_cast %474 : i32 to index
    %c0_127 = arith.constant 0 : index
    %476 = vector.load %arg24[%475, %c0_127] : memref<16x32xf32, #tpu.memory_space<vmem>>, vector<1x32xf32>
    tpu.vector_store %arg24[%475, %c0_127], %473 {strides = array<i32>} : memref<16x32xf32, #tpu.memory_space<vmem>>, vector<1x32xf32>,
    %c7_i32 = arith.constant 7 : i32
    %477 = tpu.concatenate %451, %473 in 1 : vector<1x32xf32>, vector<1x32xf32> -> vector<1x64xf32>
    %cst_128 = arith.constant dense<0.000000e+00> : vector<1x224xf32>
    %478 = tpu.matmul %477, %103, %cst_128 {dimension_numbers = #tpu.dot_dimension_numbers<[1], [0], [0], [1], [0, 0, 1, 1], [], []>} : vector<1x64xf32>, vector<64x224xf32>, vector<1x224xf32> -> vector<1x224xf32>
    %479 = arith.addf %478, %104 : vector<1x224xf32>
    %480 = arith.index_cast %c7_i32 : i32 to index
    %c0_129 = arith.constant 0 : index
    %481 = vector.load %arg23[%480, %c0_129] : memref<16x96xf32, #tpu.memory_space<vmem>>, vector<1x96xf32>
    %482 = vector.extract_strided_slice %479 {offsets = [0, 0], sizes = [1, 96], strides = [1, 1]} : vector<1x224xf32> to vector<1x96xf32>
    %483 = vector.extract_strided_slice %481 {offsets = [0, 0], sizes = [1, 32], strides = [1, 1]} : vector<1x96xf32> to vector<1x32xf32>
    %484 = vector.extract_strided_slice %482 {offsets = [0, 0], sizes = [1, 32], strides = [1, 1]} : vector<1x96xf32> to vector<1x32xf32>
    %485 = arith.addf %483, %484 : vector<1x32xf32>
    %486 = arith.negf %485 : vector<1x32xf32>
    %487 = math.exp %486 : vector<1x32xf32>
    %cst_130 = arith.constant 1.000000e+00 : f32
    %488 = vector.broadcast %cst_130 : f32 to vector<1x32xf32>
    %489 = arith.addf %488, %487 : vector<1x32xf32>
    %490 = arith.divf %488, %489 : vector<1x32xf32>
    %491 = vector.extract_strided_slice %481 {offsets = [0, 32], sizes = [1, 32], strides = [1, 1]} : vector<1x96xf32> to vector<1x32xf32>
    %492 = vector.extract_strided_slice %482 {offsets = [0, 32], sizes = [1, 32], strides = [1, 1]} : vector<1x96xf32> to vector<1x32xf32>
    %493 = arith.addf %491, %492 : vector<1x32xf32>
    %494 = arith.negf %493 : vector<1x32xf32>
    %495 = math.exp %494 : vector<1x32xf32>
    %cst_131 = arith.constant 1.000000e+00 : f32
    %496 = vector.broadcast %cst_131 : f32 to vector<1x32xf32>
    %497 = arith.addf %496, %495 : vector<1x32xf32>
    %498 = arith.divf %496, %497 : vector<1x32xf32>
    %499 = vector.extract_strided_slice %481 {offsets = [0, 64], sizes = [1, 32], strides = [1, 1]} : vector<1x96xf32> to vector<1x32xf32>
    %500 = vector.extract_strided_slice %482 {offsets = [0, 64], sizes = [1, 32], strides = [1, 1]} : vector<1x96xf32> to vector<1x32xf32>
    %501 = arith.mulf %490, %500 : vector<1x32xf32>
    %502 = arith.addf %499, %501 : vector<1x32xf32>
    %503 = math.tanh %502 : vector<1x32xf32>
    %cst_132 = arith.constant 1.000000e+00 : f32
    %504 = vector.broadcast %cst_132 : f32 to vector<1x32xf32>
    %505 = arith.subf %504, %498 : vector<1x32xf32>
    %506 = arith.mulf %505, %503 : vector<1x32xf32>
    %507 = arith.mulf %498, %451 : vector<1x32xf32>
    %508 = arith.addf %506, %507 : vector<1x32xf32>
    %509 = vector.extract_strided_slice %479 {offsets = [0, 96], sizes = [1, 32], strides = [1, 1]} : vector<1x224xf32> to vector<1x32xf32>
    %510 = arith.negf %509 : vector<1x32xf32>
    %511 = math.exp %510 : vector<1x32xf32>
    %cst_133 = arith.constant 1.000000e+00 : f32
    %512 = vector.broadcast %cst_133 : f32 to vector<1x32xf32>
    %513 = arith.addf %512, %511 : vector<1x32xf32>
    %514 = arith.divf %512, %513 : vector<1x32xf32>
    %515 = vector.extract_strided_slice %479 {offsets = [0, 128], sizes = [1, 32], strides = [1, 1]} : vector<1x224xf32> to vector<1x32xf32>
    %516 = arith.negf %515 : vector<1x32xf32>
    %517 = math.exp %516 : vector<1x32xf32>
    %cst_134 = arith.constant 1.000000e+00 : f32
    %518 = vector.broadcast %cst_134 : f32 to vector<1x32xf32>
    %519 = arith.addf %518, %517 : vector<1x32xf32>
    %520 = arith.divf %518, %519 : vector<1x32xf32>
    %521 = vector.extract_strided_slice %479 {offsets = [0, 160], sizes = [1, 32], strides = [1, 1]} : vector<1x224xf32> to vector<1x32xf32>
    %522 = vector.extract_strided_slice %479 {offsets = [0, 192], sizes = [1, 32], strides = [1, 1]} : vector<1x224xf32> to vector<1x32xf32>
    %523 = arith.mulf %514, %522 : vector<1x32xf32>
    %524 = arith.addf %521, %523 : vector<1x32xf32>
    %525 = math.tanh %524 : vector<1x32xf32>
    %cst_135 = arith.constant 1.000000e+00 : f32
    %526 = vector.broadcast %cst_135 : f32 to vector<1x32xf32>
    %527 = arith.subf %526, %520 : vector<1x32xf32>
    %528 = arith.mulf %527, %525 : vector<1x32xf32>
    %529 = arith.mulf %520, %473 : vector<1x32xf32>
    %530 = arith.addf %528, %529 : vector<1x32xf32>
    %c1_i32_136 = arith.constant 1 : i32
    %531 = arith.subi %c7_i32, %c1_i32_136 : i32
    %532 = arith.index_cast %531 : i32 to index
    %c0_137 = arith.constant 0 : index
    %533 = vector.load %arg24[%532, %c0_137] : memref<16x32xf32, #tpu.memory_space<vmem>>, vector<1x32xf32>
    tpu.vector_store %arg24[%532, %c0_137], %530 {strides = array<i32>} : memref<16x32xf32, #tpu.memory_space<vmem>>, vector<1x32xf32>,
    %c8_i32 = arith.constant 8 : i32
    %534 = tpu.concatenate %508, %530 in 1 : vector<1x32xf32>, vector<1x32xf32> -> vector<1x64xf32>
    %cst_138 = arith.constant dense<0.000000e+00> : vector<1x224xf32>
    %535 = tpu.matmul %534, %103, %cst_138 {dimension_numbers = #tpu.dot_dimension_numbers<[1], [0], [0], [1], [0, 0, 1, 1], [], []>} : vector<1x64xf32>, vector<64x224xf32>, vector<1x224xf32> -> vector<1x224xf32>
    %536 = arith.addf %535, %104 : vector<1x224xf32>
    %537 = arith.index_cast %c8_i32 : i32 to index
    %c0_139 = arith.constant 0 : index
    %538 = vector.load %arg23[%537, %c0_139] : memref<16x96xf32, #tpu.memory_space<vmem>>, vector<1x96xf32>
    %539 = vector.extract_strided_slice %536 {offsets = [0, 0], sizes = [1, 96], strides = [1, 1]} : vector<1x224xf32> to vector<1x96xf32>
    %540 = vector.extract_strided_slice %538 {offsets = [0, 0], sizes = [1, 32], strides = [1, 1]} : vector<1x96xf32> to vector<1x32xf32>
    %541 = vector.extract_strided_slice %539 {offsets = [0, 0], sizes = [1, 32], strides = [1, 1]} : vector<1x96xf32> to vector<1x32xf32>
    %542 = arith.addf %540, %541 : vector<1x32xf32>
    %543 = arith.negf %542 : vector<1x32xf32>
    %544 = math.exp %543 : vector<1x32xf32>
    %cst_140 = arith.constant 1.000000e+00 : f32
    %545 = vector.broadcast %cst_140 : f32 to vector<1x32xf32>
    %546 = arith.addf %545, %544 : vector<1x32xf32>
    %547 = arith.divf %545, %546 : vector<1x32xf32>
    %548 = vector.extract_strided_slice %538 {offsets = [0, 32], sizes = [1, 32], strides = [1, 1]} : vector<1x96xf32> to vector<1x32xf32>
    %549 = vector.extract_strided_slice %539 {offsets = [0, 32], sizes = [1, 32], strides = [1, 1]} : vector<1x96xf32> to vector<1x32xf32>
    %550 = arith.addf %548, %549 : vector<1x32xf32>
    %551 = arith.negf %550 : vector<1x32xf32>
    %552 = math.exp %551 : vector<1x32xf32>
    %cst_141 = arith.constant 1.000000e+00 : f32
    %553 = vector.broadcast %cst_141 : f32 to vector<1x32xf32>
    %554 = arith.addf %553, %552 : vector<1x32xf32>
    %555 = arith.divf %553, %554 : vector<1x32xf32>
    %556 = vector.extract_strided_slice %538 {offsets = [0, 64], sizes = [1, 32], strides = [1, 1]} : vector<1x96xf32> to vector<1x32xf32>
    %557 = vector.extract_strided_slice %539 {offsets = [0, 64], sizes = [1, 32], strides = [1, 1]} : vector<1x96xf32> to vector<1x32xf32>
    %558 = arith.mulf %547, %557 : vector<1x32xf32>
    %559 = arith.addf %556, %558 : vector<1x32xf32>
    %560 = math.tanh %559 : vector<1x32xf32>
    %cst_142 = arith.constant 1.000000e+00 : f32
    %561 = vector.broadcast %cst_142 : f32 to vector<1x32xf32>
    %562 = arith.subf %561, %555 : vector<1x32xf32>
    %563 = arith.mulf %562, %560 : vector<1x32xf32>
    %564 = arith.mulf %555, %508 : vector<1x32xf32>
    %565 = arith.addf %563, %564 : vector<1x32xf32>
    %566 = vector.extract_strided_slice %536 {offsets = [0, 96], sizes = [1, 32], strides = [1, 1]} : vector<1x224xf32> to vector<1x32xf32>
    %567 = arith.negf %566 : vector<1x32xf32>
    %568 = math.exp %567 : vector<1x32xf32>
    %cst_143 = arith.constant 1.000000e+00 : f32
    %569 = vector.broadcast %cst_143 : f32 to vector<1x32xf32>
    %570 = arith.addf %569, %568 : vector<1x32xf32>
    %571 = arith.divf %569, %570 : vector<1x32xf32>
    %572 = vector.extract_strided_slice %536 {offsets = [0, 128], sizes = [1, 32], strides = [1, 1]} : vector<1x224xf32> to vector<1x32xf32>
    %573 = arith.negf %572 : vector<1x32xf32>
    %574 = math.exp %573 : vector<1x32xf32>
    %cst_144 = arith.constant 1.000000e+00 : f32
    %575 = vector.broadcast %cst_144 : f32 to vector<1x32xf32>
    %576 = arith.addf %575, %574 : vector<1x32xf32>
    %577 = arith.divf %575, %576 : vector<1x32xf32>
    %578 = vector.extract_strided_slice %536 {offsets = [0, 160], sizes = [1, 32], strides = [1, 1]} : vector<1x224xf32> to vector<1x32xf32>
    %579 = vector.extract_strided_slice %536 {offsets = [0, 192], sizes = [1, 32], strides = [1, 1]} : vector<1x224xf32> to vector<1x32xf32>
    %580 = arith.mulf %571, %579 : vector<1x32xf32>
    %581 = arith.addf %578, %580 : vector<1x32xf32>
    %582 = math.tanh %581 : vector<1x32xf32>
    %cst_145 = arith.constant 1.000000e+00 : f32
    %583 = vector.broadcast %cst_145 : f32 to vector<1x32xf32>
    %584 = arith.subf %583, %577 : vector<1x32xf32>
    %585 = arith.mulf %584, %582 : vector<1x32xf32>
    %586 = arith.mulf %577, %530 : vector<1x32xf32>
    %587 = arith.addf %585, %586 : vector<1x32xf32>
    %c1_i32_146 = arith.constant 1 : i32
    %588 = arith.subi %c8_i32, %c1_i32_146 : i32
    %589 = arith.index_cast %588 : i32 to index
    %c0_147 = arith.constant 0 : index
    %590 = vector.load %arg24[%589, %c0_147] : memref<16x32xf32, #tpu.memory_space<vmem>>, vector<1x32xf32>
    tpu.vector_store %arg24[%589, %c0_147], %587 {strides = array<i32>} : memref<16x32xf32, #tpu.memory_space<vmem>>, vector<1x32xf32>,
    %c9_i32 = arith.constant 9 : i32
    %591 = tpu.concatenate %565, %587 in 1 : vector<1x32xf32>, vector<1x32xf32> -> vector<1x64xf32>
    %cst_148 = arith.constant dense<0.000000e+00> : vector<1x224xf32>
    %592 = tpu.matmul %591, %103, %cst_148 {dimension_numbers = #tpu.dot_dimension_numbers<[1], [0], [0], [1], [0, 0, 1, 1], [], []>} : vector<1x64xf32>, vector<64x224xf32>, vector<1x224xf32> -> vector<1x224xf32>
    %593 = arith.addf %592, %104 : vector<1x224xf32>
    %594 = arith.index_cast %c9_i32 : i32 to index
    %c0_149 = arith.constant 0 : index
    %595 = vector.load %arg23[%594, %c0_149] : memref<16x96xf32, #tpu.memory_space<vmem>>, vector<1x96xf32>
    %596 = vector.extract_strided_slice %593 {offsets = [0, 0], sizes = [1, 96], strides = [1, 1]} : vector<1x224xf32> to vector<1x96xf32>
    %597 = vector.extract_strided_slice %595 {offsets = [0, 0], sizes = [1, 32], strides = [1, 1]} : vector<1x96xf32> to vector<1x32xf32>
    %598 = vector.extract_strided_slice %596 {offsets = [0, 0], sizes = [1, 32], strides = [1, 1]} : vector<1x96xf32> to vector<1x32xf32>
    %599 = arith.addf %597, %598 : vector<1x32xf32>
    %600 = arith.negf %599 : vector<1x32xf32>
    %601 = math.exp %600 : vector<1x32xf32>
    %cst_150 = arith.constant 1.000000e+00 : f32
    %602 = vector.broadcast %cst_150 : f32 to vector<1x32xf32>
    %603 = arith.addf %602, %601 : vector<1x32xf32>
    %604 = arith.divf %602, %603 : vector<1x32xf32>
    %605 = vector.extract_strided_slice %595 {offsets = [0, 32], sizes = [1, 32], strides = [1, 1]} : vector<1x96xf32> to vector<1x32xf32>
    %606 = vector.extract_strided_slice %596 {offsets = [0, 32], sizes = [1, 32], strides = [1, 1]} : vector<1x96xf32> to vector<1x32xf32>
    %607 = arith.addf %605, %606 : vector<1x32xf32>
    %608 = arith.negf %607 : vector<1x32xf32>
    %609 = math.exp %608 : vector<1x32xf32>
    %cst_151 = arith.constant 1.000000e+00 : f32
    %610 = vector.broadcast %cst_151 : f32 to vector<1x32xf32>
    %611 = arith.addf %610, %609 : vector<1x32xf32>
    %612 = arith.divf %610, %611 : vector<1x32xf32>
    %613 = vector.extract_strided_slice %595 {offsets = [0, 64], sizes = [1, 32], strides = [1, 1]} : vector<1x96xf32> to vector<1x32xf32>
    %614 = vector.extract_strided_slice %596 {offsets = [0, 64], sizes = [1, 32], strides = [1, 1]} : vector<1x96xf32> to vector<1x32xf32>
    %615 = arith.mulf %604, %614 : vector<1x32xf32>
    %616 = arith.addf %613, %615 : vector<1x32xf32>
    %617 = math.tanh %616 : vector<1x32xf32>
    %cst_152 = arith.constant 1.000000e+00 : f32
    %618 = vector.broadcast %cst_152 : f32 to vector<1x32xf32>
    %619 = arith.subf %618, %612 : vector<1x32xf32>
    %620 = arith.mulf %619, %617 : vector<1x32xf32>
    %621 = arith.mulf %612, %565 : vector<1x32xf32>
    %622 = arith.addf %620, %621 : vector<1x32xf32>
    %623 = vector.extract_strided_slice %593 {offsets = [0, 96], sizes = [1, 32], strides = [1, 1]} : vector<1x224xf32> to vector<1x32xf32>
    %624 = arith.negf %623 : vector<1x32xf32>
    %625 = math.exp %624 : vector<1x32xf32>
    %cst_153 = arith.constant 1.000000e+00 : f32
    %626 = vector.broadcast %cst_153 : f32 to vector<1x32xf32>
    %627 = arith.addf %626, %625 : vector<1x32xf32>
    %628 = arith.divf %626, %627 : vector<1x32xf32>
    %629 = vector.extract_strided_slice %593 {offsets = [0, 128], sizes = [1, 32], strides = [1, 1]} : vector<1x224xf32> to vector<1x32xf32>
    %630 = arith.negf %629 : vector<1x32xf32>
    %631 = math.exp %630 : vector<1x32xf32>
    %cst_154 = arith.constant 1.000000e+00 : f32
    %632 = vector.broadcast %cst_154 : f32 to vector<1x32xf32>
    %633 = arith.addf %632, %631 : vector<1x32xf32>
    %634 = arith.divf %632, %633 : vector<1x32xf32>
    %635 = vector.extract_strided_slice %593 {offsets = [0, 160], sizes = [1, 32], strides = [1, 1]} : vector<1x224xf32> to vector<1x32xf32>
    %636 = vector.extract_strided_slice %593 {offsets = [0, 192], sizes = [1, 32], strides = [1, 1]} : vector<1x224xf32> to vector<1x32xf32>
    %637 = arith.mulf %628, %636 : vector<1x32xf32>
    %638 = arith.addf %635, %637 : vector<1x32xf32>
    %639 = math.tanh %638 : vector<1x32xf32>
    %cst_155 = arith.constant 1.000000e+00 : f32
    %640 = vector.broadcast %cst_155 : f32 to vector<1x32xf32>
    %641 = arith.subf %640, %634 : vector<1x32xf32>
    %642 = arith.mulf %641, %639 : vector<1x32xf32>
    %643 = arith.mulf %634, %587 : vector<1x32xf32>
    %644 = arith.addf %642, %643 : vector<1x32xf32>
    %c1_i32_156 = arith.constant 1 : i32
    %645 = arith.subi %c9_i32, %c1_i32_156 : i32
    %646 = arith.index_cast %645 : i32 to index
    %c0_157 = arith.constant 0 : index
    %647 = vector.load %arg24[%646, %c0_157] : memref<16x32xf32, #tpu.memory_space<vmem>>, vector<1x32xf32>
    tpu.vector_store %arg24[%646, %c0_157], %644 {strides = array<i32>} : memref<16x32xf32, #tpu.memory_space<vmem>>, vector<1x32xf32>,
    %c10_i32 = arith.constant 10 : i32
    %648 = tpu.concatenate %622, %644 in 1 : vector<1x32xf32>, vector<1x32xf32> -> vector<1x64xf32>
    %cst_158 = arith.constant dense<0.000000e+00> : vector<1x224xf32>
    %649 = tpu.matmul %648, %103, %cst_158 {dimension_numbers = #tpu.dot_dimension_numbers<[1], [0], [0], [1], [0, 0, 1, 1], [], []>} : vector<1x64xf32>, vector<64x224xf32>, vector<1x224xf32> -> vector<1x224xf32>
    %650 = arith.addf %649, %104 : vector<1x224xf32>
    %651 = arith.index_cast %c10_i32 : i32 to index
    %c0_159 = arith.constant 0 : index
    %652 = vector.load %arg23[%651, %c0_159] : memref<16x96xf32, #tpu.memory_space<vmem>>, vector<1x96xf32>
    %653 = vector.extract_strided_slice %650 {offsets = [0, 0], sizes = [1, 96], strides = [1, 1]} : vector<1x224xf32> to vector<1x96xf32>
    %654 = vector.extract_strided_slice %652 {offsets = [0, 0], sizes = [1, 32], strides = [1, 1]} : vector<1x96xf32> to vector<1x32xf32>
    %655 = vector.extract_strided_slice %653 {offsets = [0, 0], sizes = [1, 32], strides = [1, 1]} : vector<1x96xf32> to vector<1x32xf32>
    %656 = arith.addf %654, %655 : vector<1x32xf32>
    %657 = arith.negf %656 : vector<1x32xf32>
    %658 = math.exp %657 : vector<1x32xf32>
    %cst_160 = arith.constant 1.000000e+00 : f32
    %659 = vector.broadcast %cst_160 : f32 to vector<1x32xf32>
    %660 = arith.addf %659, %658 : vector<1x32xf32>
    %661 = arith.divf %659, %660 : vector<1x32xf32>
    %662 = vector.extract_strided_slice %652 {offsets = [0, 32], sizes = [1, 32], strides = [1, 1]} : vector<1x96xf32> to vector<1x32xf32>
    %663 = vector.extract_strided_slice %653 {offsets = [0, 32], sizes = [1, 32], strides = [1, 1]} : vector<1x96xf32> to vector<1x32xf32>
    %664 = arith.addf %662, %663 : vector<1x32xf32>
    %665 = arith.negf %664 : vector<1x32xf32>
    %666 = math.exp %665 : vector<1x32xf32>
    %cst_161 = arith.constant 1.000000e+00 : f32
    %667 = vector.broadcast %cst_161 : f32 to vector<1x32xf32>
    %668 = arith.addf %667, %666 : vector<1x32xf32>
    %669 = arith.divf %667, %668 : vector<1x32xf32>
    %670 = vector.extract_strided_slice %652 {offsets = [0, 64], sizes = [1, 32], strides = [1, 1]} : vector<1x96xf32> to vector<1x32xf32>
    %671 = vector.extract_strided_slice %653 {offsets = [0, 64], sizes = [1, 32], strides = [1, 1]} : vector<1x96xf32> to vector<1x32xf32>
    %672 = arith.mulf %661, %671 : vector<1x32xf32>
    %673 = arith.addf %670, %672 : vector<1x32xf32>
    %674 = math.tanh %673 : vector<1x32xf32>
    %cst_162 = arith.constant 1.000000e+00 : f32
    %675 = vector.broadcast %cst_162 : f32 to vector<1x32xf32>
    %676 = arith.subf %675, %669 : vector<1x32xf32>
    %677 = arith.mulf %676, %674 : vector<1x32xf32>
    %678 = arith.mulf %669, %622 : vector<1x32xf32>
    %679 = arith.addf %677, %678 : vector<1x32xf32>
    %680 = vector.extract_strided_slice %650 {offsets = [0, 96], sizes = [1, 32], strides = [1, 1]} : vector<1x224xf32> to vector<1x32xf32>
    %681 = arith.negf %680 : vector<1x32xf32>
    %682 = math.exp %681 : vector<1x32xf32>
    %cst_163 = arith.constant 1.000000e+00 : f32
    %683 = vector.broadcast %cst_163 : f32 to vector<1x32xf32>
    %684 = arith.addf %683, %682 : vector<1x32xf32>
    %685 = arith.divf %683, %684 : vector<1x32xf32>
    %686 = vector.extract_strided_slice %650 {offsets = [0, 128], sizes = [1, 32], strides = [1, 1]} : vector<1x224xf32> to vector<1x32xf32>
    %687 = arith.negf %686 : vector<1x32xf32>
    %688 = math.exp %687 : vector<1x32xf32>
    %cst_164 = arith.constant 1.000000e+00 : f32
    %689 = vector.broadcast %cst_164 : f32 to vector<1x32xf32>
    %690 = arith.addf %689, %688 : vector<1x32xf32>
    %691 = arith.divf %689, %690 : vector<1x32xf32>
    %692 = vector.extract_strided_slice %650 {offsets = [0, 160], sizes = [1, 32], strides = [1, 1]} : vector<1x224xf32> to vector<1x32xf32>
    %693 = vector.extract_strided_slice %650 {offsets = [0, 192], sizes = [1, 32], strides = [1, 1]} : vector<1x224xf32> to vector<1x32xf32>
    %694 = arith.mulf %685, %693 : vector<1x32xf32>
    %695 = arith.addf %692, %694 : vector<1x32xf32>
    %696 = math.tanh %695 : vector<1x32xf32>
    %cst_165 = arith.constant 1.000000e+00 : f32
    %697 = vector.broadcast %cst_165 : f32 to vector<1x32xf32>
    %698 = arith.subf %697, %691 : vector<1x32xf32>
    %699 = arith.mulf %698, %696 : vector<1x32xf32>
    %700 = arith.mulf %691, %644 : vector<1x32xf32>
    %701 = arith.addf %699, %700 : vector<1x32xf32>
    %c1_i32_166 = arith.constant 1 : i32
    %702 = arith.subi %c10_i32, %c1_i32_166 : i32
    %703 = arith.index_cast %702 : i32 to index
    %c0_167 = arith.constant 0 : index
    %704 = vector.load %arg24[%703, %c0_167] : memref<16x32xf32, #tpu.memory_space<vmem>>, vector<1x32xf32>
    tpu.vector_store %arg24[%703, %c0_167], %701 {strides = array<i32>} : memref<16x32xf32, #tpu.memory_space<vmem>>, vector<1x32xf32>,
    %c11_i32 = arith.constant 11 : i32
    %705 = tpu.concatenate %679, %701 in 1 : vector<1x32xf32>, vector<1x32xf32> -> vector<1x64xf32>
    %cst_168 = arith.constant dense<0.000000e+00> : vector<1x224xf32>
    %706 = tpu.matmul %705, %103, %cst_168 {dimension_numbers = #tpu.dot_dimension_numbers<[1], [0], [0], [1], [0, 0, 1, 1], [], []>} : vector<1x64xf32>, vector<64x224xf32>, vector<1x224xf32> -> vector<1x224xf32>
    %707 = arith.addf %706, %104 : vector<1x224xf32>
    %708 = arith.index_cast %c11_i32 : i32 to index
    %c0_169 = arith.constant 0 : index
    %709 = vector.load %arg23[%708, %c0_169] : memref<16x96xf32, #tpu.memory_space<vmem>>, vector<1x96xf32>
    %710 = vector.extract_strided_slice %707 {offsets = [0, 0], sizes = [1, 96], strides = [1, 1]} : vector<1x224xf32> to vector<1x96xf32>
    %711 = vector.extract_strided_slice %709 {offsets = [0, 0], sizes = [1, 32], strides = [1, 1]} : vector<1x96xf32> to vector<1x32xf32>
    %712 = vector.extract_strided_slice %710 {offsets = [0, 0], sizes = [1, 32], strides = [1, 1]} : vector<1x96xf32> to vector<1x32xf32>
    %713 = arith.addf %711, %712 : vector<1x32xf32>
    %714 = arith.negf %713 : vector<1x32xf32>
    %715 = math.exp %714 : vector<1x32xf32>
    %cst_170 = arith.constant 1.000000e+00 : f32
    %716 = vector.broadcast %cst_170 : f32 to vector<1x32xf32>
    %717 = arith.addf %716, %715 : vector<1x32xf32>
    %718 = arith.divf %716, %717 : vector<1x32xf32>
    %719 = vector.extract_strided_slice %709 {offsets = [0, 32], sizes = [1, 32], strides = [1, 1]} : vector<1x96xf32> to vector<1x32xf32>
    %720 = vector.extract_strided_slice %710 {offsets = [0, 32], sizes = [1, 32], strides = [1, 1]} : vector<1x96xf32> to vector<1x32xf32>
    %721 = arith.addf %719, %720 : vector<1x32xf32>
    %722 = arith.negf %721 : vector<1x32xf32>
    %723 = math.exp %722 : vector<1x32xf32>
    %cst_171 = arith.constant 1.000000e+00 : f32
    %724 = vector.broadcast %cst_171 : f32 to vector<1x32xf32>
    %725 = arith.addf %724, %723 : vector<1x32xf32>
    %726 = arith.divf %724, %725 : vector<1x32xf32>
    %727 = vector.extract_strided_slice %709 {offsets = [0, 64], sizes = [1, 32], strides = [1, 1]} : vector<1x96xf32> to vector<1x32xf32>
    %728 = vector.extract_strided_slice %710 {offsets = [0, 64], sizes = [1, 32], strides = [1, 1]} : vector<1x96xf32> to vector<1x32xf32>
    %729 = arith.mulf %718, %728 : vector<1x32xf32>
    %730 = arith.addf %727, %729 : vector<1x32xf32>
    %731 = math.tanh %730 : vector<1x32xf32>
    %cst_172 = arith.constant 1.000000e+00 : f32
    %732 = vector.broadcast %cst_172 : f32 to vector<1x32xf32>
    %733 = arith.subf %732, %726 : vector<1x32xf32>
    %734 = arith.mulf %733, %731 : vector<1x32xf32>
    %735 = arith.mulf %726, %679 : vector<1x32xf32>
    %736 = arith.addf %734, %735 : vector<1x32xf32>
    %737 = vector.extract_strided_slice %707 {offsets = [0, 96], sizes = [1, 32], strides = [1, 1]} : vector<1x224xf32> to vector<1x32xf32>
    %738 = arith.negf %737 : vector<1x32xf32>
    %739 = math.exp %738 : vector<1x32xf32>
    %cst_173 = arith.constant 1.000000e+00 : f32
    %740 = vector.broadcast %cst_173 : f32 to vector<1x32xf32>
    %741 = arith.addf %740, %739 : vector<1x32xf32>
    %742 = arith.divf %740, %741 : vector<1x32xf32>
    %743 = vector.extract_strided_slice %707 {offsets = [0, 128], sizes = [1, 32], strides = [1, 1]} : vector<1x224xf32> to vector<1x32xf32>
    %744 = arith.negf %743 : vector<1x32xf32>
    %745 = math.exp %744 : vector<1x32xf32>
    %cst_174 = arith.constant 1.000000e+00 : f32
    %746 = vector.broadcast %cst_174 : f32 to vector<1x32xf32>
    %747 = arith.addf %746, %745 : vector<1x32xf32>
    %748 = arith.divf %746, %747 : vector<1x32xf32>
    %749 = vector.extract_strided_slice %707 {offsets = [0, 160], sizes = [1, 32], strides = [1, 1]} : vector<1x224xf32> to vector<1x32xf32>
    %750 = vector.extract_strided_slice %707 {offsets = [0, 192], sizes = [1, 32], strides = [1, 1]} : vector<1x224xf32> to vector<1x32xf32>
    %751 = arith.mulf %742, %750 : vector<1x32xf32>
    %752 = arith.addf %749, %751 : vector<1x32xf32>
    %753 = math.tanh %752 : vector<1x32xf32>
    %cst_175 = arith.constant 1.000000e+00 : f32
    %754 = vector.broadcast %cst_175 : f32 to vector<1x32xf32>
    %755 = arith.subf %754, %748 : vector<1x32xf32>
    %756 = arith.mulf %755, %753 : vector<1x32xf32>
    %757 = arith.mulf %748, %701 : vector<1x32xf32>
    %758 = arith.addf %756, %757 : vector<1x32xf32>
    %c1_i32_176 = arith.constant 1 : i32
    %759 = arith.subi %c11_i32, %c1_i32_176 : i32
    %760 = arith.index_cast %759 : i32 to index
    %c0_177 = arith.constant 0 : index
    %761 = vector.load %arg24[%760, %c0_177] : memref<16x32xf32, #tpu.memory_space<vmem>>, vector<1x32xf32>
    tpu.vector_store %arg24[%760, %c0_177], %758 {strides = array<i32>} : memref<16x32xf32, #tpu.memory_space<vmem>>, vector<1x32xf32>,
    %c12_i32 = arith.constant 12 : i32
    %762 = tpu.concatenate %736, %758 in 1 : vector<1x32xf32>, vector<1x32xf32> -> vector<1x64xf32>
    %cst_178 = arith.constant dense<0.000000e+00> : vector<1x224xf32>
    %763 = tpu.matmul %762, %103, %cst_178 {dimension_numbers = #tpu.dot_dimension_numbers<[1], [0], [0], [1], [0, 0, 1, 1], [], []>} : vector<1x64xf32>, vector<64x224xf32>, vector<1x224xf32> -> vector<1x224xf32>
    %764 = arith.addf %763, %104 : vector<1x224xf32>
    %765 = arith.index_cast %c12_i32 : i32 to index
    %c0_179 = arith.constant 0 : index
    %766 = vector.load %arg23[%765, %c0_179] : memref<16x96xf32, #tpu.memory_space<vmem>>, vector<1x96xf32>
    %767 = vector.extract_strided_slice %764 {offsets = [0, 0], sizes = [1, 96], strides = [1, 1]} : vector<1x224xf32> to vector<1x96xf32>
    %768 = vector.extract_strided_slice %766 {offsets = [0, 0], sizes = [1, 32], strides = [1, 1]} : vector<1x96xf32> to vector<1x32xf32>
    %769 = vector.extract_strided_slice %767 {offsets = [0, 0], sizes = [1, 32], strides = [1, 1]} : vector<1x96xf32> to vector<1x32xf32>
    %770 = arith.addf %768, %769 : vector<1x32xf32>
    %771 = arith.negf %770 : vector<1x32xf32>
    %772 = math.exp %771 : vector<1x32xf32>
    %cst_180 = arith.constant 1.000000e+00 : f32
    %773 = vector.broadcast %cst_180 : f32 to vector<1x32xf32>
    %774 = arith.addf %773, %772 : vector<1x32xf32>
    %775 = arith.divf %773, %774 : vector<1x32xf32>
    %776 = vector.extract_strided_slice %766 {offsets = [0, 32], sizes = [1, 32], strides = [1, 1]} : vector<1x96xf32> to vector<1x32xf32>
    %777 = vector.extract_strided_slice %767 {offsets = [0, 32], sizes = [1, 32], strides = [1, 1]} : vector<1x96xf32> to vector<1x32xf32>
    %778 = arith.addf %776, %777 : vector<1x32xf32>
    %779 = arith.negf %778 : vector<1x32xf32>
    %780 = math.exp %779 : vector<1x32xf32>
    %cst_181 = arith.constant 1.000000e+00 : f32
    %781 = vector.broadcast %cst_181 : f32 to vector<1x32xf32>
    %782 = arith.addf %781, %780 : vector<1x32xf32>
    %783 = arith.divf %781, %782 : vector<1x32xf32>
    %784 = vector.extract_strided_slice %766 {offsets = [0, 64], sizes = [1, 32], strides = [1, 1]} : vector<1x96xf32> to vector<1x32xf32>
    %785 = vector.extract_strided_slice %767 {offsets = [0, 64], sizes = [1, 32], strides = [1, 1]} : vector<1x96xf32> to vector<1x32xf32>
    %786 = arith.mulf %775, %785 : vector<1x32xf32>
    %787 = arith.addf %784, %786 : vector<1x32xf32>
    %788 = math.tanh %787 : vector<1x32xf32>
    %cst_182 = arith.constant 1.000000e+00 : f32
    %789 = vector.broadcast %cst_182 : f32 to vector<1x32xf32>
    %790 = arith.subf %789, %783 : vector<1x32xf32>
    %791 = arith.mulf %790, %788 : vector<1x32xf32>
    %792 = arith.mulf %783, %736 : vector<1x32xf32>
    %793 = arith.addf %791, %792 : vector<1x32xf32>
    %794 = vector.extract_strided_slice %764 {offsets = [0, 96], sizes = [1, 32], strides = [1, 1]} : vector<1x224xf32> to vector<1x32xf32>
    %795 = arith.negf %794 : vector<1x32xf32>
    %796 = math.exp %795 : vector<1x32xf32>
    %cst_183 = arith.constant 1.000000e+00 : f32
    %797 = vector.broadcast %cst_183 : f32 to vector<1x32xf32>
    %798 = arith.addf %797, %796 : vector<1x32xf32>
    %799 = arith.divf %797, %798 : vector<1x32xf32>
    %800 = vector.extract_strided_slice %764 {offsets = [0, 128], sizes = [1, 32], strides = [1, 1]} : vector<1x224xf32> to vector<1x32xf32>
    %801 = arith.negf %800 : vector<1x32xf32>
    %802 = math.exp %801 : vector<1x32xf32>
    %cst_184 = arith.constant 1.000000e+00 : f32
    %803 = vector.broadcast %cst_184 : f32 to vector<1x32xf32>
    %804 = arith.addf %803, %802 : vector<1x32xf32>
    %805 = arith.divf %803, %804 : vector<1x32xf32>
    %806 = vector.extract_strided_slice %764 {offsets = [0, 160], sizes = [1, 32], strides = [1, 1]} : vector<1x224xf32> to vector<1x32xf32>
    %807 = vector.extract_strided_slice %764 {offsets = [0, 192], sizes = [1, 32], strides = [1, 1]} : vector<1x224xf32> to vector<1x32xf32>
    %808 = arith.mulf %799, %807 : vector<1x32xf32>
    %809 = arith.addf %806, %808 : vector<1x32xf32>
    %810 = math.tanh %809 : vector<1x32xf32>
    %cst_185 = arith.constant 1.000000e+00 : f32
    %811 = vector.broadcast %cst_185 : f32 to vector<1x32xf32>
    %812 = arith.subf %811, %805 : vector<1x32xf32>
    %813 = arith.mulf %812, %810 : vector<1x32xf32>
    %814 = arith.mulf %805, %758 : vector<1x32xf32>
    %815 = arith.addf %813, %814 : vector<1x32xf32>
    %c1_i32_186 = arith.constant 1 : i32
    %816 = arith.subi %c12_i32, %c1_i32_186 : i32
    %817 = arith.index_cast %816 : i32 to index
    %c0_187 = arith.constant 0 : index
    %818 = vector.load %arg24[%817, %c0_187] : memref<16x32xf32, #tpu.memory_space<vmem>>, vector<1x32xf32>
    tpu.vector_store %arg24[%817, %c0_187], %815 {strides = array<i32>} : memref<16x32xf32, #tpu.memory_space<vmem>>, vector<1x32xf32>,
    %c13_i32 = arith.constant 13 : i32
    %819 = tpu.concatenate %793, %815 in 1 : vector<1x32xf32>, vector<1x32xf32> -> vector<1x64xf32>
    %cst_188 = arith.constant dense<0.000000e+00> : vector<1x224xf32>
    %820 = tpu.matmul %819, %103, %cst_188 {dimension_numbers = #tpu.dot_dimension_numbers<[1], [0], [0], [1], [0, 0, 1, 1], [], []>} : vector<1x64xf32>, vector<64x224xf32>, vector<1x224xf32> -> vector<1x224xf32>
    %821 = arith.addf %820, %104 : vector<1x224xf32>
    %822 = arith.index_cast %c13_i32 : i32 to index
    %c0_189 = arith.constant 0 : index
    %823 = vector.load %arg23[%822, %c0_189] : memref<16x96xf32, #tpu.memory_space<vmem>>, vector<1x96xf32>
    %824 = vector.extract_strided_slice %821 {offsets = [0, 0], sizes = [1, 96], strides = [1, 1]} : vector<1x224xf32> to vector<1x96xf32>
    %825 = vector.extract_strided_slice %823 {offsets = [0, 0], sizes = [1, 32], strides = [1, 1]} : vector<1x96xf32> to vector<1x32xf32>
    %826 = vector.extract_strided_slice %824 {offsets = [0, 0], sizes = [1, 32], strides = [1, 1]} : vector<1x96xf32> to vector<1x32xf32>
    %827 = arith.addf %825, %826 : vector<1x32xf32>
    %828 = arith.negf %827 : vector<1x32xf32>
    %829 = math.exp %828 : vector<1x32xf32>
    %cst_190 = arith.constant 1.000000e+00 : f32
    %830 = vector.broadcast %cst_190 : f32 to vector<1x32xf32>
    %831 = arith.addf %830, %829 : vector<1x32xf32>
    %832 = arith.divf %830, %831 : vector<1x32xf32>
    %833 = vector.extract_strided_slice %823 {offsets = [0, 32], sizes = [1, 32], strides = [1, 1]} : vector<1x96xf32> to vector<1x32xf32>
    %834 = vector.extract_strided_slice %824 {offsets = [0, 32], sizes = [1, 32], strides = [1, 1]} : vector<1x96xf32> to vector<1x32xf32>
    %835 = arith.addf %833, %834 : vector<1x32xf32>
    %836 = arith.negf %835 : vector<1x32xf32>
    %837 = math.exp %836 : vector<1x32xf32>
    %cst_191 = arith.constant 1.000000e+00 : f32
    %838 = vector.broadcast %cst_191 : f32 to vector<1x32xf32>
    %839 = arith.addf %838, %837 : vector<1x32xf32>
    %840 = arith.divf %838, %839 : vector<1x32xf32>
    %841 = vector.extract_strided_slice %823 {offsets = [0, 64], sizes = [1, 32], strides = [1, 1]} : vector<1x96xf32> to vector<1x32xf32>
    %842 = vector.extract_strided_slice %824 {offsets = [0, 64], sizes = [1, 32], strides = [1, 1]} : vector<1x96xf32> to vector<1x32xf32>
    %843 = arith.mulf %832, %842 : vector<1x32xf32>
    %844 = arith.addf %841, %843 : vector<1x32xf32>
    %845 = math.tanh %844 : vector<1x32xf32>
    %cst_192 = arith.constant 1.000000e+00 : f32
    %846 = vector.broadcast %cst_192 : f32 to vector<1x32xf32>
    %847 = arith.subf %846, %840 : vector<1x32xf32>
    %848 = arith.mulf %847, %845 : vector<1x32xf32>
    %849 = arith.mulf %840, %793 : vector<1x32xf32>
    %850 = arith.addf %848, %849 : vector<1x32xf32>
    %851 = vector.extract_strided_slice %821 {offsets = [0, 96], sizes = [1, 32], strides = [1, 1]} : vector<1x224xf32> to vector<1x32xf32>
    %852 = arith.negf %851 : vector<1x32xf32>
    %853 = math.exp %852 : vector<1x32xf32>
    %cst_193 = arith.constant 1.000000e+00 : f32
    %854 = vector.broadcast %cst_193 : f32 to vector<1x32xf32>
    %855 = arith.addf %854, %853 : vector<1x32xf32>
    %856 = arith.divf %854, %855 : vector<1x32xf32>
    %857 = vector.extract_strided_slice %821 {offsets = [0, 128], sizes = [1, 32], strides = [1, 1]} : vector<1x224xf32> to vector<1x32xf32>
    %858 = arith.negf %857 : vector<1x32xf32>
    %859 = math.exp %858 : vector<1x32xf32>
    %cst_194 = arith.constant 1.000000e+00 : f32
    %860 = vector.broadcast %cst_194 : f32 to vector<1x32xf32>
    %861 = arith.addf %860, %859 : vector<1x32xf32>
    %862 = arith.divf %860, %861 : vector<1x32xf32>
    %863 = vector.extract_strided_slice %821 {offsets = [0, 160], sizes = [1, 32], strides = [1, 1]} : vector<1x224xf32> to vector<1x32xf32>
    %864 = vector.extract_strided_slice %821 {offsets = [0, 192], sizes = [1, 32], strides = [1, 1]} : vector<1x224xf32> to vector<1x32xf32>
    %865 = arith.mulf %856, %864 : vector<1x32xf32>
    %866 = arith.addf %863, %865 : vector<1x32xf32>
    %867 = math.tanh %866 : vector<1x32xf32>
    %cst_195 = arith.constant 1.000000e+00 : f32
    %868 = vector.broadcast %cst_195 : f32 to vector<1x32xf32>
    %869 = arith.subf %868, %862 : vector<1x32xf32>
    %870 = arith.mulf %869, %867 : vector<1x32xf32>
    %871 = arith.mulf %862, %815 : vector<1x32xf32>
    %872 = arith.addf %870, %871 : vector<1x32xf32>
    %c1_i32_196 = arith.constant 1 : i32
    %873 = arith.subi %c13_i32, %c1_i32_196 : i32
    %874 = arith.index_cast %873 : i32 to index
    %c0_197 = arith.constant 0 : index
    %875 = vector.load %arg24[%874, %c0_197] : memref<16x32xf32, #tpu.memory_space<vmem>>, vector<1x32xf32>
    tpu.vector_store %arg24[%874, %c0_197], %872 {strides = array<i32>} : memref<16x32xf32, #tpu.memory_space<vmem>>, vector<1x32xf32>,
    %c14_i32 = arith.constant 14 : i32
    %876 = tpu.concatenate %850, %872 in 1 : vector<1x32xf32>, vector<1x32xf32> -> vector<1x64xf32>
    %cst_198 = arith.constant dense<0.000000e+00> : vector<1x224xf32>
    %877 = tpu.matmul %876, %103, %cst_198 {dimension_numbers = #tpu.dot_dimension_numbers<[1], [0], [0], [1], [0, 0, 1, 1], [], []>} : vector<1x64xf32>, vector<64x224xf32>, vector<1x224xf32> -> vector<1x224xf32>
    %878 = arith.addf %877, %104 : vector<1x224xf32>
    %879 = arith.index_cast %c14_i32 : i32 to index
    %c0_199 = arith.constant 0 : index
    %880 = vector.load %arg23[%879, %c0_199] : memref<16x96xf32, #tpu.memory_space<vmem>>, vector<1x96xf32>
    %881 = vector.extract_strided_slice %878 {offsets = [0, 0], sizes = [1, 96], strides = [1, 1]} : vector<1x224xf32> to vector<1x96xf32>
    %882 = vector.extract_strided_slice %880 {offsets = [0, 0], sizes = [1, 32], strides = [1, 1]} : vector<1x96xf32> to vector<1x32xf32>
    %883 = vector.extract_strided_slice %881 {offsets = [0, 0], sizes = [1, 32], strides = [1, 1]} : vector<1x96xf32> to vector<1x32xf32>
    %884 = arith.addf %882, %883 : vector<1x32xf32>
    %885 = arith.negf %884 : vector<1x32xf32>
    %886 = math.exp %885 : vector<1x32xf32>
    %cst_200 = arith.constant 1.000000e+00 : f32
    %887 = vector.broadcast %cst_200 : f32 to vector<1x32xf32>
    %888 = arith.addf %887, %886 : vector<1x32xf32>
    %889 = arith.divf %887, %888 : vector<1x32xf32>
    %890 = vector.extract_strided_slice %880 {offsets = [0, 32], sizes = [1, 32], strides = [1, 1]} : vector<1x96xf32> to vector<1x32xf32>
    %891 = vector.extract_strided_slice %881 {offsets = [0, 32], sizes = [1, 32], strides = [1, 1]} : vector<1x96xf32> to vector<1x32xf32>
    %892 = arith.addf %890, %891 : vector<1x32xf32>
    %893 = arith.negf %892 : vector<1x32xf32>
    %894 = math.exp %893 : vector<1x32xf32>
    %cst_201 = arith.constant 1.000000e+00 : f32
    %895 = vector.broadcast %cst_201 : f32 to vector<1x32xf32>
    %896 = arith.addf %895, %894 : vector<1x32xf32>
    %897 = arith.divf %895, %896 : vector<1x32xf32>
    %898 = vector.extract_strided_slice %880 {offsets = [0, 64], sizes = [1, 32], strides = [1, 1]} : vector<1x96xf32> to vector<1x32xf32>
    %899 = vector.extract_strided_slice %881 {offsets = [0, 64], sizes = [1, 32], strides = [1, 1]} : vector<1x96xf32> to vector<1x32xf32>
    %900 = arith.mulf %889, %899 : vector<1x32xf32>
    %901 = arith.addf %898, %900 : vector<1x32xf32>
    %902 = math.tanh %901 : vector<1x32xf32>
    %cst_202 = arith.constant 1.000000e+00 : f32
    %903 = vector.broadcast %cst_202 : f32 to vector<1x32xf32>
    %904 = arith.subf %903, %897 : vector<1x32xf32>
    %905 = arith.mulf %904, %902 : vector<1x32xf32>
    %906 = arith.mulf %897, %850 : vector<1x32xf32>
    %907 = arith.addf %905, %906 : vector<1x32xf32>
    %908 = vector.extract_strided_slice %878 {offsets = [0, 96], sizes = [1, 32], strides = [1, 1]} : vector<1x224xf32> to vector<1x32xf32>
    %909 = arith.negf %908 : vector<1x32xf32>
    %910 = math.exp %909 : vector<1x32xf32>
    %cst_203 = arith.constant 1.000000e+00 : f32
    %911 = vector.broadcast %cst_203 : f32 to vector<1x32xf32>
    %912 = arith.addf %911, %910 : vector<1x32xf32>
    %913 = arith.divf %911, %912 : vector<1x32xf32>
    %914 = vector.extract_strided_slice %878 {offsets = [0, 128], sizes = [1, 32], strides = [1, 1]} : vector<1x224xf32> to vector<1x32xf32>
    %915 = arith.negf %914 : vector<1x32xf32>
    %916 = math.exp %915 : vector<1x32xf32>
    %cst_204 = arith.constant 1.000000e+00 : f32
    %917 = vector.broadcast %cst_204 : f32 to vector<1x32xf32>
    %918 = arith.addf %917, %916 : vector<1x32xf32>
    %919 = arith.divf %917, %918 : vector<1x32xf32>
    %920 = vector.extract_strided_slice %878 {offsets = [0, 160], sizes = [1, 32], strides = [1, 1]} : vector<1x224xf32> to vector<1x32xf32>
    %921 = vector.extract_strided_slice %878 {offsets = [0, 192], sizes = [1, 32], strides = [1, 1]} : vector<1x224xf32> to vector<1x32xf32>
    %922 = arith.mulf %913, %921 : vector<1x32xf32>
    %923 = arith.addf %920, %922 : vector<1x32xf32>
    %924 = math.tanh %923 : vector<1x32xf32>
    %cst_205 = arith.constant 1.000000e+00 : f32
    %925 = vector.broadcast %cst_205 : f32 to vector<1x32xf32>
    %926 = arith.subf %925, %919 : vector<1x32xf32>
    %927 = arith.mulf %926, %924 : vector<1x32xf32>
    %928 = arith.mulf %919, %872 : vector<1x32xf32>
    %929 = arith.addf %927, %928 : vector<1x32xf32>
    %c1_i32_206 = arith.constant 1 : i32
    %930 = arith.subi %c14_i32, %c1_i32_206 : i32
    %931 = arith.index_cast %930 : i32 to index
    %c0_207 = arith.constant 0 : index
    %932 = vector.load %arg24[%931, %c0_207] : memref<16x32xf32, #tpu.memory_space<vmem>>, vector<1x32xf32>
    tpu.vector_store %arg24[%931, %c0_207], %929 {strides = array<i32>} : memref<16x32xf32, #tpu.memory_space<vmem>>, vector<1x32xf32>,
    %c15_i32 = arith.constant 15 : i32
    %933 = tpu.concatenate %907, %929 in 1 : vector<1x32xf32>, vector<1x32xf32> -> vector<1x64xf32>
    %cst_208 = arith.constant dense<0.000000e+00> : vector<1x224xf32>
    %934 = tpu.matmul %933, %103, %cst_208 {dimension_numbers = #tpu.dot_dimension_numbers<[1], [0], [0], [1], [0, 0, 1, 1], [], []>} : vector<1x64xf32>, vector<64x224xf32>, vector<1x224xf32> -> vector<1x224xf32>
    %935 = arith.addf %934, %104 : vector<1x224xf32>
    %936 = arith.index_cast %c15_i32 : i32 to index
    %c0_209 = arith.constant 0 : index
    %937 = vector.load %arg23[%936, %c0_209] : memref<16x96xf32, #tpu.memory_space<vmem>>, vector<1x96xf32>
    %938 = vector.extract_strided_slice %935 {offsets = [0, 0], sizes = [1, 96], strides = [1, 1]} : vector<1x224xf32> to vector<1x96xf32>
    %939 = vector.extract_strided_slice %937 {offsets = [0, 0], sizes = [1, 32], strides = [1, 1]} : vector<1x96xf32> to vector<1x32xf32>
    %940 = vector.extract_strided_slice %938 {offsets = [0, 0], sizes = [1, 32], strides = [1, 1]} : vector<1x96xf32> to vector<1x32xf32>
    %941 = arith.addf %939, %940 : vector<1x32xf32>
    %942 = arith.negf %941 : vector<1x32xf32>
    %943 = math.exp %942 : vector<1x32xf32>
    %cst_210 = arith.constant 1.000000e+00 : f32
    %944 = vector.broadcast %cst_210 : f32 to vector<1x32xf32>
    %945 = arith.addf %944, %943 : vector<1x32xf32>
    %946 = arith.divf %944, %945 : vector<1x32xf32>
    %947 = vector.extract_strided_slice %937 {offsets = [0, 32], sizes = [1, 32], strides = [1, 1]} : vector<1x96xf32> to vector<1x32xf32>
    %948 = vector.extract_strided_slice %938 {offsets = [0, 32], sizes = [1, 32], strides = [1, 1]} : vector<1x96xf32> to vector<1x32xf32>
    %949 = arith.addf %947, %948 : vector<1x32xf32>
    %950 = arith.negf %949 : vector<1x32xf32>
    %951 = math.exp %950 : vector<1x32xf32>
    %cst_211 = arith.constant 1.000000e+00 : f32
    %952 = vector.broadcast %cst_211 : f32 to vector<1x32xf32>
    %953 = arith.addf %952, %951 : vector<1x32xf32>
    %954 = arith.divf %952, %953 : vector<1x32xf32>
    %955 = vector.extract_strided_slice %937 {offsets = [0, 64], sizes = [1, 32], strides = [1, 1]} : vector<1x96xf32> to vector<1x32xf32>
    %956 = vector.extract_strided_slice %938 {offsets = [0, 64], sizes = [1, 32], strides = [1, 1]} : vector<1x96xf32> to vector<1x32xf32>
    %957 = arith.mulf %946, %956 : vector<1x32xf32>
    %958 = arith.addf %955, %957 : vector<1x32xf32>
    %959 = math.tanh %958 : vector<1x32xf32>
    %cst_212 = arith.constant 1.000000e+00 : f32
    %960 = vector.broadcast %cst_212 : f32 to vector<1x32xf32>
    %961 = arith.subf %960, %954 : vector<1x32xf32>
    %962 = arith.mulf %961, %959 : vector<1x32xf32>
    %963 = arith.mulf %954, %907 : vector<1x32xf32>
    %964 = arith.addf %962, %963 : vector<1x32xf32>
    %965 = vector.extract_strided_slice %935 {offsets = [0, 96], sizes = [1, 32], strides = [1, 1]} : vector<1x224xf32> to vector<1x32xf32>
    %966 = arith.negf %965 : vector<1x32xf32>
    %967 = math.exp %966 : vector<1x32xf32>
    %cst_213 = arith.constant 1.000000e+00 : f32
    %968 = vector.broadcast %cst_213 : f32 to vector<1x32xf32>
    %969 = arith.addf %968, %967 : vector<1x32xf32>
    %970 = arith.divf %968, %969 : vector<1x32xf32>
    %971 = vector.extract_strided_slice %935 {offsets = [0, 128], sizes = [1, 32], strides = [1, 1]} : vector<1x224xf32> to vector<1x32xf32>
    %972 = arith.negf %971 : vector<1x32xf32>
    %973 = math.exp %972 : vector<1x32xf32>
    %cst_214 = arith.constant 1.000000e+00 : f32
    %974 = vector.broadcast %cst_214 : f32 to vector<1x32xf32>
    %975 = arith.addf %974, %973 : vector<1x32xf32>
    %976 = arith.divf %974, %975 : vector<1x32xf32>
    %977 = vector.extract_strided_slice %935 {offsets = [0, 160], sizes = [1, 32], strides = [1, 1]} : vector<1x224xf32> to vector<1x32xf32>
    %978 = vector.extract_strided_slice %935 {offsets = [0, 192], sizes = [1, 32], strides = [1, 1]} : vector<1x224xf32> to vector<1x32xf32>
    %979 = arith.mulf %970, %978 : vector<1x32xf32>
    %980 = arith.addf %977, %979 : vector<1x32xf32>
    %981 = math.tanh %980 : vector<1x32xf32>
    %cst_215 = arith.constant 1.000000e+00 : f32
    %982 = vector.broadcast %cst_215 : f32 to vector<1x32xf32>
    %983 = arith.subf %982, %976 : vector<1x32xf32>
    %984 = arith.mulf %983, %981 : vector<1x32xf32>
    %985 = arith.mulf %976, %929 : vector<1x32xf32>
    %986 = arith.addf %984, %985 : vector<1x32xf32>
    %c1_i32_216 = arith.constant 1 : i32
    %987 = arith.subi %c15_i32, %c1_i32_216 : i32
    %988 = arith.index_cast %987 : i32 to index
    %c0_217 = arith.constant 0 : index
    %989 = vector.load %arg24[%988, %c0_217] : memref<16x32xf32, #tpu.memory_space<vmem>>, vector<1x32xf32>
    tpu.vector_store %arg24[%988, %c0_217], %986 {strides = array<i32>} : memref<16x32xf32, #tpu.memory_space<vmem>>, vector<1x32xf32>,
    %c15_i32_218 = arith.constant 15 : i32
    %990 = tpu.concatenate %964, %986 in 1 : vector<1x32xf32>, vector<1x32xf32> -> vector<1x64xf32>
    %cst_219 = arith.constant dense<0.000000e+00> : vector<1x224xf32>
    %991 = tpu.matmul %990, %103, %cst_219 {dimension_numbers = #tpu.dot_dimension_numbers<[1], [0], [0], [1], [0, 0, 1, 1], [], []>} : vector<1x64xf32>, vector<64x224xf32>, vector<1x224xf32> -> vector<1x224xf32>
    %992 = arith.addf %991, %104 : vector<1x224xf32>
    %993 = vector.extract_strided_slice %992 {offsets = [0, 96], sizes = [1, 32], strides = [1, 1]} : vector<1x224xf32> to vector<1x32xf32>
    %994 = arith.negf %993 : vector<1x32xf32>
    %995 = math.exp %994 : vector<1x32xf32>
    %cst_220 = arith.constant 1.000000e+00 : f32
    %996 = vector.broadcast %cst_220 : f32 to vector<1x32xf32>
    %997 = arith.addf %996, %995 : vector<1x32xf32>
    %998 = arith.divf %996, %997 : vector<1x32xf32>
    %999 = vector.extract_strided_slice %992 {offsets = [0, 128], sizes = [1, 32], strides = [1, 1]} : vector<1x224xf32> to vector<1x32xf32>
    %1000 = arith.negf %999 : vector<1x32xf32>
    %1001 = math.exp %1000 : vector<1x32xf32>
    %cst_221 = arith.constant 1.000000e+00 : f32
    %1002 = vector.broadcast %cst_221 : f32 to vector<1x32xf32>
    %1003 = arith.addf %1002, %1001 : vector<1x32xf32>
    %1004 = arith.divf %1002, %1003 : vector<1x32xf32>
    %1005 = vector.extract_strided_slice %992 {offsets = [0, 160], sizes = [1, 32], strides = [1, 1]} : vector<1x224xf32> to vector<1x32xf32>
    %1006 = vector.extract_strided_slice %992 {offsets = [0, 192], sizes = [1, 32], strides = [1, 1]} : vector<1x224xf32> to vector<1x32xf32>
    %1007 = arith.mulf %998, %1006 : vector<1x32xf32>
    %1008 = arith.addf %1005, %1007 : vector<1x32xf32>
    %1009 = math.tanh %1008 : vector<1x32xf32>
    %cst_222 = arith.constant 1.000000e+00 : f32
    %1010 = vector.broadcast %cst_222 : f32 to vector<1x32xf32>
    %1011 = arith.subf %1010, %1004 : vector<1x32xf32>
    %1012 = arith.mulf %1011, %1009 : vector<1x32xf32>
    %1013 = arith.mulf %1004, %986 : vector<1x32xf32>
    %1014 = arith.addf %1012, %1013 : vector<1x32xf32>
    %c15 = arith.constant 15 : index
    %c0_223 = arith.constant 0 : index
    %1015 = vector.load %arg24[%c15, %c0_223] : memref<16x32xf32, #tpu.memory_space<vmem>>, vector<1x32xf32>
    tpu.vector_store %arg24[%c15, %c0_223], %1014 {strides = array<i32>} : memref<16x32xf32, #tpu.memory_space<vmem>>, vector<1x32xf32>,
    %c0_224 = arith.constant 0 : index
    %c0_225 = arith.constant 0 : index
    %1016 = vector.load %arg24[%c0_224, %c0_225] : memref<16x32xf32, #tpu.memory_space<vmem>>, vector<16x32xf32>
    %c0_226 = arith.constant 0 : index
    %c0_227 = arith.constant 0 : index
    %1017 = vector.load %arg19[%c0_226, %c0_227] : memref<32x128xf32, #tpu.memory_space<vmem>>, vector<32x128xf32>
    %cst_228 = arith.constant dense<0.000000e+00> : vector<16x128xf32>
    %1018 = tpu.matmul %1016, %1017, %cst_228 {dimension_numbers = #tpu.dot_dimension_numbers<[1], [0], [0], [1], [0, 0, 1, 1], [], []>} : vector<16x32xf32>, vector<32x128xf32>, vector<16x128xf32> -> vector<16x128xf32>
    %cst_229 = arith.constant 0.000000e+00 : f32
    %1019 = vector.broadcast %cst_229 : f32 to vector<16x128xf32>
    %1020 = arith.cmpf ogt, %1018, %1019 : vector<16x128xf32>
    %cst_230 = arith.constant 0.00999999977 : f32
    %1021 = vector.broadcast %cst_230 : f32 to vector<16x128xf32>
    %1022 = arith.mulf %1021, %1018 : vector<16x128xf32>
    %1023 = arith.select %1020, %1018, %1022 : vector<16x128xi1>, vector<16x128xf32>
    %c0_231 = arith.constant 0 : index
    %c0_232 = arith.constant 0 : index
    %1024 = vector.load %arg20[%c0_231, %c0_232] : memref<128x64xf32, #tpu.memory_space<vmem>>, vector<128x64xf32>
    %cst_233 = arith.constant dense<0.000000e+00> : vector<16x64xf32>
    %1025 = tpu.matmul %1023, %1024, %cst_233 {dimension_numbers = #tpu.dot_dimension_numbers<[1], [0], [0], [1], [0, 0, 1, 1], [], []>} : vector<16x128xf32>, vector<128x64xf32>, vector<16x64xf32> -> vector<16x64xf32>
    %cst_234 = arith.constant 0.000000e+00 : f32
    %1026 = vector.broadcast %cst_234 : f32 to vector<16x64xf32>
    %1027 = arith.cmpf ogt, %1025, %1026 : vector<16x64xf32>
    %cst_235 = arith.constant 0.00999999977 : f32
    %1028 = vector.broadcast %cst_235 : f32 to vector<16x64xf32>
    %1029 = arith.mulf %1028, %1025 : vector<16x64xf32>
    %1030 = arith.select %1027, %1025, %1029 : vector<16x64xi1>, vector<16x64xf32>
    %c0_236 = arith.constant 0 : index
    %c0_237 = arith.constant 0 : index
    %1031 = vector.load %arg21[%c0_236, %c0_237] : memref<64x1xf32, #tpu.memory_space<vmem>>, vector<64x1xf32>
    %cst_238 = arith.constant dense<0.000000e+00> : vector<16x1xf32>
    %1032 = tpu.matmul %1030, %1031, %cst_238 {dimension_numbers = #tpu.dot_dimension_numbers<[1], [0], [0], [1], [0, 0, 1, 1], [], []>} : vector<16x64xf32>, vector<64x1xf32>, vector<16x1xf32> -> vector<16x1xf32>
    %cst_239 = arith.constant 0.000000e+00 : f32
    %1033 = vector.broadcast %cst_239 : f32 to vector<16x1xf32>
    %1034 = arith.cmpf ogt, %1032, %1033 : vector<16x1xf32>
    %cst_240 = arith.constant 0.00999999977 : f32
    %1035 = vector.broadcast %cst_240 : f32 to vector<16x1xf32>
    %1036 = arith.mulf %1035, %1032 : vector<16x1xf32>
    %1037 = arith.select %1034, %1032, %1036 : vector<16x1xi1>, vector<16x1xf32>
    %1038 = vector.shape_cast %1037 : vector<16x1xf32> to vector<1x16x1xf32>
    %cst_241 = arith.constant dense<0.000000e+00> : vector<1xf32>
    %1039 = vector.multi_reduction <add>, %1038, %cst_241 [1, 2] : vector<1x16x1xf32> to vector<1xf32>
    %1040 = vector.shape_cast %1039 : vector<1xf32> to vector<1x1x1xf32>
    %1041 = vector.extract %1040[0, 0, 0] : f32 from vector<1x1x1xf32>
    %cst_242 = arith.constant 1.600000e+01 : f32
    %1042 = arith.divf %1041, %cst_242 : f32
    %1043 = vector.broadcast %1042 : f32 to vector<1x1xf32>
    %c0_243 = arith.constant 0 : index
    %c0_244 = arith.constant 0 : index
    %1044 = vector.load %arg22[%c0_243, %c0_244] : memref<1x1xf32, #tpu.memory_space<vmem>>, vector<1x1xf32>
    tpu.vector_store %arg22[%c0_243, %c0_244], %1043 {strides = array<i32>} : memref<1x1xf32, #tpu.memory_space<vmem>>, vector<1x1xf32>,
    return
  }
}

</mosaic_0001>

<llo_original>
// kernel: ds_predict_forward.1
$region0: #{ds_predict_forward.1}
  #allocation0 [shape = 'u32[]', space=smem, size = 0x4, offset = 0x4, fixed_abs, tag = 'smem constant byte address 0x4 - core index']
  #allocation1 [shape = 'u32[144,128]{1,0:T(1,128)}', space=vmem, size = 0x12000, scoped, tag = 'internal scratch']
  #allocation2 [shape = 'f32[16,96]{1,0:T(8,128)}', space=vmem, size = 0x2000, scoped, tag = 'scratch operand']
  #allocation3 [shape = 'f32[16,32]{1,0:T(8,128)}', space=vmem, size = 0x2000, scoped, tag = 'scratch operand']
  %s0 = inlined_call_operand.vmem [shape: f32[16,28], index: 0, kind: input, shape index: {}]
  %s1 = inlined_call_operand.hbm [shape: f32[28,128], index: 1, kind: input, shape index: {}]
  %s2 = inlined_call_operand.hbm [shape: f32[1,128], index: 2, kind: input, shape index: {}]
  %s3 = inlined_call_operand.vmem [shape: f32[128,384], index: 3, kind: input, shape index: {}]
  %s4 = inlined_call_operand.vmem [shape: f32[1,384], index: 4, kind: input, shape index: {}]
  %s5 = inlined_call_operand.vmem [shape: f32[128,128], index: 5, kind: input, shape index: {}]
  %s6 = inlined_call_operand.hbm [shape: f32[1,128], index: 6, kind: input, shape index: {}]
  %s7 = inlined_call_operand.vmem [shape: f32[1,128], index: 7, kind: input, shape index: {}]
  %s8 = inlined_call_operand.hbm [shape: f32[1,128], index: 8, kind: input, shape index: {}]
  %s9 = inlined_call_operand.vmem [shape: f32[128,128], index: 9, kind: input, shape index: {}]
  %s10 = inlined_call_operand.hbm [shape: f32[1,128], index: 10, kind: input, shape index: {}]
  %s11 = inlined_call_operand.vmem [shape: f32[128,128], index: 11, kind: input, shape index: {}]
  %s12 = inlined_call_operand.hbm [shape: f32[1,128], index: 12, kind: input, shape index: {}]
  %s13 = inlined_call_operand.vmem [shape: f32[1,128], index: 13, kind: input, shape index: {}]
  %s14 = inlined_call_operand.hbm [shape: f32[1,128], index: 14, kind: input, shape index: {}]
  %s15 = inlined_call_operand.vmem [shape: f32[128,96], index: 15, kind: input, shape index: {}]
  %s16 = inlined_call_operand.hbm [shape: f32[1,96], index: 16, kind: input, shape index: {}]
  %s17 = inlined_call_operand.vmem [shape: f32[64,224], index: 17, kind: input, shape index: {}]
  %s18 = inlined_call_operand.hbm [shape: f32[1,224], index: 18, kind: input, shape index: {}]
  %s19 = inlined_call_operand.vmem [shape: f32[32,128], index: 19, kind: input, shape index: {}]
  %s20 = inlined_call_operand.vmem [shape: f32[128,64], index: 20, kind: input, shape index: {}]
  %s21 = inlined_call_operand.vmem [shape: f32[64,1], index: 21, kind: input, shape index: {}]
  %s22 = inlined_call_operand.hbm [shape: f32[1,1], index: 22, kind: output, shape index: {}]
  %s23 = sld [smem:[#allocation0]]
  $region134: #{ds_predict_forward.1} parent=0
    _
  %s25 = ssub.s32 1, %s23
  %s26 = scalar_select 0, %s25, %s23
  $region1: #{ds_predict_forward.1} parent=0
    #allocation4 [shape = 'u8[16384]{0}', space=vmem, size = 0x4000, scoped, tag = 'input window, operand 1, single buffered']
    #allocation5 [shape = 's32[1]{0}', space=sflag, size = 0x4, scoped, tag = 'scoped memory for ds_predict_forward.1']
    #allocation6 [shape = 's32[1]{0}', space=sflag, size = 0x4, scoped, tag = 'scoped memory for ds_predict_forward.1']
    #allocation7 [shape = 'u8[512]{0}', space=vmem, size = 0x400, scoped, tag = 'input window, operand 2, single buffered']
    #allocation8 [shape = 's32[1]{0}', space=sflag, size = 0x4, scoped, tag = 'scoped memory for ds_predict_forward.1']
    #allocation9 [shape = 'u8[512]{0}', space=vmem, size = 0x400, scoped, tag = 'input window, operand 6, single buffered']
    #allocation10 [shape = 'u8[512]{0}', space=vmem, size = 0x400, scoped, tag = 'input window, operand 8, single buffered']
    #allocation11 [shape = 's32[1]{0}', space=sflag, size = 0x4, scoped, tag = 'scoped memory for ds_predict_forward.1']
    #allocation12 [shape = 'u8[512]{0}', space=vmem, size = 0x400, scoped, tag = 'input window, operand 10, single buffered']
    #allocation13 [shape = 'u8[512]{0}', space=vmem, size = 0x400, scoped, tag = 'input window, operand 12, single buffered']
    #allocation14 [shape = 's32[1]{0}', space=sflag, size = 0x4, scoped, tag = 'scoped memory for ds_predict_forward.1']
    #allocation15 [shape = 'u8[512]{0}', space=vmem, size = 0x400, scoped, tag = 'input window, operand 14, single buffered']
    #allocation16 [shape = 'u8[512]{0}', space=vmem, size = 0x400, scoped, tag = 'input window, operand 16, single buffered']
    #allocation17 [shape = 's32[1]{0}', space=sflag, size = 0x4, scoped, tag = 'scoped memory for ds_predict_forward.1']
    #allocation18 [shape = 'u8[1024]{0}', space=vmem, size = 0x400, scoped, tag = 'input window, operand 18, single buffered']
    #allocation19 [shape = 'u8[512]{0}', space=vmem, size = 0x400, scoped, tag = 'output window, operand 0, single buffered']
    %27 = vsyncpa [#allocation5], 0
    %28 = vsyncpa [#allocation8], 0
    %29 = vsyncpa [#allocation11], 0
    %30 = vsyncpa [#allocation14], 0
    %31 = vsyncpa [#allocation17], 0
    %32 = vsyncpa [#allocation6], 0
    // Predicated region
    $region2: #{ds_predict_forward.1} parent=1 // pred_check
      _
    $region3: #{ds_predict_forward.1} parent=1 // pred_check_branch
      %34 = sbr.rel (0) target = $region5
    $region4: #{ds_predict_forward.1} parent=1 // pred_region
      _
    $region5: #{ds_predict_forward.1} parent=1 // pred_fallthru
      _
    // Predicated region
    $region6: #{ds_predict_forward.1} parent=1 // pred_check
      _
    $region7: #{ds_predict_forward.1} parent=1 // pred_check_branch
      %36 = sbr.rel (0) target = $region9
    $region8: #{ds_predict_forward.1} parent=1 // pred_region
      %s38 = ssub.s32 512, 512
      %39 = vsyncadd [#allocation5], %s38
      %s40 = sshll.u32 [#allocation4], 4
      %s41 = int_to_ptr.vmem [resolvable:$true] %s40
      %46 = dma.hbm_to_vmem [thread:$0]  %s1, 512, %s41, [#allocation5], 128, 128, 8
    $region9: #{ds_predict_forward.1} parent=1 // pred_fallthru
      _
    // Predicated region
    $region10: #{ds_predict_forward.1} parent=1 // pred_check
      _
    $region11: #{ds_predict_forward.1} parent=1 // pred_check_branch
      %48 = sbr.rel (0) target = $region13
    $region12: #{ds_predict_forward.1} parent=1 // pred_region
      %s50 = ssub.s32 16, 16
      %51 = vsyncadd [#allocation8], %s50
      %s53 = sshll.u32 [#allocation7], 4
      %s54 = int_to_ptr.vmem [resolvable:$true] %s53
      %56 = dma.hbm_to_vmem [thread:$0]  %s2, 16, %s54, [#allocation8]
    $region13: #{ds_predict_forward.1} parent=1 // pred_fallthru
      _
    // Predicated region
    $region14: #{ds_predict_forward.1} parent=1 // pred_check
      _
    $region15: #{ds_predict_forward.1} parent=1 // pred_check_branch
      %58 = sbr.rel (0) target = $region17
    $region16: #{ds_predict_forward.1} parent=1 // pred_region
      _
    $region17: #{ds_predict_forward.1} parent=1 // pred_fallthru
      _
    // Predicated region
    $region18: #{ds_predict_forward.1} parent=1 // pred_check
      _
    $region19: #{ds_predict_forward.1} parent=1 // pred_check_branch
      %60 = sbr.rel (0) target = $region21
    $region20: #{ds_predict_forward.1} parent=1 // pred_region
      _
    $region21: #{ds_predict_forward.1} parent=1 // pred_fallthru
      _
    // Predicated region
    $region22: #{ds_predict_forward.1} parent=1 // pred_check
      _
    $region23: #{ds_predict_forward.1} parent=1 // pred_check_branch
      %62 = sbr.rel (0) target = $region25
    $region24: #{ds_predict_forward.1} parent=1 // pred_region
      _
    $region25: #{ds_predict_forward.1} parent=1 // pred_fallthru
      _
    // Predicated region
    $region26: #{ds_predict_forward.1} parent=1 // pred_check
      _
    $region27: #{ds_predict_forward.1} parent=1 // pred_check_branch
      %64 = sbr.rel (0) target = $region29
    $region28: #{ds_predict_forward.1} parent=1 // pred_region
      %s66 = ssub.s32 16, 16
      %67 = vsyncadd [#allocation8], %s66
      %s69 = sshll.u32 [#allocation9], 4
      %s70 = int_to_ptr.vmem [resolvable:$true] %s69
      %72 = dma.hbm_to_vmem [thread:$0]  %s6, 16, %s70, [#allocation8]
    $region29: #{ds_predict_forward.1} parent=1 // pred_fallthru
      _
    // Predicated region
    $region30: #{ds_predict_forward.1} parent=1 // pred_check
      _
    $region31: #{ds_predict_forward.1} parent=1 // pred_check_branch
      %74 = sbr.rel (0) target = $region33
    $region32: #{ds_predict_forward.1} parent=1 // pred_region
      _
    $region33: #{ds_predict_forward.1} parent=1 // pred_fallthru
      _
    // Predicated region
    $region34: #{ds_predict_forward.1} parent=1 // pred_check
      _
    $region35: #{ds_predict_forward.1} parent=1 // pred_check_branch
      %76 = sbr.rel (0) target = $region37
    $region36: #{ds_predict_forward.1} parent=1 // pred_region
      %s78 = ssub.s32 16, 16
      %79 = vsyncadd [#allocation11], %s78
      %s81 = sshll.u32 [#allocation10], 4
      %s82 = int_to_ptr.vmem [resolvable:$true] %s81
      %84 = dma.hbm_to_vmem [thread:$0]  %s8, 16, %s82, [#allocation11]
    $region37: #{ds_predict_forward.1} parent=1 // pred_fallthru
      _
    // Predicated region
    $region38: #{ds_predict_forward.1} parent=1 // pred_check
      _
    $region39: #{ds_predict_forward.1} parent=1 // pred_check_branch
      %86 = sbr.rel (0) target = $region41
    $region40: #{ds_predict_forward.1} parent=1 // pred_region
      _
    $region41: #{ds_predict_forward.1} parent=1 // pred_fallthru
      _
    // Predicated region
    $region42: #{ds_predict_forward.1} parent=1 // pred_check
      _
    $region43: #{ds_predict_forward.1} parent=1 // pred_check_branch
      %88 = sbr.rel (0) target = $region45
    $region44: #{ds_predict_forward.1} parent=1 // pred_region
      %s90 = ssub.s32 16, 16
      %91 = vsyncadd [#allocation11], %s90
      %s93 = sshll.u32 [#allocation12], 4
      %s94 = int_to_ptr.vmem [resolvable:$true] %s93
      %96 = dma.hbm_to_vmem [thread:$0]  %s10, 16, %s94, [#allocation11]
    $region45: #{ds_predict_forward.1} parent=1 // pred_fallthru
      _
    // Predicated region
    $region46: #{ds_predict_forward.1} parent=1 // pred_check
      _
    $region47: #{ds_predict_forward.1} parent=1 // pred_check_branch
      %98 = sbr.rel (0) target = $region49
    $region48: #{ds_predict_forward.1} parent=1 // pred_region
      _
    $region49: #{ds_predict_forward.1} parent=1 // pred_fallthru
      _
    // Predicated region
    $region50: #{ds_predict_forward.1} parent=1 // pred_check
      _
    $region51: #{ds_predict_forward.1} parent=1 // pred_check_branch
      %100 = sbr.rel (0) target = $region53
    $region52: #{ds_predict_forward.1} parent=1 // pred_region
      %s102 = ssub.s32 16, 16
      %103 = vsyncadd [#allocation14], %s102
      %s105 = sshll.u32 [#allocation13], 4
      %s106 = int_to_ptr.vmem [resolvable:$true] %s105
      %108 = dma.hbm_to_vmem [thread:$0]  %s12, 16, %s106, [#allocation14]
    $region53: #{ds_predict_forward.1} parent=1 // pred_fallthru
      _
    // Predicated region
    $region54: #{ds_predict_forward.1} parent=1 // pred_check
      _
    $region55: #{ds_predict_forward.1} parent=1 // pred_check_branch
      %110 = sbr.rel (0) target = $region57
    $region56: #{ds_predict_forward.1} parent=1 // pred_region
      _
    $region57: #{ds_predict_forward.1} parent=1 // pred_fallthru
      _
    // Predicated region
    $region58: #{ds_predict_forward.1} parent=1 // pred_check
      _
    $region59: #{ds_predict_forward.1} parent=1 // pred_check_branch
      %112 = sbr.rel (0) target = $region61
    $region60: #{ds_predict_forward.1} parent=1 // pred_region
      %s114 = ssub.s32 16, 16
      %115 = vsyncadd [#allocation14], %s114
      %s117 = sshll.u32 [#allocation15], 4
      %s118 = int_to_ptr.vmem [resolvable:$true] %s117
      %120 = dma.hbm_to_vmem [thread:$0]  %s14, 16, %s118, [#allocation14]
    $region61: #{ds_predict_forward.1} parent=1 // pred_fallthru
      _
    // Predicated region
    $region62: #{ds_predict_forward.1} parent=1 // pred_check
      _
    $region63: #{ds_predict_forward.1} parent=1 // pred_check_branch
      %122 = sbr.rel (0) target = $region65
    $region64: #{ds_predict_forward.1} parent=1 // pred_region
      _
    $region65: #{ds_predict_forward.1} parent=1 // pred_fallthru
      _
    // Predicated region
    $region66: #{ds_predict_forward.1} parent=1 // pred_check
      _
    $region67: #{ds_predict_forward.1} parent=1 // pred_check_branch
      %124 = sbr.rel (0) target = $region69
    $region68: #{ds_predict_forward.1} parent=1 // pred_region
      %s126 = ssub.s32 16, 16
      %127 = vsyncadd [#allocation17], %s126
      %s129 = sshll.u32 [#allocation16], 4
      %s130 = int_to_ptr.vmem [resolvable:$true] %s129
      %132 = dma.hbm_to_vmem [thread:$0]  %s16, 16, %s130, [#allocation17]
    $region69: #{ds_predict_forward.1} parent=1 // pred_fallthru
      _
    // Predicated region
    $region70: #{ds_predict_forward.1} parent=1 // pred_check
      _
    $region71: #{ds_predict_forward.1} parent=1 // pred_check_branch
      %134 = sbr.rel (0) target = $region73
    $region72: #{ds_predict_forward.1} parent=1 // pred_region
      _
    $region73: #{ds_predict_forward.1} parent=1 // pred_fallthru
      _
    // Predicated region
    $region74: #{ds_predict_forward.1} parent=1 // pred_check
      _
    $region75: #{ds_predict_forward.1} parent=1 // pred_check_branch
      %136 = sbr.rel (0) target = $region77
    $region76: #{ds_predict_forward.1} parent=1 // pred_region
      %s138 = ssub.s32 32, 32
      %139 = vsyncadd [#allocation17], %s138
      %s141 = sshll.u32 [#allocation18], 4
      %s142 = int_to_ptr.vmem [resolvable:$true] %s141
      %144 = dma.hbm_to_vmem [thread:$0]  %s18, 32, %s142, [#allocation17]
    $region77: #{ds_predict_forward.1} parent=1 // pred_fallthru
      _
    // Predicated region
    $region78: #{ds_predict_forward.1} parent=1 // pred_check
      _
    $region79: #{ds_predict_forward.1} parent=1 // pred_check_branch
      %146 = sbr.rel (0) target = $region81
    $region80: #{ds_predict_forward.1} parent=1 // pred_region
      _
    $region81: #{ds_predict_forward.1} parent=1 // pred_fallthru
      _
    // Predicated region
    $region82: #{ds_predict_forward.1} parent=1 // pred_check
      _
    $region83: #{ds_predict_forward.1} parent=1 // pred_check_branch
      %148 = sbr.rel (0) target = $region85
    $region84: #{ds_predict_forward.1} parent=1 // pred_region
      _
    $region85: #{ds_predict_forward.1} parent=1 // pred_fallthru
      _
    // Predicated region
    $region86: #{ds_predict_forward.1} parent=1 // pred_check
      _
    $region87: #{ds_predict_forward.1} parent=1 // pred_check_branch
      %150 = sbr.rel (0) target = $region89
    $region88: #{ds_predict_forward.1} parent=1 // pred_region
      _
    $region89: #{ds_predict_forward.1} parent=1 // pred_fallthru
      _
    // Predicated region
    $region90: #{ds_predict_forward.1} parent=1 // pred_check
      _
    $region91: #{ds_predict_forward.1} parent=1 // pred_check_branch
      %152 = sbr.rel (0) target = $region93
    $region92: #{ds_predict_forward.1} parent=1 // pred_region
      %153 = dma.done [#allocation5], 512
    $region93: #{ds_predict_forward.1} parent=1 // pred_fallthru
      _
    // Predicated region
    $region94: #{ds_predict_forward.1} parent=1 // pred_check
      _
    $region95: #{ds_predict_forward.1} parent=1 // pred_check_branch
      %155 = sbr.rel (0) target = $region97
    $region96: #{ds_predict_forward.1} parent=1 // pred_region
      %156 = dma.done [#allocation8], 16
    $region97: #{ds_predict_forward.1} parent=1 // pred_fallthru
      _
    // Predicated region
    $region98: #{ds_predict_forward.1} parent=1 // pred_check
      _
    $region99: #{ds_predict_forward.1} parent=1 // pred_check_branch
      %158 = sbr.rel (0) target = $region101
    $region100: #{ds_predict_forward.1} parent=1 // pred_region
      %159 = dma.done [#allocation8], 16
    $region101: #{ds_predict_forward.1} parent=1 // pred_fallthru
      _
    // Predicated region
    $region102: #{ds_predict_forward.1} parent=1 // pred_check
      _
    $region103: #{ds_predict_forward.1} parent=1 // pred_check_branch
      %161 = sbr.rel (0) target = $region105
    $region104: #{ds_predict_forward.1} parent=1 // pred_region
      %162 = dma.done [#allocation11], 16
    $region105: #{ds_predict_forward.1} parent=1 // pred_fallthru
      _
    // Predicated region
    $region106: #{ds_predict_forward.1} parent=1 // pred_check
      _
    $region107: #{ds_predict_forward.1} parent=1 // pred_check_branch
      %164 = sbr.rel (0) target = $region109
    $region108: #{ds_predict_forward.1} parent=1 // pred_region
      %165 = dma.done [#allocation11], 16
    $region109: #{ds_predict_forward.1} parent=1 // pred_fallthru
      _
    // Predicated region
    $region110: #{ds_predict_forward.1} parent=1 // pred_check
      _
    $region111: #{ds_predict_forward.1} parent=1 // pred_check_branch
      %167 = sbr.rel (0) target = $region113
    $region112: #{ds_predict_forward.1} parent=1 // pred_region
      %168 = dma.done [#allocation14], 16
    $region113: #{ds_predict_forward.1} parent=1 // pred_fallthru
      _
    // Predicated region
    $region114: #{ds_predict_forward.1} parent=1 // pred_check
      _
    $region115: #{ds_predict_forward.1} parent=1 // pred_check_branch
      %170 = sbr.rel (0) target = $region117
    $region116: #{ds_predict_forward.1} parent=1 // pred_region
      %171 = dma.done [#allocation14], 16
    $region117: #{ds_predict_forward.1} parent=1 // pred_fallthru
      _
    // Predicated region
    $region118: #{ds_predict_forward.1} parent=1 // pred_check
      _
    $region119: #{ds_predict_forward.1} parent=1 // pred_check_branch
      %173 = sbr.rel (0) target = $region121
    $region120: #{ds_predict_forward.1} parent=1 // pred_region
      %174 = dma.done [#allocation17], 16
    $region121: #{ds_predict_forward.1} parent=1 // pred_fallthru
      _
    // Predicated region
    $region122: #{ds_predict_forward.1} parent=1 // pred_check
      _
    $region123: #{ds_predict_forward.1} parent=1 // pred_check_branch
      %176 = sbr.rel (0) target = $region125
    $region124: #{ds_predict_forward.1} parent=1 // pred_region
      %177 = dma.done [#allocation17], 32
    $region125: #{ds_predict_forward.1} parent=1 // pred_fallthru
      _
    %v178 = vld [vmem:[%s0] sm:$0xff]
    %v179 = vld [vmem:[%s0 + $0x8] sm:$0xff]
    %v180 = vld [vmem:[#allocation4] sm:$0xff]
    %v181 = vld [vmem:[#allocation4 + $0x8] sm:$0xff]
    %v182 = vld [vmem:[#allocation4 + $0x10] sm:$0xff]
    %v183 = vld [vmem:[#allocation4 + $0x18] sm:$0xf]
    %v184 = vld [vmem:[#allocation7] sm:$0x1]
    %v186 = vlaneseq
    %v187 = vshrl.u32 %v186, 7
    %v188 = vsub.s32 0, %v187
    %v189 = vrot.slane %v184, %v188
    %vm191 = vcmask 228352
    %v193 = vsel %vm191, %v178, 0
    %v196 = vsel %vm191, %v179, 0
    %vm198 = vcmask 1043456
    %v200 = vsel %vm198, %v183, 0
    %202 = vmatprep.subr.mxu0 0.0
    %203 = vmatpush1.msra.mxu0 %v180
    %204 = vmatprep.subr.mxu0 0.0
    %205 = vmatpush1.msra.mxu0 %v181
    %206 = vmatprep.subr.mxu0 0.0
    %207 = vmatpush1.msra.mxu0 %v182
    %208 = vmatprep.subr.mxu0 0.0
    %209 = vmatpush1.msra.mxu0 %v200
    %210 = vmatprep.subr.mxu0 0.0
    %211 = vmatpush1.msra.mxu0 0.0
    %212 = vmatprep.subr.mxu0 0.0
    %213 = vmatpush1.msra.mxu0 0.0
    %214 = vmatprep.subr.mxu0 0.0
    %215 = vmatpush1.msra.mxu0 0.0
    %216 = vmatprep.subr.mxu0 0.0
    %217 = vmatpush1.msra.mxu0 0.0
    %218 = vmatprep.subr.mxu0 0.0
    %219 = vmatpush1.msra.mxu0 0.0
    %220 = vmatprep.subr.mxu0 0.0
    %221 = vmatpush1.msra.mxu0 0.0
    %222 = vmatprep.subr.mxu0 0.0
    %223 = vmatpush1.msra.mxu0 0.0
    %224 = vmatprep.subr.mxu0 0.0
    %225 = vmatpush1.msra.mxu0 0.0
    %226 = vmatprep.subr.mxu0 0.0
    %227 = vmatpush1.msra.mxu0 0.0
    %228 = vmatprep.subr.mxu0 0.0
    %229 = vmatpush1.msra.mxu0 0.0
    %230 = vmatprep.subr.mxu0 0.0
    %231 = vmatpush1.msra.mxu0 0.0
    %232 = vmatprep.subr.mxu0 0.0
    %233 = vmatpush1.msra.mxu0 0.0
    %234 = vmatprep.subr.mxu0 0.0
    %235 = vmatpush1.msra.mxu0 0.0
    %236 = vmatprep.subr.mxu0 0.0
    %237 = vmatpush1.msra.mxu0 0.0
    %238 = vmatprep.subr.mxu0 0.0
    %239 = vmatpush1.msra.mxu0 0.0
    %240 = vmatprep.subr.mxu0 0.0
    %241 = vmatpush1.msra.mxu0 0.0
    %242 = vmatprep.subr.mxu0 0.0
    %243 = vmatpush1.msra.mxu0 0.0
    %244 = vmatprep.subr.mxu0 0.0
    %245 = vmatpush1.msra.mxu0 0.0
    %246 = vmatprep.subr.mxu0 0.0
    %247 = vmatpush1.msra.mxu0 0.0
    %248 = vmatprep.subr.mxu0 0.0
    %249 = vmatpush1.msra.mxu0 0.0
    %250 = vmatprep.subr.mxu0 0.0
    %251 = vmatpush1.msra.mxu0 0.0
    %252 = vmatprep.subr.mxu0 0.0
    %253 = vmatpush1.msra.mxu0 0.0
    %254 = vmatprep.subr.mxu0 0.0
    %255 = vmatpush1.msra.mxu0 0.0
    %256 = vmatprep.subr.mxu0 0.0
    %257 = vmatpush1.msra.mxu0 0.0
    %258 = vmatprep.subr.mxu0 0.0
    %259 = vmatpush1.msra.mxu0 0.0
    %260 = vmatprep.subr.mxu0 0.0
    %261 = vmatpush1.msra.mxu0 0.0
    %262 = vmatprep.subr.mxu0 0.0
    %263 = vmatpush1.msra.mxu0 0.0
    %264 = vmatprep.subr.mxu0 0.0
    %265 = vmatpush1.msra.mxu0 0.0
    %266 = vmatprep.mubr.f32.mxu0 0.0
    %267 = vmatmul.mubr.f32.gmra.mrb[0].mxu0 %v193
    %v268 = vpop.f32.mrb[0].mxu0
    %v269 = vadd.f32 %v189, %v268
    %v270 = vpop.f32.mrb[0].mxu0
    %271 = vmatprep.mubr.f32.mxu0 0.0
    %272 = vmatmul.mubr.f32.gmra.mrb[0].mxu0 %v196
    %v273 = vpop.f32.mrb[0].mxu0
    %v274 = vadd.f32 %v189, %v273
    %v275 = vpop.f32.mrb[0].mxu0
    %276 = vdwg.mxu0
    %v277 = vmax.f32 %v269, 0.0
    %v278 = vmax.f32 %v274, 0.0
    %v279 = vld [vmem:[%s3] sm:$0xff]
    %v280 = vld [vmem:[%s3 + $0x8] sm:$0xff]
    %v281 = vld [vmem:[%s3 + $0x10] sm:$0xff]
    %v282 = vld [vmem:[%s3 + $0x18] sm:$0xff]
    %v283 = vld [vmem:[%s3 + $0x20] sm:$0xff]
    %v284 = vld [vmem:[%s3 + $0x28] sm:$0xff]
    %v285 = vld [vmem:[%s3 + $0x30] sm:$0xff]
    %v286 = vld [vmem:[%s3 + $0x38] sm:$0xff]
    %v287 = vld [vmem:[%s3 + $0x40] sm:$0xff]
    %v288 = vld [vmem:[%s3 + $0x48] sm:$0xff]
    %v289 = vld [vmem:[%s3 + $0x50] sm:$0xff]
    %v290 = vld [vmem:[%s3 + $0x58] sm:$0xff]
    %v291 = vld [vmem:[%s3 + $0x60] sm:$0xff]
    %v292 = vld [vmem:[%s3 + $0x68] sm:$0xff]
    %v293 = vld [vmem:[%s3 + $0x70] sm:$0xff]
    %v294 = vld [vmem:[%s3 + $0x78] sm:$0xff]
    %v295 = vld [vmem:[%s3 + $0x80] sm:$0xff]
    %v296 = vld [vmem:[%s3 + $0x88] sm:$0xff]
    %v297 = vld [vmem:[%s3 + $0x90] sm:$0xff]
    %v298 = vld [vmem:[%s3 + $0x98] sm:$0xff]
    %v299 = vld [vmem:[%s3 + $0xa0] sm:$0xff]
    %v300 = vld [vmem:[%s3 + $0xa8] sm:$0xff]
    %v301 = vld [vmem:[%s3 + $0xb0] sm:$0xff]
    %v302 = vld [vmem:[%s3 + $0xb8] sm:$0xff]
    %v303 = vld [vmem:[%s3 + $0xc0] sm:$0xff]
    %v304 = vld [vmem:[%s3 + $0xc8] sm:$0xff]
    %v305 = vld [vmem:[%s3 + $0xd0] sm:$0xff]
    %v306 = vld [vmem:[%s3 + $0xd8] sm:$0xff]
    %v307 = vld [vmem:[%s3 + $0xe0] sm:$0xff]
    %v308 = vld [vmem:[%s3 + $0xe8] sm:$0xff]
    %v309 = vld [vmem:[%s3 + $0xf0] sm:$0xff]
    %v310 = vld [vmem:[%s3 + $0xf8] sm:$0xff]
    %v311 = vld [vmem:[%s3 + $0x100] sm:$0xff]
    %v312 = vld [vmem:[%s3 + $0x108] sm:$0xff]
    %v313 = vld [vmem:[%s3 + $0x110] sm:$0xff]
    %v314 = vld [vmem:[%s3 + $0x118] sm:$0xff]
    %v315 = vld [vmem:[%s3 + $0x120] sm:$0xff]
    %v316 = vld [vmem:[%s3 + $0x128] sm:$0xff]
    %v317 = vld [vmem:[%s3 + $0x130] sm:$0xff]
    %v318 = vld [vmem:[%s3 + $0x138] sm:$0xff]
    %v319 = vld [vmem:[%s3 + $0x140] sm:$0xff]
    %v320 = vld [vmem:[%s3 + $0x148] sm:$0xff]
    %v321 = vld [vmem:[%s3 + $0x150] sm:$0xff]
    %v322 = vld [vmem:[%s3 + $0x158] sm:$0xff]
    %v323 = vld [vmem:[%s3 + $0x160] sm:$0xff]
    %v324 = vld [vmem:[%s3 + $0x168] sm:$0xff]
    %v325 = vld [vmem:[%s3 + $0x170] sm:$0xff]
    %v326 = vld [vmem:[%s3 + $0x178] sm:$0xff]
    %v327 = vld [vmem:[%s4] sm:$0x7]
    %v329 = vlaneseq
    %v330 = vshrl.u32 %v329, 7
    %v331 = vsub.s32 0, %v330
    %v332 = vrot.slane %v327, %v331
    %v333 = vlaneseq
    %v334 = vshrl.u32 %v333, 7
    %v335 = vsub.s32 1, %v334
    %v336 = vrot.slane %v327, %v335
    %v337 = vlaneseq
    %v338 = vshrl.u32 %v337, 7
    %v339 = vsub.s32 2, %v338
    %v340 = vrot.slane %v327, %v339
    %344 = vmatprep.subr.mxu0 %v280
    %345 = vmatpush1.msra.mxu0 %v279
    %346 = vmatprep.subr.mxu0 %v283
    %347 = vmatpush1.msra.mxu0 %v282
    %348 = vmatprep.subr.mxu0 %v286
    %349 = vmatpush1.msra.mxu0 %v285
    %350 = vmatprep.subr.mxu0 %v289
    %351 = vmatpush1.msra.mxu0 %v288
    %352 = vmatprep.subr.mxu0 %v292
    %353 = vmatpush1.msra.mxu0 %v291
    %354 = vmatprep.subr.mxu0 %v295
    %355 = vmatpush1.msra.mxu0 %v294
    %356 = vmatprep.subr.mxu0 %v298
    %357 = vmatpush1.msra.mxu0 %v297
    %358 = vmatprep.subr.mxu0 %v301
    %359 = vmatpush1.msra.mxu0 %v300
    %360 = vmatprep.subr.mxu0 %v304
    %361 = vmatpush1.msra.mxu0 %v303
    %362 = vmatprep.subr.mxu0 %v307
    %363 = vmatpush1.msra.mxu0 %v306
    %364 = vmatprep.subr.mxu0 %v310
    %365 = vmatpush1.msra.mxu0 %v309
    %366 = vmatprep.subr.mxu0 %v313
    %367 = vmatpush1.msra.mxu0 %v312
    %368 = vmatprep.subr.mxu0 %v316
    %369 = vmatpush1.msra.mxu0 %v315
    %370 = vmatprep.subr.mxu0 %v319
    %371 = vmatpush1.msra.mxu0 %v318
    %372 = vmatprep.subr.mxu0 %v322
    %373 = vmatpush1.msra.mxu0 %v321
    %374 = vmatprep.subr.mxu0 %v325
    %375 = vmatpush1.msra.mxu0 %v324
    %376 = vmatprep.subr.mxu0 0.0
    %377 = vmatpush1.msra.mxu0 0.0
    %378 = vmatprep.subr.mxu0 0.0
    %379 = vmatpush1.msra.mxu0 0.0
    %380 = vmatprep.subr.mxu0 0.0
    %381 = vmatpush1.msra.mxu0 0.0
    %382 = vmatprep.subr.mxu0 0.0
    %383 = vmatpush1.msra.mxu0 0.0
    %384 = vmatprep.subr.mxu0 0.0
    %385 = vmatpush1.msra.mxu0 0.0
    %386 = vmatprep.subr.mxu0 0.0
    %387 = vmatpush1.msra.mxu0 0.0
    %388 = vmatprep.subr.mxu0 0.0
    %389 = vmatpush1.msra.mxu0 0.0
    %390 = vmatprep.subr.mxu0 0.0
    %391 = vmatpush1.msra.mxu0 0.0
    %392 = vmatprep.subr.mxu0 0.0
    %393 = vmatpush1.msra.mxu0 0.0
    %394 = vmatprep.subr.mxu0 0.0
    %395 = vmatpush1.msra.mxu0 0.0
    %396 = vmatprep.subr.mxu0 0.0
    %397 = vmatpush1.msra.mxu0 0.0
    %398 = vmatprep.subr.mxu0 0.0
    %399 = vmatpush1.msra.mxu0 0.0
    %400 = vmatprep.subr.mxu0 0.0
    %401 = vmatpush1.msra.mxu0 0.0
    %402 = vmatprep.subr.mxu0 0.0
    %403 = vmatpush1.msra.mxu0 0.0
    %404 = vmatprep.subr.mxu0 0.0
    %405 = vmatpush1.msra.mxu0 0.0
    %406 = vmatprep.subr.mxu0 0.0
    %407 = vmatpush1.msra.mxu0 0.0
    %408 = vmatprep.mubr.f32.mxu0 0.0
    %409 = vmatmul.mubr.f32.gmra.mrb[0].mxu0 %v277
    %v410 = vpop.f32.mrb[0].mxu0
    %v411 = vadd.f32 %v332, %v410
    %v412 = vpop.f32.mrb[0].mxu0
    %v413 = vadd.f32 %v336, %v412
    %414 = vmatprep.mubr.f32.mxu0 0.0
    %415 = vmatmul.mubr.f32.gmra.mrb[0].mxu0 %v278
    %v416 = vpop.f32.mrb[0].mxu0
    %v417 = vadd.f32 %v332, %v416
    %v418 = vpop.f32.mrb[0].mxu0
    %v419 = vadd.f32 %v336, %v418
    %420 = vdwg.mxu0
    %421 = vmatprep.subr.mxu0 0.0
    %422 = vmatpush1.msra.mxu0 %v281
    %423 = vmatprep.subr.mxu0 0.0
    %424 = vmatpush1.msra.mxu0 %v284
    %425 = vmatprep.subr.mxu0 0.0
    %426 = vmatpush1.msra.mxu0 %v287
    %427 = vmatprep.subr.mxu0 0.0
    %428 = vmatpush1.msra.mxu0 %v290
    %429 = vmatprep.subr.mxu0 0.0
    %430 = vmatpush1.msra.mxu0 %v293
    %431 = vmatprep.subr.mxu0 0.0
    %432 = vmatpush1.msra.mxu0 %v296
    %433 = vmatprep.subr.mxu0 0.0
    %434 = vmatpush1.msra.mxu0 %v299
    %435 = vmatprep.subr.mxu0 0.0
    %436 = vmatpush1.msra.mxu0 %v302
    %437 = vmatprep.subr.mxu0 0.0
    %438 = vmatpush1.msra.mxu0 %v305
    %439 = vmatprep.subr.mxu0 0.0
    %440 = vmatpush1.msra.mxu0 %v308
    %441 = vmatprep.subr.mxu0 0.0
    %442 = vmatpush1.msra.mxu0 %v311
    %443 = vmatprep.subr.mxu0 0.0
    %444 = vmatpush1.msra.mxu0 %v314
    %445 = vmatprep.subr.mxu0 0.0
    %446 = vmatpush1.msra.mxu0 %v317
    %447 = vmatprep.subr.mxu0 0.0
    %448 = vmatpush1.msra.mxu0 %v320
    %449 = vmatprep.subr.mxu0 0.0
    %450 = vmatpush1.msra.mxu0 %v323
    %451 = vmatprep.subr.mxu0 0.0
    %452 = vmatpush1.msra.mxu0 %v326
    %453 = vmatprep.subr.mxu0 0.0
    %454 = vmatpush1.msra.mxu0 0.0
    %455 = vmatprep.subr.mxu0 0.0
    %456 = vmatpush1.msra.mxu0 0.0
    %457 = vmatprep.subr.mxu0 0.0
    %458 = vmatpush1.msra.mxu0 0.0
    %459 = vmatprep.subr.mxu0 0.0
    %460 = vmatpush1.msra.mxu0 0.0
    %461 = vmatprep.subr.mxu0 0.0
    %462 = vmatpush1.msra.mxu0 0.0
    %463 = vmatprep.subr.mxu0 0.0
    %464 = vmatpush1.msra.mxu0 0.0
    %465 = vmatprep.subr.mxu0 0.0
    %466 = vmatpush1.msra.mxu0 0.0
    %467 = vmatprep.subr.mxu0 0.0
    %468 = vmatpush1.msra.mxu0 0.0
    %469 = vmatprep.subr.mxu0 0.0
    %470 = vmatpush1.msra.mxu0 0.0
    %471 = vmatprep.subr.mxu0 0.0
    %472 = vmatpush1.msra.mxu0 0.0
    %473 = vmatprep.subr.mxu0 0.0
    %474 = vmatpush1.msra.mxu0 0.0
    %475 = vmatprep.subr.mxu0 0.0
    %476 = vmatpush1.msra.mxu0 0.0
    %477 = vmatprep.subr.mxu0 0.0
    %478 = vmatpush1.msra.mxu0 0.0
    %479 = vmatprep.subr.mxu0 0.0
    %480 = vmatpush1.msra.mxu0 0.0
    %481 = vmatprep.subr.mxu0 0.0
    %482 = vmatpush1.msra.mxu0 0.0
    %483 = vmatprep.subr.mxu0 0.0
    %484 = vmatpush1.msra.mxu0 0.0
    %485 = vmatprep.mubr.f32.mxu0 0.0
    %486 = vmatmul.mubr.f32.gmra.mrb[0].mxu0 %v277
    %v487 = vpop.f32.mrb[0].mxu0
    %v488 = vadd.f32 %v340, %v487
    %v489 = vpop.f32.mrb[0].mxu0
    %490 = vmatprep.mubr.f32.mxu0 0.0
    %491 = vmatmul.mubr.f32.gmra.mrb[0].mxu0 %v278
    %v492 = vpop.f32.mrb[0].mxu0
    %v493 = vadd.f32 %v340, %v492
    %v494 = vpop.f32.mrb[0].mxu0
    %495 = vdwg.mxu0
    %496 = vmatprep.subr.mxu0 0.0
    %497 = vmatpush1.xpose.msra.mxu0 %v413
    %498 = vmatprep.subr.mxu0 0.0
    %499 = vmatpush1.xpose.msra.mxu0 %v419
    %500 = vmatprep.subr.mxu0 0.0
    %501 = vmatpush1.xpose.msra.mxu0 0.0
    %502 = vmatprep.subr.mxu0 0.0
    %503 = vmatpush1.xpose.msra.mxu0 0.0
    %504 = vmatprep.subr.mxu0 0.0
    %505 = vmatpush1.xpose.msra.mxu0 0.0
    %506 = vmatprep.subr.mxu0 0.0
    %507 = vmatpush1.xpose.msra.mxu0 0.0
    %508 = vmatprep.subr.mxu0 0.0
    %509 = vmatpush1.xpose.msra.mxu0 0.0
    %510 = vmatprep.subr.mxu0 0.0
    %511 = vmatpush1.xpose.msra.mxu0 0.0
    %512 = vmatprep.subr.mxu0 0.0
    %513 = vmatpush1.xpose.msra.mxu0 0.0
    %514 = vmatprep.subr.mxu0 0.0
    %515 = vmatpush1.xpose.msra.mxu0 0.0
    %516 = vmatprep.subr.mxu0 0.0
    %517 = vmatpush1.xpose.msra.mxu0 0.0
    %518 = vmatprep.subr.mxu0 0.0
    %519 = vmatpush1.xpose.msra.mxu0 0.0
    %520 = vmatprep.subr.mxu0 0.0
    %521 = vmatpush1.xpose.msra.mxu0 0.0
    %522 = vmatprep.subr.mxu0 0.0
    %523 = vmatpush1.xpose.msra.mxu0 0.0
    %524 = vmatprep.subr.mxu0 0.0
    %525 = vmatpush1.xpose.msra.mxu0 0.0
    %526 = vmatprep.subr.mxu0 0.0
    %527 = vmatpush1.xpose.msra.mxu0 0.0
    %528 = vmatprep.subr.mxu0 0.0
    %529 = vmatpush1.xpose.msra.mxu0 0.0
    %530 = vmatprep.subr.mxu0 0.0
    %531 = vmatpush1.xpose.msra.mxu0 0.0
    %532 = vmatprep.subr.mxu0 0.0
    %533 = vmatpush1.xpose.msra.mxu0 0.0
    %534 = vmatprep.subr.mxu0 0.0
    %535 = vmatpush1.xpose.msra.mxu0 0.0
    %536 = vmatprep.subr.mxu0 0.0
    %537 = vmatpush1.xpose.msra.mxu0 0.0
    %538 = vmatprep.subr.mxu0 0.0
    %539 = vmatpush1.xpose.msra.mxu0 0.0
    %540 = vmatprep.subr.mxu0 0.0
    %541 = vmatpush1.xpose.msra.mxu0 0.0
    %542 = vmatprep.subr.mxu0 0.0
    %543 = vmatpush1.xpose.msra.mxu0 0.0
    %544 = vmatprep.subr.mxu0 0.0
    %545 = vmatpush1.xpose.msra.mxu0 0.0
    %546 = vmatprep.subr.mxu0 0.0
    %547 = vmatpush1.xpose.msra.mxu0 0.0
    %548 = vmatprep.subr.mxu0 0.0
    %549 = vmatpush1.xpose.msra.mxu0 0.0
    %550 = vmatprep.subr.mxu0 0.0
    %551 = vmatpush1.xpose.msra.mxu0 0.0
    %552 = vmatprep.subr.mxu0 0.0
    %553 = vmatpush1.xpose.msra.mxu0 0.0
    %554 = vmatprep.subr.mxu0 0.0
    %555 = vmatpush1.xpose.msra.mxu0 0.0
    %556 = vmatprep.subr.mxu0 0.0
    %557 = vmatpush1.xpose.msra.mxu0 0.0
    %558 = vmatprep.subr.mxu0 0.0
    %559 = vmatpush1.xpose.msra.mxu0 0.0
    %560 = vmatprep.mubr.f32.mxu0 0.0
    %561 = vmatmul.mubr.f32.gmra.mrb[0].mxu0 %v411
    %v562 = vpop.f32.mrb[0].mxu0
    %v563 = vadd.f32 0.0, %v562
    %v564 = vpop.f32.mrb[0].mxu0
    %565 = vmatprep.mubr.f32.mxu0 0.0
    %566 = vmatmul.mubr.f32.gmra.mrb[0].mxu0 %v417
    %v567 = vpop.f32.mrb[0].mxu0
    %v568 = vadd.f32 0.0, %v567
    %v569 = vpop.f32.mrb[0].mxu0
    %570 = vdwg.mxu0
    %v571 = vmul.f32 %v563, 0.088388346
    %v572 = vmul.f32 %v568, 0.088388346
    %vm573 = vcmask 130048
    %v574 = vsel %vm573, %v571, -inf
    %575 = vmax.xlane.f32.xlu0 %v574
    %v576 = vpop.xlane.xlu0 %575
    %v577 = vsel %vm573, %v572, -inf
    %578 = vmax.xlane.f32.xlu0 %v577
    %v579 = vpop.xlane.xlu0 %578
    %v580 = vsub.f32 %v571, %v576
    %v581 = vsub.f32 %v572, %v579
    %v582 = vmul.f32 %v580, 1.442695
    %v583 = vpow.pop %v582
    %v584 = vmul.f32 %v581, 1.442695
    %v585 = vpow.pop %v584
    %v586 = vsel %vm573, %v583, 0.0
    %587 = vadd.xlane.f32.xlu0 %v586
    %v588 = vpop.xlane.xlu0 %587
    %v589 = vsel %vm573, %v585, 0.0
    %590 = vadd.xlane.f32.xlu0 %v589
    %v591 = vpop.xlane.xlu0 %590
    %v592 = vrcp.pop %v588
    %v593 = vrcp.pop %v591
    %v594 = vmul.f32 %v583, %v592
    %v595 = vmul.f32 %v585, %v593
    %v597 = vsel %vm573, %v594, 0
    %v600 = vsel %vm573, %v595, 0
    %602 = vmatprep.subr.mxu0 0.0
    %603 = vmatpush1.msra.mxu0 %v488
    %604 = vmatprep.subr.mxu0 0.0
    %605 = vmatpush1.msra.mxu0 %v493
    %606 = vmatprep.subr.mxu0 0.0
    %607 = vmatpush1.msra.mxu0 0.0
    %608 = vmatprep.subr.mxu0 0.0
    %609 = vmatpush1.msra.mxu0 0.0
    %610 = vmatprep.subr.mxu0 0.0
    %611 = vmatpush1.msra.mxu0 0.0
    %612 = vmatprep.subr.mxu0 0.0
    %613 = vmatpush1.msra.mxu0 0.0
    %614 = vmatprep.subr.mxu0 0.0
    %615 = vmatpush1.msra.mxu0 0.0
    %616 = vmatprep.subr.mxu0 0.0
    %617 = vmatpush1.msra.mxu0 0.0
    %618 = vmatprep.subr.mxu0 0.0
    %619 = vmatpush1.msra.mxu0 0.0
    %620 = vmatprep.subr.mxu0 0.0
    %621 = vmatpush1.msra.mxu0 0.0
    %622 = vmatprep.subr.mxu0 0.0
    %623 = vmatpush1.msra.mxu0 0.0
    %624 = vmatprep.subr.mxu0 0.0
    %625 = vmatpush1.msra.mxu0 0.0
    %626 = vmatprep.subr.mxu0 0.0
    %627 = vmatpush1.msra.mxu0 0.0
    %628 = vmatprep.subr.mxu0 0.0
    %629 = vmatpush1.msra.mxu0 0.0
    %630 = vmatprep.subr.mxu0 0.0
    %631 = vmatpush1.msra.mxu0 0.0
    %632 = vmatprep.subr.mxu0 0.0
    %633 = vmatpush1.msra.mxu0 0.0
    %634 = vmatprep.subr.mxu0 0.0
    %635 = vmatpush1.msra.mxu0 0.0
    %636 = vmatprep.subr.mxu0 0.0
    %637 = vmatpush1.msra.mxu0 0.0
    %638 = vmatprep.subr.mxu0 0.0
    %639 = vmatpush1.msra.mxu0 0.0
    %640 = vmatprep.subr.mxu0 0.0
    %641 = vmatpush1.msra.mxu0 0.0
    %642 = vmatprep.subr.mxu0 0.0
    %643 = vmatpush1.msra.mxu0 0.0
    %644 = vmatprep.subr.mxu0 0.0
    %645 = vmatpush1.msra.mxu0 0.0
    %646 = vmatprep.subr.mxu0 0.0
    %647 = vmatpush1.msra.mxu0 0.0
    %648 = vmatprep.subr.mxu0 0.0
    %649 = vmatpush1.msra.mxu0 0.0
    %650 = vmatprep.subr.mxu0 0.0
    %651 = vmatpush1.msra.mxu0 0.0
    %652 = vmatprep.subr.mxu0 0.0
    %653 = vmatpush1.msra.mxu0 0.0
    %654 = vmatprep.subr.mxu0 0.0
    %655 = vmatpush1.msra.mxu0 0.0
    %656 = vmatprep.subr.mxu0 0.0
    %657 = vmatpush1.msra.mxu0 0.0
    %658 = vmatprep.subr.mxu0 0.0
    %659 = vmatpush1.msra.mxu0 0.0
    %660 = vmatprep.subr.mxu0 0.0
    %661 = vmatpush1.msra.mxu0 0.0
    %662 = vmatprep.subr.mxu0 0.0
    %663 = vmatpush1.msra.mxu0 0.0
    %664 = vmatprep.subr.mxu0 0.0
    %665 = vmatpush1.msra.mxu0 0.0
    %666 = vmatprep.mubr.f32.mxu0 0.0
    %667 = vmatmul.mubr.f32.gmra.mrb[0].mxu0 %v597
    %v668 = vpop.f32.mrb[0].mxu0
    %v669 = vadd.f32 0.0, %v668
    %v670 = vpop.f32.mrb[0].mxu0
    %671 = vmatprep.mubr.f32.mxu0 0.0
    %672 = vmatmul.mubr.f32.gmra.mrb[0].mxu0 %v600
    %v673 = vpop.f32.mrb[0].mxu0
    %v674 = vadd.f32 0.0, %v673
    %v675 = vpop.f32.mrb[0].mxu0
    %676 = vdwg.mxu0
    %v677 = vld [vmem:[%s5] sm:$0xff]
    %v678 = vld [vmem:[%s5 + $0x8] sm:$0xff]
    %v679 = vld [vmem:[%s5 + $0x10] sm:$0xff]
    %v680 = vld [vmem:[%s5 + $0x18] sm:$0xff]
    %v681 = vld [vmem:[%s5 + $0x20] sm:$0xff]
    %v682 = vld [vmem:[%s5 + $0x28] sm:$0xff]
    %v683 = vld [vmem:[%s5 + $0x30] sm:$0xff]
    %v684 = vld [vmem:[%s5 + $0x38] sm:$0xff]
    %v685 = vld [vmem:[%s5 + $0x40] sm:$0xff]
    %v686 = vld [vmem:[%s5 + $0x48] sm:$0xff]
    %v687 = vld [vmem:[%s5 + $0x50] sm:$0xff]
    %v688 = vld [vmem:[%s5 + $0x58] sm:$0xff]
    %v689 = vld [vmem:[%s5 + $0x60] sm:$0xff]
    %v690 = vld [vmem:[%s5 + $0x68] sm:$0xff]
    %v691 = vld [vmem:[%s5 + $0x70] sm:$0xff]
    %v692 = vld [vmem:[%s5 + $0x78] sm:$0xff]
    %v693 = vld [vmem:[#allocation9] sm:$0x1]
    %v695 = vlaneseq
    %v696 = vshrl.u32 %v695, 7
    %v697 = vsub.s32 0, %v696
    %v698 = vrot.slane %v693, %v697
    %700 = vmatprep.subr.mxu0 0.0
    %701 = vmatpush1.msra.mxu0 %v677
    %702 = vmatprep.subr.mxu0 0.0
    %703 = vmatpush1.msra.mxu0 %v678
    %704 = vmatprep.subr.mxu0 0.0
    %705 = vmatpush1.msra.mxu0 %v679
    %706 = vmatprep.subr.mxu0 0.0
    %707 = vmatpush1.msra.mxu0 %v680
    %708 = vmatprep.subr.mxu0 0.0
    %709 = vmatpush1.msra.mxu0 %v681
    %710 = vmatprep.subr.mxu0 0.0
    %711 = vmatpush1.msra.mxu0 %v682
    %712 = vmatprep.subr.mxu0 0.0
    %713 = vmatpush1.msra.mxu0 %v683
    %714 = vmatprep.subr.mxu0 0.0
    %715 = vmatpush1.msra.mxu0 %v684
    %716 = vmatprep.subr.mxu0 0.0
    %717 = vmatpush1.msra.mxu0 %v685
    %718 = vmatprep.subr.mxu0 0.0
    %719 = vmatpush1.msra.mxu0 %v686
    %720 = vmatprep.subr.mxu0 0.0
    %721 = vmatpush1.msra.mxu0 %v687
    %722 = vmatprep.subr.mxu0 0.0
    %723 = vmatpush1.msra.mxu0 %v688
    %724 = vmatprep.subr.mxu0 0.0
    %725 = vmatpush1.msra.mxu0 %v689
    %726 = vmatprep.subr.mxu0 0.0
    %727 = vmatpush1.msra.mxu0 %v690
    %728 = vmatprep.subr.mxu0 0.0
    %729 = vmatpush1.msra.mxu0 %v691
    %730 = vmatprep.subr.mxu0 0.0
    %731 = vmatpush1.msra.mxu0 %v692
    %732 = vmatprep.subr.mxu0 0.0
    %733 = vmatpush1.msra.mxu0 0.0
    %734 = vmatprep.subr.mxu0 0.0
    %735 = vmatpush1.msra.mxu0 0.0
    %736 = vmatprep.subr.mxu0 0.0
    %737 = vmatpush1.msra.mxu0 0.0
    %738 = vmatprep.subr.mxu0 0.0
    %739 = vmatpush1.msra.mxu0 0.0
    %740 = vmatprep.subr.mxu0 0.0
    %741 = vmatpush1.msra.mxu0 0.0
    %742 = vmatprep.subr.mxu0 0.0
    %743 = vmatpush1.msra.mxu0 0.0
    %744 = vmatprep.subr.mxu0 0.0
    %745 = vmatpush1.msra.mxu0 0.0
    %746 = vmatprep.subr.mxu0 0.0
    %747 = vmatpush1.msra.mxu0 0.0
    %748 = vmatprep.subr.mxu0 0.0
    %749 = vmatpush1.msra.mxu0 0.0
    %750 = vmatprep.subr.mxu0 0.0
    %751 = vmatpush1.msra.mxu0 0.0
    %752 = vmatprep.subr.mxu0 0.0
    %753 = vmatpush1.msra.mxu0 0.0
    %754 = vmatprep.subr.mxu0 0.0
    %755 = vmatpush1.msra.mxu0 0.0
    %756 = vmatprep.subr.mxu0 0.0
    %757 = vmatpush1.msra.mxu0 0.0
    %758 = vmatprep.subr.mxu0 0.0
    %759 = vmatpush1.msra.mxu0 0.0
    %760 = vmatprep.subr.mxu0 0.0
    %761 = vmatpush1.msra.mxu0 0.0
    %762 = vmatprep.subr.mxu0 0.0
    %763 = vmatpush1.msra.mxu0 0.0
    %764 = vmatprep.mubr.f32.mxu0 0.0
    %765 = vmatmul.mubr.f32.gmra.mrb[0].mxu0 %v669
    %v766 = vpop.f32.mrb[0].mxu0
    %v767 = vadd.f32 %v698, %v766
    %v768 = vpop.f32.mrb[0].mxu0
    %769 = vmatprep.mubr.f32.mxu0 0.0
    %770 = vmatmul.mubr.f32.gmra.mrb[0].mxu0 %v674
    %v771 = vpop.f32.mrb[0].mxu0
    %v772 = vadd.f32 %v698, %v771
    %v773 = vpop.f32.mrb[0].mxu0
    %774 = vdwg.mxu0
    %v775 = vadd.f32 %v277, %v767
    %v776 = vadd.f32 %v278, %v772
    %v777 = vld [vmem:[%s7] sm:$0x1]
    %v778 = vld [vmem:[#allocation10] sm:$0x1]
    %779 = vadd.xlane.f32.xlu0 %v775
    %v780 = vpop.xlane.xlu0 %779
    %781 = vadd.xlane.f32.xlu0 %v776
    %v782 = vpop.xlane.xlu0 %781
    %v783 = vrcp.pop 128.0
    %v784 = vmul.f32 %v780, %v783
    %v785 = vmul.f32 %v782, %v783
    %v786 = vsub.f32 %v775, %v784
    %v787 = vsub.f32 %v776, %v785
    %v788 = vmul.f32 %v786, %v786
    %v789 = vmul.f32 %v787, %v787
    %790 = vadd.xlane.f32.xlu0 %v788
    %v791 = vpop.xlane.xlu0 %790
    %792 = vadd.xlane.f32.xlu0 %v789
    %v793 = vpop.xlane.xlu0 %792
    %v794 = vmul.f32 %v791, %v783
    %v795 = vmul.f32 %v793, %v783
    %v796 = vadd.f32 %v794, 1e-05
    %v797 = vadd.f32 %v795, 1e-05
    %v798 = vrsqrt.pop %v796
    %v799 = vrsqrt.pop %v797
    %v800 = vmul.f32 %v786, %v798
    %v801 = vmul.f32 %v787, %v799
    %v803 = vlaneseq
    %v804 = vshrl.u32 %v803, 7
    %v805 = vsub.s32 0, %v804
    %v806 = vrot.slane %v777, %v805
    %v808 = vmul.f32 %v800, %v806
    %v809 = vmul.f32 %v801, %v806
    %v811 = vlaneseq
    %v812 = vshrl.u32 %v811, 7
    %v813 = vsub.s32 0, %v812
    %v814 = vrot.slane %v778, %v813
    %v816 = vadd.f32 %v808, %v814
    %v817 = vadd.f32 %v809, %v814
    %v818 = vld [vmem:[%s9] sm:$0xff]
    %v819 = vld [vmem:[%s9 + $0x8] sm:$0xff]
    %v820 = vld [vmem:[%s9 + $0x10] sm:$0xff]
    %v821 = vld [vmem:[%s9 + $0x18] sm:$0xff]
    %v822 = vld [vmem:[%s9 + $0x20] sm:$0xff]
    %v823 = vld [vmem:[%s9 + $0x28] sm:$0xff]
    %v824 = vld [vmem:[%s9 + $0x30] sm:$0xff]
    %v825 = vld [vmem:[%s9 + $0x38] sm:$0xff]
    %v826 = vld [vmem:[%s9 + $0x40] sm:$0xff]
    %v827 = vld [vmem:[%s9 + $0x48] sm:$0xff]
    %v828 = vld [vmem:[%s9 + $0x50] sm:$0xff]
    %v829 = vld [vmem:[%s9 + $0x58] sm:$0xff]
    %v830 = vld [vmem:[%s9 + $0x60] sm:$0xff]
    %v831 = vld [vmem:[%s9 + $0x68] sm:$0xff]
    %v832 = vld [vmem:[%s9 + $0x70] sm:$0xff]
    %v833 = vld [vmem:[%s9 + $0x78] sm:$0xff]
    %v834 = vld [vmem:[#allocation12] sm:$0x1]
    %v836 = vlaneseq
    %v837 = vshrl.u32 %v836, 7
    %v838 = vsub.s32 0, %v837
    %v839 = vrot.slane %v834, %v838
    %841 = vmatprep.subr.mxu0 0.0
    %842 = vmatpush1.msra.mxu0 %v818
    %843 = vmatprep.subr.mxu0 0.0
    %844 = vmatpush1.msra.mxu0 %v819
    %845 = vmatprep.subr.mxu0 0.0
    %846 = vmatpush1.msra.mxu0 %v820
    %847 = vmatprep.subr.mxu0 0.0
    %848 = vmatpush1.msra.mxu0 %v821
    %849 = vmatprep.subr.mxu0 0.0
    %850 = vmatpush1.msra.mxu0 %v822
    %851 = vmatprep.subr.mxu0 0.0
    %852 = vmatpush1.msra.mxu0 %v823
    %853 = vmatprep.subr.mxu0 0.0
    %854 = vmatpush1.msra.mxu0 %v824
    %855 = vmatprep.subr.mxu0 0.0
    %856 = vmatpush1.msra.mxu0 %v825
    %857 = vmatprep.subr.mxu0 0.0
    %858 = vmatpush1.msra.mxu0 %v826
    %859 = vmatprep.subr.mxu0 0.0
    %860 = vmatpush1.msra.mxu0 %v827
    %861 = vmatprep.subr.mxu0 0.0
    %862 = vmatpush1.msra.mxu0 %v828
    %863 = vmatprep.subr.mxu0 0.0
    %864 = vmatpush1.msra.mxu0 %v829
    %865 = vmatprep.subr.mxu0 0.0
    %866 = vmatpush1.msra.mxu0 %v830
    %867 = vmatprep.subr.mxu0 0.0
    %868 = vmatpush1.msra.mxu0 %v831
    %869 = vmatprep.subr.mxu0 0.0
    %870 = vmatpush1.msra.mxu0 %v832
    %871 = vmatprep.subr.mxu0 0.0
    %872 = vmatpush1.msra.mxu0 %v833
    %873 = vmatprep.subr.mxu0 0.0
    %874 = vmatpush1.msra.mxu0 0.0
    %875 = vmatprep.subr.mxu0 0.0
    %876 = vmatpush1.msra.mxu0 0.0
    %877 = vmatprep.subr.mxu0 0.0
    %878 = vmatpush1.msra.mxu0 0.0
    %879 = vmatprep.subr.mxu0 0.0
    %880 = vmatpush1.msra.mxu0 0.0
    %881 = vmatprep.subr.mxu0 0.0
    %882 = vmatpush1.msra.mxu0 0.0
    %883 = vmatprep.subr.mxu0 0.0
    %884 = vmatpush1.msra.mxu0 0.0
    %885 = vmatprep.subr.mxu0 0.0
    %886 = vmatpush1.msra.mxu0 0.0
    %887 = vmatprep.subr.mxu0 0.0
    %888 = vmatpush1.msra.mxu0 0.0
    %889 = vmatprep.subr.mxu0 0.0
    %890 = vmatpush1.msra.mxu0 0.0
    %891 = vmatprep.subr.mxu0 0.0
    %892 = vmatpush1.msra.mxu0 0.0
    %893 = vmatprep.subr.mxu0 0.0
    %894 = vmatpush1.msra.mxu0 0.0
    %895 = vmatprep.subr.mxu0 0.0
    %896 = vmatpush1.msra.mxu0 0.0
    %897 = vmatprep.subr.mxu0 0.0
    %898 = vmatpush1.msra.mxu0 0.0
    %899 = vmatprep.subr.mxu0 0.0
    %900 = vmatpush1.msra.mxu0 0.0
    %901 = vmatprep.subr.mxu0 0.0
    %902 = vmatpush1.msra.mxu0 0.0
    %903 = vmatprep.subr.mxu0 0.0
    %904 = vmatpush1.msra.mxu0 0.0
    %905 = vmatprep.mubr.f32.mxu0 0.0
    %906 = vmatmul.mubr.f32.gmra.mrb[0].mxu0 %v816
    %v907 = vpop.f32.mrb[0].mxu0
    %v908 = vadd.f32 %v839, %v907
    %v909 = vpop.f32.mrb[0].mxu0
    %910 = vmatprep.mubr.f32.mxu0 0.0
    %911 = vmatmul.mubr.f32.gmra.mrb[0].mxu0 %v817
    %v912 = vpop.f32.mrb[0].mxu0
    %v913 = vadd.f32 %v839, %v912
    %v914 = vpop.f32.mrb[0].mxu0
    %915 = vdwg.mxu0
    %v916 = vmax.f32 %v908, 0.0
    %v917 = vmax.f32 %v913, 0.0
    %v918 = vld [vmem:[%s11] sm:$0xff]
    %v919 = vld [vmem:[%s11 + $0x8] sm:$0xff]
    %v920 = vld [vmem:[%s11 + $0x10] sm:$0xff]
    %v921 = vld [vmem:[%s11 + $0x18] sm:$0xff]
    %v922 = vld [vmem:[%s11 + $0x20] sm:$0xff]
    %v923 = vld [vmem:[%s11 + $0x28] sm:$0xff]
    %v924 = vld [vmem:[%s11 + $0x30] sm:$0xff]
    %v925 = vld [vmem:[%s11 + $0x38] sm:$0xff]
    %v926 = vld [vmem:[%s11 + $0x40] sm:$0xff]
    %v927 = vld [vmem:[%s11 + $0x48] sm:$0xff]
    %v928 = vld [vmem:[%s11 + $0x50] sm:$0xff]
    %v929 = vld [vmem:[%s11 + $0x58] sm:$0xff]
    %v930 = vld [vmem:[%s11 + $0x60] sm:$0xff]
    %v931 = vld [vmem:[%s11 + $0x68] sm:$0xff]
    %v932 = vld [vmem:[%s11 + $0x70] sm:$0xff]
    %v933 = vld [vmem:[%s11 + $0x78] sm:$0xff]
    %v934 = vld [vmem:[#allocation13] sm:$0x1]
    %v936 = vlaneseq
    %v937 = vshrl.u32 %v936, 7
    %v938 = vsub.s32 0, %v937
    %v939 = vrot.slane %v934, %v938
    %941 = vmatprep.subr.mxu0 0.0
    %942 = vmatpush1.msra.mxu0 %v918
    %943 = vmatprep.subr.mxu0 0.0
    %944 = vmatpush1.msra.mxu0 %v919
    %945 = vmatprep.subr.mxu0 0.0
    %946 = vmatpush1.msra.mxu0 %v920
    %947 = vmatprep.subr.mxu0 0.0
    %948 = vmatpush1.msra.mxu0 %v921
    %949 = vmatprep.subr.mxu0 0.0
    %950 = vmatpush1.msra.mxu0 %v922
    %951 = vmatprep.subr.mxu0 0.0
    %952 = vmatpush1.msra.mxu0 %v923
    %953 = vmatprep.subr.mxu0 0.0
    %954 = vmatpush1.msra.mxu0 %v924
    %955 = vmatprep.subr.mxu0 0.0
    %956 = vmatpush1.msra.mxu0 %v925
    %957 = vmatprep.subr.mxu0 0.0
    %958 = vmatpush1.msra.mxu0 %v926
    %959 = vmatprep.subr.mxu0 0.0
    %960 = vmatpush1.msra.mxu0 %v927
    %961 = vmatprep.subr.mxu0 0.0
    %962 = vmatpush1.msra.mxu0 %v928
    %963 = vmatprep.subr.mxu0 0.0
    %964 = vmatpush1.msra.mxu0 %v929
    %965 = vmatprep.subr.mxu0 0.0
    %966 = vmatpush1.msra.mxu0 %v930
    %967 = vmatprep.subr.mxu0 0.0
    %968 = vmatpush1.msra.mxu0 %v931
    %969 = vmatprep.subr.mxu0 0.0
    %970 = vmatpush1.msra.mxu0 %v932
    %971 = vmatprep.subr.mxu0 0.0
    %972 = vmatpush1.msra.mxu0 %v933
    %973 = vmatprep.subr.mxu0 0.0
    %974 = vmatpush1.msra.mxu0 0.0
    %975 = vmatprep.subr.mxu0 0.0
    %976 = vmatpush1.msra.mxu0 0.0
    %977 = vmatprep.subr.mxu0 0.0
    %978 = vmatpush1.msra.mxu0 0.0
    %979 = vmatprep.subr.mxu0 0.0
    %980 = vmatpush1.msra.mxu0 0.0
    %981 = vmatprep.subr.mxu0 0.0
    %982 = vmatpush1.msra.mxu0 0.0
    %983 = vmatprep.subr.mxu0 0.0
    %984 = vmatpush1.msra.mxu0 0.0
    %985 = vmatprep.subr.mxu0 0.0
    %986 = vmatpush1.msra.mxu0 0.0
    %987 = vmatprep.subr.mxu0 0.0
    %988 = vmatpush1.msra.mxu0 0.0
    %989 = vmatprep.subr.mxu0 0.0
    %990 = vmatpush1.msra.mxu0 0.0
    %991 = vmatprep.subr.mxu0 0.0
    %992 = vmatpush1.msra.mxu0 0.0
    %993 = vmatprep.subr.mxu0 0.0
    %994 = vmatpush1.msra.mxu0 0.0
    %995 = vmatprep.subr.mxu0 0.0
    %996 = vmatpush1.msra.mxu0 0.0
    %997 = vmatprep.subr.mxu0 0.0
    %998 = vmatpush1.msra.mxu0 0.0
    %999 = vmatprep.subr.mxu0 0.0
    %1000 = vmatpush1.msra.mxu0 0.0
    %1001 = vmatprep.subr.mxu0 0.0
    %1002 = vmatpush1.msra.mxu0 0.0
    %1003 = vmatprep.subr.mxu0 0.0
    %1004 = vmatpush1.msra.mxu0 0.0
    %1005 = vmatprep.mubr.f32.mxu0 0.0
    %1006 = vmatmul.mubr.f32.gmra.mrb[0].mxu0 %v916
    %v1007 = vpop.f32.mrb[0].mxu0
    %v1008 = vadd.f32 %v939, %v1007
    %v1009 = vpop.f32.mrb[0].mxu0
    %1010 = vmatprep.mubr.f32.mxu0 0.0
    %1011 = vmatmul.mubr.f32.gmra.mrb[0].mxu0 %v917
    %v1012 = vpop.f32.mrb[0].mxu0
    %v1013 = vadd.f32 %v939, %v1012
    %v1014 = vpop.f32.mrb[0].mxu0
    %1015 = vdwg.mxu0
    %v1016 = vadd.f32 %v816, %v1008
    %v1017 = vadd.f32 %v817, %v1013
    %v1018 = vld [vmem:[%s13] sm:$0x1]
    %v1019 = vld [vmem:[#allocation15] sm:$0x1]
    %1020 = vadd.xlane.f32.xlu0 %v1016
    %v1021 = vpop.xlane.xlu0 %1020
    %1022 = vadd.xlane.f32.xlu0 %v1017
    %v1023 = vpop.xlane.xlu0 %1022
    %v1024 = vmul.f32 %v1021, %v783
    %v1025 = vmul.f32 %v1023, %v783
    %v1026 = vsub.f32 %v1016, %v1024
    %v1027 = vsub.f32 %v1017, %v1025
    %v1028 = vmul.f32 %v1026, %v1026
    %v1029 = vmul.f32 %v1027, %v1027
    %1030 = vadd.xlane.f32.xlu0 %v1028
    %v1031 = vpop.xlane.xlu0 %1030
    %1032 = vadd.xlane.f32.xlu0 %v1029
    %v1033 = vpop.xlane.xlu0 %1032
    %v1034 = vmul.f32 %v1031, %v783
    %v1035 = vmul.f32 %v1033, %v783
    %v1036 = vadd.f32 %v1034, 1e-05
    %v1037 = vadd.f32 %v1035, 1e-05
    %v1038 = vrsqrt.pop %v1036
    %v1039 = vrsqrt.pop %v1037
    %v1040 = vmul.f32 %v1026, %v1038
    %v1041 = vmul.f32 %v1027, %v1039
    %v1043 = vlaneseq
    %v1044 = vshrl.u32 %v1043, 7
    %v1045 = vsub.s32 0, %v1044
    %v1046 = vrot.slane %v1018, %v1045
    %v1048 = vmul.f32 %v1040, %v1046
    %v1049 = vmul.f32 %v1041, %v1046
    %v1051 = vlaneseq
    %v1052 = vshrl.u32 %v1051, 7
    %v1053 = vsub.s32 0, %v1052
    %v1054 = vrot.slane %v1019, %v1053
    %v1056 = vadd.f32 %v1048, %v1054
    %v1057 = vadd.f32 %v1049, %v1054
    %v1058 = vld [vmem:[%s15] sm:$0xff]
    %v1059 = vld [vmem:[%s15 + $0x8] sm:$0xff]
    %v1060 = vld [vmem:[%s15 + $0x10] sm:$0xff]
    %v1061 = vld [vmem:[%s15 + $0x18] sm:$0xff]
    %v1062 = vld [vmem:[%s15 + $0x20] sm:$0xff]
    %v1063 = vld [vmem:[%s15 + $0x28] sm:$0xff]
    %v1064 = vld [vmem:[%s15 + $0x30] sm:$0xff]
    %v1065 = vld [vmem:[%s15 + $0x38] sm:$0xff]
    %v1066 = vld [vmem:[%s15 + $0x40] sm:$0xff]
    %v1067 = vld [vmem:[%s15 + $0x48] sm:$0xff]
    %v1068 = vld [vmem:[%s15 + $0x50] sm:$0xff]
    %v1069 = vld [vmem:[%s15 + $0x58] sm:$0xff]
    %v1070 = vld [vmem:[%s15 + $0x60] sm:$0xff]
    %v1071 = vld [vmem:[%s15 + $0x68] sm:$0xff]
    %v1072 = vld [vmem:[%s15 + $0x70] sm:$0xff]
    %v1073 = vld [vmem:[%s15 + $0x78] sm:$0xff]
    %v1074 = vld [vmem:[#allocation16] sm:$0x1]
    %v1076 = vlaneseq
    %v1077 = vshrl.u32 %v1076, 7
    %v1078 = vsub.s32 0, %v1077
    %v1079 = vrot.slane %v1074, %v1078
    %1081 = vmatprep.subr.mxu0 0.0
    %1082 = vmatpush1.msra.mxu0 %v1058
    %1083 = vmatprep.subr.mxu0 0.0
    %1084 = vmatpush1.msra.mxu0 %v1059
    %1085 = vmatprep.subr.mxu0 0.0
    %1086 = vmatpush1.msra.mxu0 %v1060
    %1087 = vmatprep.subr.mxu0 0.0
    %1088 = vmatpush1.msra.mxu0 %v1061
    %1089 = vmatprep.subr.mxu0 0.0
    %1090 = vmatpush1.msra.mxu0 %v1062
    %1091 = vmatprep.subr.mxu0 0.0
    %1092 = vmatpush1.msra.mxu0 %v1063
    %1093 = vmatprep.subr.mxu0 0.0
    %1094 = vmatpush1.msra.mxu0 %v1064
    %1095 = vmatprep.subr.mxu0 0.0
    %1096 = vmatpush1.msra.mxu0 %v1065
    %1097 = vmatprep.subr.mxu0 0.0
    %1098 = vmatpush1.msra.mxu0 %v1066
    %1099 = vmatprep.subr.mxu0 0.0
    %1100 = vmatpush1.msra.mxu0 %v1067
    %1101 = vmatprep.subr.mxu0 0.0
    %1102 = vmatpush1.msra.mxu0 %v1068
    %1103 = vmatprep.subr.mxu0 0.0
    %1104 = vmatpush1.msra.mxu0 %v1069
    %1105 = vmatprep.subr.mxu0 0.0
    %1106 = vmatpush1.msra.mxu0 %v1070
    %1107 = vmatprep.subr.mxu0 0.0
    %1108 = vmatpush1.msra.mxu0 %v1071
    %1109 = vmatprep.subr.mxu0 0.0
    %1110 = vmatpush1.msra.mxu0 %v1072
    %1111 = vmatprep.subr.mxu0 0.0
    %1112 = vmatpush1.msra.mxu0 %v1073
    %1113 = vmatprep.subr.mxu0 0.0
    %1114 = vmatpush1.msra.mxu0 0.0
    %1115 = vmatprep.subr.mxu0 0.0
    %1116 = vmatpush1.msra.mxu0 0.0
    %1117 = vmatprep.subr.mxu0 0.0
    %1118 = vmatpush1.msra.mxu0 0.0
    %1119 = vmatprep.subr.mxu0 0.0
    %1120 = vmatpush1.msra.mxu0 0.0
    %1121 = vmatprep.subr.mxu0 0.0
    %1122 = vmatpush1.msra.mxu0 0.0
    %1123 = vmatprep.subr.mxu0 0.0
    %1124 = vmatpush1.msra.mxu0 0.0
    %1125 = vmatprep.subr.mxu0 0.0
    %1126 = vmatpush1.msra.mxu0 0.0
    %1127 = vmatprep.subr.mxu0 0.0
    %1128 = vmatpush1.msra.mxu0 0.0
    %1129 = vmatprep.subr.mxu0 0.0
    %1130 = vmatpush1.msra.mxu0 0.0
    %1131 = vmatprep.subr.mxu0 0.0
    %1132 = vmatpush1.msra.mxu0 0.0
    %1133 = vmatprep.subr.mxu0 0.0
    %1134 = vmatpush1.msra.mxu0 0.0
    %1135 = vmatprep.subr.mxu0 0.0
    %1136 = vmatpush1.msra.mxu0 0.0
    %1137 = vmatprep.subr.mxu0 0.0
    %1138 = vmatpush1.msra.mxu0 0.0
    %1139 = vmatprep.subr.mxu0 0.0
    %1140 = vmatpush1.msra.mxu0 0.0
    %1141 = vmatprep.subr.mxu0 0.0
    %1142 = vmatpush1.msra.mxu0 0.0
    %1143 = vmatprep.subr.mxu0 0.0
    %1144 = vmatpush1.msra.mxu0 0.0
    %1145 = vmatprep.mubr.f32.mxu0 0.0
    %1146 = vmatmul.mubr.f32.gmra.mrb[0].mxu0 %v1056
    %v1147 = vpop.f32.mrb[0].mxu0
    %v1148 = vadd.f32 %v1079, %v1147
    %v1149 = vpop.f32.mrb[0].mxu0
    %1150 = vmatprep.mubr.f32.mxu0 0.0
    %1151 = vmatmul.mubr.f32.gmra.mrb[0].mxu0 %v1057
    %v1152 = vpop.f32.mrb[0].mxu0
    %v1153 = vadd.f32 %v1079, %v1152
    %v1154 = vpop.f32.mrb[0].mxu0
    %1155 = vdwg.mxu0
    %vm1156 = vcmask 785408
    %1157 = vst.msk [vmem:[#allocation2] sm:$0xff] %vm1156, %v1148
    %1158 = vst.msk [vmem:[#allocation2 + $0x8] sm:$0xff] %vm1156, %v1153
    %v1159 = vld [vmem:[%s17] sm:$0xff]
    %v1160 = vld [vmem:[%s17 + $0x8] sm:$0xff]
    %v1161 = vld [vmem:[%s17 + $0x10] sm:$0xff]
    %v1162 = vld [vmem:[%s17 + $0x18] sm:$0xff]
    %v1163 = vld [vmem:[%s17 + $0x20] sm:$0xff]
    %v1164 = vld [vmem:[%s17 + $0x28] sm:$0xff]
    %v1165 = vld [vmem:[%s17 + $0x30] sm:$0xff]
    %v1166 = vld [vmem:[%s17 + $0x38] sm:$0xff]
    %v1167 = vld [vmem:[%s17 + $0x40] sm:$0xff]
    %v1168 = vld [vmem:[%s17 + $0x48] sm:$0xff]
    %v1169 = vld [vmem:[%s17 + $0x50] sm:$0xff]
    %v1170 = vld [vmem:[%s17 + $0x58] sm:$0xff]
    %v1171 = vld [vmem:[%s17 + $0x60] sm:$0xff]
    %v1172 = vld [vmem:[%s17 + $0x68] sm:$0xff]
    %v1173 = vld [vmem:[%s17 + $0x70] sm:$0xff]
    %v1174 = vld [vmem:[%s17 + $0x78] sm:$0xff]
    %v1175 = vld [vmem:[#allocation18] sm:$0x3]
    %v1176 = vld [vmem:[#allocation2] sm:$0x1]
    %v1177 = vadd.f32 %v1176, %v1175
    %v1178 = vxor.u32 %v1177, 2147483648
    %v1179 = vmul.f32 %v1178, 1.442695
    %v1180 = vpow.pop %v1179
    %v1181 = vadd.f32 %v1180, 1.0
    %v1182 = vrcp.pop %v1181
    %v1183 = vmul.f32 1.0, %v1182
    %v1185 = vlaneseq
    %v1186 = vshrl.u32 %v1185, 7
    %v1187 = vsub.s32 0, %v1186
    %v1188 = vrot.slane %v1175, %v1187
    %1189 = vrot.lane.b32.xlu0 %v1188, 64
    %v1190 = vpop.permute.xlu0 %1189
    %v1192 = vmul.f32 %v1183, %v1190
    %1194 = vrot.lane.b32.xlu0 %v1192, 64
    %v1195 = vpop.permute.xlu0 %1194
    %v1197 = vadd.f32 %v1176, %v1195
    %v1198 = vtanh.pop %v1197
    %v1199 = vsub.f32 1.0, %v1183
    %1201 = vrot.lane.b32.xlu0 %v1198, 96
    %v1202 = vpop.permute.xlu0 %1201
    %v1204 = vmul.f32 %v1199, %v1202
    %v1205 = vmul.f32 %v1183, 0.0
    %v1206 = vadd.f32 %v1204, %v1205
    %1208 = vrot.lane.b32.xlu0 %v1206, 96
    %v1209 = vpop.permute.xlu0 %1208
    %vm1211 = vcmask 261120
    %v1212 = vsel %vm1211, %v1209, 0.0
    %v1213 = vlaneseq
    %v1214 = vshrl.u32 %v1213, 7
    %v1215 = vsub.s32 1, %v1214
    %v1216 = vrot.slane %v1175, %v1215
    %vm1219 = vcmask 523264
    %v1221 = vsel %vm1219, %v1212, 0
    %1223 = vmatprep.subr.mxu0 %v1160
    %1224 = vmatpush1.msra.mxu0 %v1159
    %1225 = vmatprep.subr.mxu0 %v1162
    %1226 = vmatpush1.msra.mxu0 %v1161
    %1227 = vmatprep.subr.mxu0 %v1164
    %1228 = vmatpush1.msra.mxu0 %v1163
    %1229 = vmatprep.subr.mxu0 %v1166
    %1230 = vmatpush1.msra.mxu0 %v1165
    %1231 = vmatprep.subr.mxu0 %v1168
    %1232 = vmatpush1.msra.mxu0 %v1167
    %1233 = vmatprep.subr.mxu0 %v1170
    %1234 = vmatpush1.msra.mxu0 %v1169
    %1235 = vmatprep.subr.mxu0 %v1172
    %1236 = vmatpush1.msra.mxu0 %v1171
    %1237 = vmatprep.subr.mxu0 %v1174
    %1238 = vmatpush1.msra.mxu0 %v1173
    %1239 = vmatprep.subr.mxu0 0.0
    %1240 = vmatpush1.msra.mxu0 0.0
    %1241 = vmatprep.subr.mxu0 0.0
    %1242 = vmatpush1.msra.mxu0 0.0
    %1243 = vmatprep.subr.mxu0 0.0
    %1244 = vmatpush1.msra.mxu0 0.0
    %1245 = vmatprep.subr.mxu0 0.0
    %1246 = vmatpush1.msra.mxu0 0.0
    %1247 = vmatprep.subr.mxu0 0.0
    %1248 = vmatpush1.msra.mxu0 0.0
    %1249 = vmatprep.subr.mxu0 0.0
    %1250 = vmatpush1.msra.mxu0 0.0
    %1251 = vmatprep.subr.mxu0 0.0
    %1252 = vmatpush1.msra.mxu0 0.0
    %1253 = vmatprep.subr.mxu0 0.0
    %1254 = vmatpush1.msra.mxu0 0.0
    %1255 = vmatprep.subr.mxu0 0.0
    %1256 = vmatpush1.msra.mxu0 0.0
    %1257 = vmatprep.subr.mxu0 0.0
    %1258 = vmatpush1.msra.mxu0 0.0
    %1259 = vmatprep.subr.mxu0 0.0
    %1260 = vmatpush1.msra.mxu0 0.0
    %1261 = vmatprep.subr.mxu0 0.0
    %1262 = vmatpush1.msra.mxu0 0.0
    %1263 = vmatprep.subr.mxu0 0.0
    %1264 = vmatpush1.msra.mxu0 0.0
    %1265 = vmatprep.subr.mxu0 0.0
    %1266 = vmatpush1.msra.mxu0 0.0
    %1267 = vmatprep.subr.mxu0 0.0
    %1268 = vmatpush1.msra.mxu0 0.0
    %1269 = vmatprep.subr.mxu0 0.0
    %1270 = vmatpush1.msra.mxu0 0.0
    %1271 = vmatprep.subr.mxu0 0.0
    %1272 = vmatpush1.msra.mxu0 0.0
    %1273 = vmatprep.subr.mxu0 0.0
    %1274 = vmatpush1.msra.mxu0 0.0
    %1275 = vmatprep.subr.mxu0 0.0
    %1276 = vmatpush1.msra.mxu0 0.0
    %1277 = vmatprep.subr.mxu0 0.0
    %1278 = vmatpush1.msra.mxu0 0.0
    %1279 = vmatprep.subr.mxu0 0.0
    %1280 = vmatpush1.msra.mxu0 0.0
    %1281 = vmatprep.subr.mxu0 0.0
    %1282 = vmatpush1.msra.mxu0 0.0
    %1283 = vmatprep.subr.mxu0 0.0
    %1284 = vmatpush1.msra.mxu0 0.0
    %1285 = vmatprep.subr.mxu0 0.0
    %1286 = vmatpush1.msra.mxu0 0.0
    %1287 = vmatprep.mubr.f32.mxu0 0.0
    %1288 = vmatmul.mubr.f32.gmra.mrb[0].mxu0 %v1221
    %v1289 = vpop.f32.mrb[0].mxu0
    %v1290 = vadd.f32 %v1188, %v1289
    %v1291 = vpop.f32.mrb[0].mxu0
    %v1292 = vadd.f32 %v1216, %v1291
    %1293 = vdwg.mxu0
    %v1294 = vld [vmem:[#allocation2 + $0x1] sm:$0x1]
    %v1295 = vadd.f32 %v1294, %v1290
    %v1296 = vxor.u32 %v1295, 2147483648
    %v1297 = vmul.f32 %v1296, 1.442695
    %v1298 = vpow.pop %v1297
    %v1299 = vadd.f32 %v1298, 1.0
    %v1300 = vrcp.pop %v1299
    %v1301 = vmul.f32 1.0, %v1300
    %1303 = vrot.lane.b32.xlu0 %v1290, 64
    %v1304 = vpop.permute.xlu0 %1303
    %v1306 = vmul.f32 %v1301, %v1304
    %1308 = vrot.lane.b32.xlu0 %v1306, 64
    %v1309 = vpop.permute.xlu0 %1308
    %v1311 = vadd.f32 %v1294, %v1309
    %v1312 = vtanh.pop %v1311
    %v1313 = vsub.f32 1.0, %v1301
    %1315 = vrot.lane.b32.xlu0 %v1312, 96
    %v1316 = vpop.permute.xlu0 %1315
    %v1318 = vmul.f32 %v1313, %v1316
    %v1319 = vmul.f32 %v1301, %v1206
    %v1320 = vadd.f32 %v1318, %v1319
    %v1321 = vxor.u32 %v1290, 2147483648
    %v1322 = vmul.f32 %v1321, 1.442695
    %v1323 = vpow.pop %v1322
    %v1324 = vadd.f32 %v1323, 1.0
    %v1325 = vrcp.pop %v1324
    %v1326 = vmul.f32 1.0, %v1325
    %v1327 = vxor.u32 %v1292, 2147483648
    %v1328 = vmul.f32 %v1327, 1.442695
    %v1329 = vpow.pop %v1328
    %v1330 = vadd.f32 %v1329, 1.0
    %v1331 = vrcp.pop %v1330
    %v1332 = vmul.f32 1.0, %v1331
    %1334 = vrot.lane.b32.xlu0 %v1292, 32
    %v1335 = vpop.permute.xlu0 %1334
    %v1337 = vmul.f32 %v1326, %v1335
    %1339 = vrot.lane.b32.xlu0 %v1337, 64
    %v1340 = vpop.permute.xlu0 %1339
    %v1342 = vadd.f32 %v1292, %v1340
    %v1343 = vtanh.pop %v1342
    %v1344 = vsub.f32 1.0, %v1332
    %1346 = vrot.lane.b32.xlu0 %v1343, 96
    %v1347 = vpop.permute.xlu0 %1346
    %v1349 = vmul.f32 %v1344, %v1347
    %v1350 = vmul.f32 %v1332, 0.0
    %v1351 = vadd.f32 %v1349, %v1350
    %vm1352 = vcmask 253952
    %1353 = vst.msk [vmem:[#allocation3] sm:$0x1] %vm1352, %v1351
    %1355 = vrot.lane.b32.xlu0 %v1320, 96
    %v1356 = vpop.permute.xlu0 %1355
    %1359 = vrot.lane.b32.xlu0 %v1351, 32
    %v1360 = vpop.permute.xlu0 %1359
    %v1362 = vsel %vm1211, %v1356, %v1360
    %v1364 = vsel %vm1219, %v1362, 0
    %1366 = vmatprep.subr.mxu0 %v1160
    %1367 = vmatpush1.msra.mxu0 %v1159
    %1368 = vmatprep.subr.mxu0 %v1162
    %1369 = vmatpush1.msra.mxu0 %v1161
    %1370 = vmatprep.subr.mxu0 %v1164
    %1371 = vmatpush1.msra.mxu0 %v1163
    %1372 = vmatprep.subr.mxu0 %v1166
    %1373 = vmatpush1.msra.mxu0 %v1165
    %1374 = vmatprep.subr.mxu0 %v1168
    %1375 = vmatpush1.msra.mxu0 %v1167
    %1376 = vmatprep.subr.mxu0 %v1170
    %1377 = vmatpush1.msra.mxu0 %v1169
    %1378 = vmatprep.subr.mxu0 %v1172
    %1379 = vmatpush1.msra.mxu0 %v1171
    %1380 = vmatprep.subr.mxu0 %v1174
    %1381 = vmatpush1.msra.mxu0 %v1173
    %1382 = vmatprep.subr.mxu0 0.0
    %1383 = vmatpush1.msra.mxu0 0.0
    %1384 = vmatprep.subr.mxu0 0.0
    %1385 = vmatpush1.msra.mxu0 0.0
    %1386 = vmatprep.subr.mxu0 0.0
    %1387 = vmatpush1.msra.mxu0 0.0
    %1388 = vmatprep.subr.mxu0 0.0
    %1389 = vmatpush1.msra.mxu0 0.0
    %1390 = vmatprep.subr.mxu0 0.0
    %1391 = vmatpush1.msra.mxu0 0.0
    %1392 = vmatprep.subr.mxu0 0.0
    %1393 = vmatpush1.msra.mxu0 0.0
    %1394 = vmatprep.subr.mxu0 0.0
    %1395 = vmatpush1.msra.mxu0 0.0
    %1396 = vmatprep.subr.mxu0 0.0
    %1397 = vmatpush1.msra.mxu0 0.0
    %1398 = vmatprep.subr.mxu0 0.0
    %1399 = vmatpush1.msra.mxu0 0.0
    %1400 = vmatprep.subr.mxu0 0.0
    %1401 = vmatpush1.msra.mxu0 0.0
    %1402 = vmatprep.subr.mxu0 0.0
    %1403 = vmatpush1.msra.mxu0 0.0
    %1404 = vmatprep.subr.mxu0 0.0
    %1405 = vmatpush1.msra.mxu0 0.0
    %1406 = vmatprep.subr.mxu0 0.0
    %1407 = vmatpush1.msra.mxu0 0.0
    %1408 = vmatprep.subr.mxu0 0.0
    %1409 = vmatpush1.msra.mxu0 0.0
    %1410 = vmatprep.subr.mxu0 0.0
    %1411 = vmatpush1.msra.mxu0 0.0
    %1412 = vmatprep.subr.mxu0 0.0
    %1413 = vmatpush1.msra.mxu0 0.0
    %1414 = vmatprep.subr.mxu0 0.0
    %1415 = vmatpush1.msra.mxu0 0.0
    %1416 = vmatprep.subr.mxu0 0.0
    %1417 = vmatpush1.msra.mxu0 0.0
    %1418 = vmatprep.subr.mxu0 0.0
    %1419 = vmatpush1.msra.mxu0 0.0
    %1420 = vmatprep.subr.mxu0 0.0
    %1421 = vmatpush1.msra.mxu0 0.0
    %1422 = vmatprep.subr.mxu0 0.0
    %1423 = vmatpush1.msra.mxu0 0.0
    %1424 = vmatprep.subr.mxu0 0.0
    %1425 = vmatpush1.msra.mxu0 0.0
    %1426 = vmatprep.subr.mxu0 0.0
    %1427 = vmatpush1.msra.mxu0 0.0
    %1428 = vmatprep.subr.mxu0 0.0
    %1429 = vmatpush1.msra.mxu0 0.0
    %1430 = vmatprep.mubr.f32.mxu0 0.0
    %1431 = vmatmul.mubr.f32.gmra.mrb[0].mxu0 %v1364
    %v1432 = vpop.f32.mrb[0].mxu0
    %v1433 = vadd.f32 %v1188, %v1432
    %v1434 = vpop.f32.mrb[0].mxu0
    %v1435 = vadd.f32 %v1216, %v1434
    %1436 = vdwg.mxu0
    %v1437 = vld [vmem:[#allocation2 + $0x2] sm:$0x1]
    %v1438 = vadd.f32 %v1437, %v1433
    %v1439 = vxor.u32 %v1438, 2147483648
    %v1440 = vmul.f32 %v1439, 1.442695
    %v1441 = vpow.pop %v1440
    %v1442 = vadd.f32 %v1441, 1.0
    %v1443 = vrcp.pop %v1442
    %v1444 = vmul.f32 1.0, %v1443
    %1446 = vrot.lane.b32.xlu0 %v1433, 64
    %v1447 = vpop.permute.xlu0 %1446
    %v1449 = vmul.f32 %v1444, %v1447
    %1451 = vrot.lane.b32.xlu0 %v1449, 64
    %v1452 = vpop.permute.xlu0 %1451
    %v1454 = vadd.f32 %v1437, %v1452
    %v1455 = vtanh.pop %v1454
    %v1456 = vsub.f32 1.0, %v1444
    %1458 = vrot.lane.b32.xlu0 %v1455, 96
    %v1459 = vpop.permute.xlu0 %1458
    %v1461 = vmul.f32 %v1456, %v1459
    %v1462 = vmul.f32 %v1444, %v1320
    %v1463 = vadd.f32 %v1461, %v1462
    %v1464 = vxor.u32 %v1433, 2147483648
    %v1465 = vmul.f32 %v1464, 1.442695
    %v1466 = vpow.pop %v1465
    %v1467 = vadd.f32 %v1466, 1.0
    %v1468 = vrcp.pop %v1467
    %v1469 = vmul.f32 1.0, %v1468
    %v1470 = vxor.u32 %v1435, 2147483648
    %v1471 = vmul.f32 %v1470, 1.442695
    %v1472 = vpow.pop %v1471
    %v1473 = vadd.f32 %v1472, 1.0
    %v1474 = vrcp.pop %v1473
    %v1475 = vmul.f32 1.0, %v1474
    %1477 = vrot.lane.b32.xlu0 %v1435, 32
    %v1478 = vpop.permute.xlu0 %1477
    %v1480 = vmul.f32 %v1469, %v1478
    %1482 = vrot.lane.b32.xlu0 %v1480, 64
    %v1483 = vpop.permute.xlu0 %1482
    %v1485 = vadd.f32 %v1435, %v1483
    %v1486 = vtanh.pop %v1485
    %v1487 = vsub.f32 1.0, %v1475
    %1489 = vrot.lane.b32.xlu0 %v1486, 96
    %v1490 = vpop.permute.xlu0 %1489
    %v1492 = vmul.f32 %v1487, %v1490
    %v1493 = vmul.f32 %v1475, %v1351
    %v1494 = vadd.f32 %v1492, %v1493
    %1495 = vst.msk [vmem:[#allocation3 + $0x1] sm:$0x1] %vm1352, %v1494
    %1497 = vrot.lane.b32.xlu0 %v1463, 96
    %v1498 = vpop.permute.xlu0 %1497
    %1501 = vrot.lane.b32.xlu0 %v1494, 32
    %v1502 = vpop.permute.xlu0 %1501
    %v1504 = vsel %vm1211, %v1498, %v1502
    %v1506 = vsel %vm1219, %v1504, 0
    %1508 = vmatprep.subr.mxu0 %v1160
    %1509 = vmatpush1.msra.mxu0 %v1159
    %1510 = vmatprep.subr.mxu0 %v1162
    %1511 = vmatpush1.msra.mxu0 %v1161
    %1512 = vmatprep.subr.mxu0 %v1164
    %1513 = vmatpush1.msra.mxu0 %v1163
    %1514 = vmatprep.subr.mxu0 %v1166
    %1515 = vmatpush1.msra.mxu0 %v1165
    %1516 = vmatprep.subr.mxu0 %v1168
    %1517 = vmatpush1.msra.mxu0 %v1167
    %1518 = vmatprep.subr.mxu0 %v1170
    %1519 = vmatpush1.msra.mxu0 %v1169
    %1520 = vmatprep.subr.mxu0 %v1172
    %1521 = vmatpush1.msra.mxu0 %v1171
    %1522 = vmatprep.subr.mxu0 %v1174
    %1523 = vmatpush1.msra.mxu0 %v1173
    %1524 = vmatprep.subr.mxu0 0.0
    %1525 = vmatpush1.msra.mxu0 0.0
    %1526 = vmatprep.subr.mxu0 0.0
    %1527 = vmatpush1.msra.mxu0 0.0
    %1528 = vmatprep.subr.mxu0 0.0
    %1529 = vmatpush1.msra.mxu0 0.0
    %1530 = vmatprep.subr.mxu0 0.0
    %1531 = vmatpush1.msra.mxu0 0.0
    %1532 = vmatprep.subr.mxu0 0.0
    %1533 = vmatpush1.msra.mxu0 0.0
    %1534 = vmatprep.subr.mxu0 0.0
    %1535 = vmatpush1.msra.mxu0 0.0
    %1536 = vmatprep.subr.mxu0 0.0
    %1537 = vmatpush1.msra.mxu0 0.0
    %1538 = vmatprep.subr.mxu0 0.0
    %1539 = vmatpush1.msra.mxu0 0.0
    %1540 = vmatprep.subr.mxu0 0.0
    %1541 = vmatpush1.msra.mxu0 0.0
    %1542 = vmatprep.subr.mxu0 0.0
    %1543 = vmatpush1.msra.mxu0 0.0
    %1544 = vmatprep.subr.mxu0 0.0
    %1545 = vmatpush1.msra.mxu0 0.0
    %1546 = vmatprep.subr.mxu0 0.0
    %1547 = vmatpush1.msra.mxu0 0.0
    %1548 = vmatprep.subr.mxu0 0.0
    %1549 = vmatpush1.msra.mxu0 0.0
    %1550 = vmatprep.subr.mxu0 0.0
    %1551 = vmatpush1.msra.mxu0 0.0
    %1552 = vmatprep.subr.mxu0 0.0
    %1553 = vmatpush1.msra.mxu0 0.0
    %1554 = vmatprep.subr.mxu0 0.0
    %1555 = vmatpush1.msra.mxu0 0.0
    %1556 = vmatprep.subr.mxu0 0.0
    %1557 = vmatpush1.msra.mxu0 0.0
    %1558 = vmatprep.subr.mxu0 0.0
    %1559 = vmatpush1.msra.mxu0 0.0
    %1560 = vmatprep.subr.mxu0 0.0
    %1561 = vmatpush1.msra.mxu0 0.0
    %1562 = vmatprep.subr.mxu0 0.0
    %1563 = vmatpush1.msra.mxu0 0.0
    %1564 = vmatprep.subr.mxu0 0.0
    %1565 = vmatpush1.msra.mxu0 0.0
    %1566 = vmatprep.subr.mxu0 0.0
    %1567 = vmatpush1.msra.mxu0 0.0
    %1568 = vmatprep.subr.mxu0 0.0
    %1569 = vmatpush1.msra.mxu0 0.0
    %1570 = vmatprep.subr.mxu0 0.0
    %1571 = vmatpush1.msra.mxu0 0.0
    %1572 = vmatprep.mubr.f32.mxu0 0.0
    %1573 = vmatmul.mubr.f32.gmra.mrb[0].mxu0 %v1506
    %v1574 = vpop.f32.mrb[0].mxu0
    %v1575 = vadd.f32 %v1188, %v1574
    %v1576 = vpop.f32.mrb[0].mxu0
    %v1577 = vadd.f32 %v1216, %v1576
    %1578 = vdwg.mxu0
    %v1579 = vld [vmem:[#allocation2 + $0x3] sm:$0x1]
    %v1580 = vadd.f32 %v1579, %v1575
    %v1581 = vxor.u32 %v1580, 2147483648
    %v1582 = vmul.f32 %v1581, 1.442695
    %v1583 = vpow.pop %v1582
    %v1584 = vadd.f32 %v1583, 1.0
    %v1585 = vrcp.pop %v1584
    %v1586 = vmul.f32 1.0, %v1585
    %1588 = vrot.lane.b32.xlu0 %v1575, 64
    %v1589 = vpop.permute.xlu0 %1588
    %v1591 = vmul.f32 %v1586, %v1589
    %1593 = vrot.lane.b32.xlu0 %v1591, 64
    %v1594 = vpop.permute.xlu0 %1593
    %v1596 = vadd.f32 %v1579, %v1594
    %v1597 = vtanh.pop %v1596
    %v1598 = vsub.f32 1.0, %v1586
    %1600 = vrot.lane.b32.xlu0 %v1597, 96
    %v1601 = vpop.permute.xlu0 %1600
    %v1603 = vmul.f32 %v1598, %v1601
    %v1604 = vmul.f32 %v1586, %v1463
    %v1605 = vadd.f32 %v1603, %v1604
    %v1606 = vxor.u32 %v1575, 2147483648
    %v1607 = vmul.f32 %v1606, 1.442695
    %v1608 = vpow.pop %v1607
    %v1609 = vadd.f32 %v1608, 1.0
    %v1610 = vrcp.pop %v1609
    %v1611 = vmul.f32 1.0, %v1610
    %v1612 = vxor.u32 %v1577, 2147483648
    %v1613 = vmul.f32 %v1612, 1.442695
    %v1614 = vpow.pop %v1613
    %v1615 = vadd.f32 %v1614, 1.0
    %v1616 = vrcp.pop %v1615
    %v1617 = vmul.f32 1.0, %v1616
    %1619 = vrot.lane.b32.xlu0 %v1577, 32
    %v1620 = vpop.permute.xlu0 %1619
    %v1622 = vmul.f32 %v1611, %v1620
    %1624 = vrot.lane.b32.xlu0 %v1622, 64
    %v1625 = vpop.permute.xlu0 %1624
    %v1627 = vadd.f32 %v1577, %v1625
    %v1628 = vtanh.pop %v1627
    %v1629 = vsub.f32 1.0, %v1617
    %1631 = vrot.lane.b32.xlu0 %v1628, 96
    %v1632 = vpop.permute.xlu0 %1631
    %v1634 = vmul.f32 %v1629, %v1632
    %v1635 = vmul.f32 %v1617, %v1494
    %v1636 = vadd.f32 %v1634, %v1635
    %1637 = vst.msk [vmem:[#allocation3 + $0x2] sm:$0x1] %vm1352, %v1636
    %1639 = vrot.lane.b32.xlu0 %v1605, 96
    %v1640 = vpop.permute.xlu0 %1639
    %1643 = vrot.lane.b32.xlu0 %v1636, 32
    %v1644 = vpop.permute.xlu0 %1643
    %v1646 = vsel %vm1211, %v1640, %v1644
    %v1648 = vsel %vm1219, %v1646, 0
    %1650 = vmatprep.subr.mxu0 %v1160
    %1651 = vmatpush1.msra.mxu0 %v1159
    %1652 = vmatprep.subr.mxu0 %v1162
    %1653 = vmatpush1.msra.mxu0 %v1161
    %1654 = vmatprep.subr.mxu0 %v1164
    %1655 = vmatpush1.msra.mxu0 %v1163
    %1656 = vmatprep.subr.mxu0 %v1166
    %1657 = vmatpush1.msra.mxu0 %v1165
    %1658 = vmatprep.subr.mxu0 %v1168
    %1659 = vmatpush1.msra.mxu0 %v1167
    %1660 = vmatprep.subr.mxu0 %v1170
    %1661 = vmatpush1.msra.mxu0 %v1169
    %1662 = vmatprep.subr.mxu0 %v1172
    %1663 = vmatpush1.msra.mxu0 %v1171
    %1664 = vmatprep.subr.mxu0 %v1174
    %1665 = vmatpush1.msra.mxu0 %v1173
    %1666 = vmatprep.subr.mxu0 0.0
    %1667 = vmatpush1.msra.mxu0 0.0
    %1668 = vmatprep.subr.mxu0 0.0
    %1669 = vmatpush1.msra.mxu0 0.0
    %1670 = vmatprep.subr.mxu0 0.0
    %1671 = vmatpush1.msra.mxu0 0.0
    %1672 = vmatprep.subr.mxu0 0.0
    %1673 = vmatpush1.msra.mxu0 0.0
    %1674 = vmatprep.subr.mxu0 0.0
    %1675 = vmatpush1.msra.mxu0 0.0
    %1676 = vmatprep.subr.mxu0 0.0
    %1677 = vmatpush1.msra.mxu0 0.0
    %1678 = vmatprep.subr.mxu0 0.0
    %1679 = vmatpush1.msra.mxu0 0.0
    %1680 = vmatprep.subr.mxu0 0.0
    %1681 = vmatpush1.msra.mxu0 0.0
    %1682 = vmatprep.subr.mxu0 0.0
    %1683 = vmatpush1.msra.mxu0 0.0
    %1684 = vmatprep.subr.mxu0 0.0
    %1685 = vmatpush1.msra.mxu0 0.0
    %1686 = vmatprep.subr.mxu0 0.0
    %1687 = vmatpush1.msra.mxu0 0.0
    %1688 = vmatprep.subr.mxu0 0.0
    %1689 = vmatpush1.msra.mxu0 0.0
    %1690 = vmatprep.subr.mxu0 0.0
    %1691 = vmatpush1.msra.mxu0 0.0
    %1692 = vmatprep.subr.mxu0 0.0
    %1693 = vmatpush1.msra.mxu0 0.0
    %1694 = vmatprep.subr.mxu0 0.0
    %1695 = vmatpush1.msra.mxu0 0.0
    %1696 = vmatprep.subr.mxu0 0.0
    %1697 = vmatpush1.msra.mxu0 0.0
    %1698 = vmatprep.subr.mxu0 0.0
    %1699 = vmatpush1.msra.mxu0 0.0
    %1700 = vmatprep.subr.mxu0 0.0
    %1701 = vmatpush1.msra.mxu0 0.0
    %1702 = vmatprep.subr.mxu0 0.0
    %1703 = vmatpush1.msra.mxu0 0.0
    %1704 = vmatprep.subr.mxu0 0.0
    %1705 = vmatpush1.msra.mxu0 0.0
    %1706 = vmatprep.subr.mxu0 0.0
    %1707 = vmatpush1.msra.mxu0 0.0
    %1708 = vmatprep.subr.mxu0 0.0
    %1709 = vmatpush1.msra.mxu0 0.0
    %1710 = vmatprep.subr.mxu0 0.0
    %1711 = vmatpush1.msra.mxu0 0.0
    %1712 = vmatprep.subr.mxu0 0.0
    %1713 = vmatpush1.msra.mxu0 0.0
    %1714 = vmatprep.mubr.f32.mxu0 0.0
    %1715 = vmatmul.mubr.f32.gmra.mrb[0].mxu0 %v1648
    %v1716 = vpop.f32.mrb[0].mxu0
    %v1717 = vadd.f32 %v1188, %v1716
    %v1718 = vpop.f32.mrb[0].mxu0
    %v1719 = vadd.f32 %v1216, %v1718
    %1720 = vdwg.mxu0
    %v1721 = vld [vmem:[#allocation2 + $0x4] sm:$0x1]
    %v1722 = vadd.f32 %v1721, %v1717
    %v1723 = vxor.u32 %v1722, 2147483648
    %v1724 = vmul.f32 %v1723, 1.442695
    %v1725 = vpow.pop %v1724
    %v1726 = vadd.f32 %v1725, 1.0
    %v1727 = vrcp.pop %v1726
    %v1728 = vmul.f32 1.0, %v1727
    %1730 = vrot.lane.b32.xlu0 %v1717, 64
    %v1731 = vpop.permute.xlu0 %1730
    %v1733 = vmul.f32 %v1728, %v1731
    %1735 = vrot.lane.b32.xlu0 %v1733, 64
    %v1736 = vpop.permute.xlu0 %1735
    %v1738 = vadd.f32 %v1721, %v1736
    %v1739 = vtanh.pop %v1738
    %v1740 = vsub.f32 1.0, %v1728
    %1742 = vrot.lane.b32.xlu0 %v1739, 96
    %v1743 = vpop.permute.xlu0 %1742
    %v1745 = vmul.f32 %v1740, %v1743
    %v1746 = vmul.f32 %v1728, %v1605
    %v1747 = vadd.f32 %v1745, %v1746
    %v1748 = vxor.u32 %v1717, 2147483648
    %v1749 = vmul.f32 %v1748, 1.442695
    %v1750 = vpow.pop %v1749
    %v1751 = vadd.f32 %v1750, 1.0
    %v1752 = vrcp.pop %v1751
    %v1753 = vmul.f32 1.0, %v1752
    %v1754 = vxor.u32 %v1719, 2147483648
    %v1755 = vmul.f32 %v1754, 1.442695
    %v1756 = vpow.pop %v1755
    %v1757 = vadd.f32 %v1756, 1.0
    %v1758 = vrcp.pop %v1757
    %v1759 = vmul.f32 1.0, %v1758
    %1761 = vrot.lane.b32.xlu0 %v1719, 32
    %v1762 = vpop.permute.xlu0 %1761
    %v1764 = vmul.f32 %v1753, %v1762
    %1766 = vrot.lane.b32.xlu0 %v1764, 64
    %v1767 = vpop.permute.xlu0 %1766
    %v1769 = vadd.f32 %v1719, %v1767
    %v1770 = vtanh.pop %v1769
    %v1771 = vsub.f32 1.0, %v1759
    %1773 = vrot.lane.b32.xlu0 %v1770, 96
    %v1774 = vpop.permute.xlu0 %1773
    %v1776 = vmul.f32 %v1771, %v1774
    %v1777 = vmul.f32 %v1759, %v1636
    %v1778 = vadd.f32 %v1776, %v1777
    %1779 = vst.msk [vmem:[#allocation3 + $0x3] sm:$0x1] %vm1352, %v1778
    %1781 = vrot.lane.b32.xlu0 %v1747, 96
    %v1782 = vpop.permute.xlu0 %1781
    %1785 = vrot.lane.b32.xlu0 %v1778, 32
    %v1786 = vpop.permute.xlu0 %1785
    %v1788 = vsel %vm1211, %v1782, %v1786
    %v1790 = vsel %vm1219, %v1788, 0
    %1792 = vmatprep.subr.mxu0 %v1160
    %1793 = vmatpush1.msra.mxu0 %v1159
    %1794 = vmatprep.subr.mxu0 %v1162
    %1795 = vmatpush1.msra.mxu0 %v1161
    %1796 = vmatprep.subr.mxu0 %v1164
    %1797 = vmatpush1.msra.mxu0 %v1163
    %1798 = vmatprep.subr.mxu0 %v1166
    %1799 = vmatpush1.msra.mxu0 %v1165
    %1800 = vmatprep.subr.mxu0 %v1168
    %1801 = vmatpush1.msra.mxu0 %v1167
    %1802 = vmatprep.subr.mxu0 %v1170
    %1803 = vmatpush1.msra.mxu0 %v1169
    %1804 = vmatprep.subr.mxu0 %v1172
    %1805 = vmatpush1.msra.mxu0 %v1171
    %1806 = vmatprep.subr.mxu0 %v1174
    %1807 = vmatpush1.msra.mxu0 %v1173
    %1808 = vmatprep.subr.mxu0 0.0
    %1809 = vmatpush1.msra.mxu0 0.0
    %1810 = vmatprep.subr.mxu0 0.0
    %1811 = vmatpush1.msra.mxu0 0.0
    %1812 = vmatprep.subr.mxu0 0.0
    %1813 = vmatpush1.msra.mxu0 0.0
    %1814 = vmatprep.subr.mxu0 0.0
    %1815 = vmatpush1.msra.mxu0 0.0
    %1816 = vmatprep.subr.mxu0 0.0
    %1817 = vmatpush1.msra.mxu0 0.0
    %1818 = vmatprep.subr.mxu0 0.0
    %1819 = vmatpush1.msra.mxu0 0.0
    %1820 = vmatprep.subr.mxu0 0.0
    %1821 = vmatpush1.msra.mxu0 0.0
    %1822 = vmatprep.subr.mxu0 0.0
    %1823 = vmatpush1.msra.mxu0 0.0
    %1824 = vmatprep.subr.mxu0 0.0
    %1825 = vmatpush1.msra.mxu0 0.0
    %1826 = vmatprep.subr.mxu0 0.0
    %1827 = vmatpush1.msra.mxu0 0.0
    %1828 = vmatprep.subr.mxu0 0.0
    %1829 = vmatpush1.msra.mxu0 0.0
    %1830 = vmatprep.subr.mxu0 0.0
    %1831 = vmatpush1.msra.mxu0 0.0
    %1832 = vmatprep.subr.mxu0 0.0
    %1833 = vmatpush1.msra.mxu0 0.0
    %1834 = vmatprep.subr.mxu0 0.0
    %1835 = vmatpush1.msra.mxu0 0.0
    %1836 = vmatprep.subr.mxu0 0.0
    %1837 = vmatpush1.msra.mxu0 0.0
    %1838 = vmatprep.subr.mxu0 0.0
    %1839 = vmatpush1.msra.mxu0 0.0
    %1840 = vmatprep.subr.mxu0 0.0
    %1841 = vmatpush1.msra.mxu0 0.0
    %1842 = vmatprep.subr.mxu0 0.0
    %1843 = vmatpush1.msra.mxu0 0.0
    %1844 = vmatprep.subr.mxu0 0.0
    %1845 = vmatpush1.msra.mxu0 0.0
    %1846 = vmatprep.subr.mxu0 0.0
    %1847 = vmatpush1.msra.mxu0 0.0
    %1848 = vmatprep.subr.mxu0 0.0
    %1849 = vmatpush1.msra.mxu0 0.0
    %1850 = vmatprep.subr.mxu0 0.0
    %1851 = vmatpush1.msra.mxu0 0.0
    %1852 = vmatprep.subr.mxu0 0.0
    %1853 = vmatpush1.msra.mxu0 0.0
    %1854 = vmatprep.subr.mxu0 0.0
    %1855 = vmatpush1.msra.mxu0 0.0
    %1856 = vmatprep.mubr.f32.mxu0 0.0
    %1857 = vmatmul.mubr.f32.gmra.mrb[0].mxu0 %v1790
    %v1858 = vpop.f32.mrb[0].mxu0
    %v1859 = vadd.f32 %v1188, %v1858
    %v1860 = vpop.f32.mrb[0].mxu0
    %v1861 = vadd.f32 %v1216, %v1860
    %1862 = vdwg.mxu0
    %v1863 = vld [vmem:[#allocation2 + $0x5] sm:$0x1]
    %v1864 = vadd.f32 %v1863, %v1859
    %v1865 = vxor.u32 %v1864, 2147483648
    %v1866 = vmul.f32 %v1865, 1.442695
    %v1867 = vpow.pop %v1866
    %v1868 = vadd.f32 %v1867, 1.0
    %v1869 = vrcp.pop %v1868
    %v1870 = vmul.f32 1.0, %v1869
    %1872 = vrot.lane.b32.xlu0 %v1859, 64
    %v1873 = vpop.permute.xlu0 %1872
    %v1875 = vmul.f32 %v1870, %v1873
    %1877 = vrot.lane.b32.xlu0 %v1875, 64
    %v1878 = vpop.permute.xlu0 %1877
    %v1880 = vadd.f32 %v1863, %v1878
    %v1881 = vtanh.pop %v1880
    %v1882 = vsub.f32 1.0, %v1870
    %1884 = vrot.lane.b32.xlu0 %v1881, 96
    %v1885 = vpop.permute.xlu0 %1884
    %v1887 = vmul.f32 %v1882, %v1885
    %v1888 = vmul.f32 %v1870, %v1747
    %v1889 = vadd.f32 %v1887, %v1888
    %v1890 = vxor.u32 %v1859, 2147483648
    %v1891 = vmul.f32 %v1890, 1.442695
    %v1892 = vpow.pop %v1891
    %v1893 = vadd.f32 %v1892, 1.0
    %v1894 = vrcp.pop %v1893
    %v1895 = vmul.f32 1.0, %v1894
    %v1896 = vxor.u32 %v1861, 2147483648
    %v1897 = vmul.f32 %v1896, 1.442695
    %v1898 = vpow.pop %v1897
    %v1899 = vadd.f32 %v1898, 1.0
    %v1900 = vrcp.pop %v1899
    %v1901 = vmul.f32 1.0, %v1900
    %1903 = vrot.lane.b32.xlu0 %v1861, 32
    %v1904 = vpop.permute.xlu0 %1903
    %v1906 = vmul.f32 %v1895, %v1904
    %1908 = vrot.lane.b32.xlu0 %v1906, 64
    %v1909 = vpop.permute.xlu0 %1908
    %v1911 = vadd.f32 %v1861, %v1909
    %v1912 = vtanh.pop %v1911
    %v1913 = vsub.f32 1.0, %v1901
    %1915 = vrot.lane.b32.xlu0 %v1912, 96
    %v1916 = vpop.permute.xlu0 %1915
    %v1918 = vmul.f32 %v1913, %v1916
    %v1919 = vmul.f32 %v1901, %v1778
    %v1920 = vadd.f32 %v1918, %v1919
    %1921 = vst.msk [vmem:[#allocation3 + $0x4] sm:$0x1] %vm1352, %v1920
    %1923 = vrot.lane.b32.xlu0 %v1889, 96
    %v1924 = vpop.permute.xlu0 %1923
    %1927 = vrot.lane.b32.xlu0 %v1920, 32
    %v1928 = vpop.permute.xlu0 %1927
    %v1930 = vsel %vm1211, %v1924, %v1928
    %v1932 = vsel %vm1219, %v1930, 0
    %1934 = vmatprep.subr.mxu0 %v1160
    %1935 = vmatpush1.msra.mxu0 %v1159
    %1936 = vmatprep.subr.mxu0 %v1162
    %1937 = vmatpush1.msra.mxu0 %v1161
    %1938 = vmatprep.subr.mxu0 %v1164
    %1939 = vmatpush1.msra.mxu0 %v1163
    %1940 = vmatprep.subr.mxu0 %v1166
    %1941 = vmatpush1.msra.mxu0 %v1165
    %1942 = vmatprep.subr.mxu0 %v1168
    %1943 = vmatpush1.msra.mxu0 %v1167
    %1944 = vmatprep.subr.mxu0 %v1170
    %1945 = vmatpush1.msra.mxu0 %v1169
    %1946 = vmatprep.subr.mxu0 %v1172
    %1947 = vmatpush1.msra.mxu0 %v1171
    %1948 = vmatprep.subr.mxu0 %v1174
    %1949 = vmatpush1.msra.mxu0 %v1173
    %1950 = vmatprep.subr.mxu0 0.0
    %1951 = vmatpush1.msra.mxu0 0.0
    %1952 = vmatprep.subr.mxu0 0.0
    %1953 = vmatpush1.msra.mxu0 0.0
    %1954 = vmatprep.subr.mxu0 0.0
    %1955 = vmatpush1.msra.mxu0 0.0
    %1956 = vmatprep.subr.mxu0 0.0
    %1957 = vmatpush1.msra.mxu0 0.0
    %1958 = vmatprep.subr.mxu0 0.0
    %1959 = vmatpush1.msra.mxu0 0.0
    %1960 = vmatprep.subr.mxu0 0.0
    %1961 = vmatpush1.msra.mxu0 0.0
    %1962 = vmatprep.subr.mxu0 0.0
    %1963 = vmatpush1.msra.mxu0 0.0
    %1964 = vmatprep.subr.mxu0 0.0
    %1965 = vmatpush1.msra.mxu0 0.0
    %1966 = vmatprep.subr.mxu0 0.0
    %1967 = vmatpush1.msra.mxu0 0.0
    %1968 = vmatprep.subr.mxu0 0.0
    %1969 = vmatpush1.msra.mxu0 0.0
    %1970 = vmatprep.subr.mxu0 0.0
    %1971 = vmatpush1.msra.mxu0 0.0
    %1972 = vmatprep.subr.mxu0 0.0
    %1973 = vmatpush1.msra.mxu0 0.0
    %1974 = vmatprep.subr.mxu0 0.0
    %1975 = vmatpush1.msra.mxu0 0.0
    %1976 = vmatprep.subr.mxu0 0.0
    %1977 = vmatpush1.msra.mxu0 0.0
    %1978 = vmatprep.subr.mxu0 0.0
    %1979 = vmatpush1.msra.mxu0 0.0
    %1980 = vmatprep.subr.mxu0 0.0
    %1981 = vmatpush1.msra.mxu0 0.0
    %1982 = vmatprep.subr.mxu0 0.0
    %1983 = vmatpush1.msra.mxu0 0.0
    %1984 = vmatprep.subr.mxu0 0.0
    %1985 = vmatpush1.msra.mxu0 0.0
    %1986 = vmatprep.subr.mxu0 0.0
    %1987 = vmatpush1.msra.mxu0 0.0
    %1988 = vmatprep.subr.mxu0 0.0
    %1989 = vmatpush1.msra.mxu0 0.0
    %1990 = vmatprep.subr.mxu0 0.0
    %1991 = vmatpush1.msra.mxu0 0.0
    %1992 = vmatprep.subr.mxu0 0.0
    %1993 = vmatpush1.msra.mxu0 0.0
    %1994 = vmatprep.subr.mxu0 0.0
    %1995 = vmatpush1.msra.mxu0 0.0
    %1996 = vmatprep.subr.mxu0 0.0
    %1997 = vmatpush1.msra.mxu0 0.0
    %1998 = vmatprep.mubr.f32.mxu0 0.0
    %1999 = vmatmul.mubr.f32.gmra.mrb[0].mxu0 %v1932
    %v2000 = vpop.f32.mrb[0].mxu0
    %v2001 = vadd.f32 %v1188, %v2000
    %v2002 = vpop.f32.mrb[0].mxu0
    %v2003 = vadd.f32 %v1216, %v2002
    %2004 = vdwg.mxu0
    %v2005 = vld [vmem:[#allocation2 + $0x6] sm:$0x1]
    %v2006 = vadd.f32 %v2005, %v2001
    %v2007 = vxor.u32 %v2006, 2147483648
    %v2008 = vmul.f32 %v2007, 1.442695
    %v2009 = vpow.pop %v2008
    %v2010 = vadd.f32 %v2009, 1.0
    %v2011 = vrcp.pop %v2010
    %v2012 = vmul.f32 1.0, %v2011
    %2014 = vrot.lane.b32.xlu0 %v2001, 64
    %v2015 = vpop.permute.xlu0 %2014
    %v2017 = vmul.f32 %v2012, %v2015
    %2019 = vrot.lane.b32.xlu0 %v2017, 64
    %v2020 = vpop.permute.xlu0 %2019
    %v2022 = vadd.f32 %v2005, %v2020
    %v2023 = vtanh.pop %v2022
    %v2024 = vsub.f32 1.0, %v2012
    %2026 = vrot.lane.b32.xlu0 %v2023, 96
    %v2027 = vpop.permute.xlu0 %2026
    %v2029 = vmul.f32 %v2024, %v2027
    %v2030 = vmul.f32 %v2012, %v1889
    %v2031 = vadd.f32 %v2029, %v2030
    %v2032 = vxor.u32 %v2001, 2147483648
    %v2033 = vmul.f32 %v2032, 1.442695
    %v2034 = vpow.pop %v2033
    %v2035 = vadd.f32 %v2034, 1.0
    %v2036 = vrcp.pop %v2035
    %v2037 = vmul.f32 1.0, %v2036
    %v2038 = vxor.u32 %v2003, 2147483648
    %v2039 = vmul.f32 %v2038, 1.442695
    %v2040 = vpow.pop %v2039
    %v2041 = vadd.f32 %v2040, 1.0
    %v2042 = vrcp.pop %v2041
    %v2043 = vmul.f32 1.0, %v2042
    %2045 = vrot.lane.b32.xlu0 %v2003, 32
    %v2046 = vpop.permute.xlu0 %2045
    %v2048 = vmul.f32 %v2037, %v2046
    %2050 = vrot.lane.b32.xlu0 %v2048, 64
    %v2051 = vpop.permute.xlu0 %2050
    %v2053 = vadd.f32 %v2003, %v2051
    %v2054 = vtanh.pop %v2053
    %v2055 = vsub.f32 1.0, %v2043
    %2057 = vrot.lane.b32.xlu0 %v2054, 96
    %v2058 = vpop.permute.xlu0 %2057
    %v2060 = vmul.f32 %v2055, %v2058
    %v2061 = vmul.f32 %v2043, %v1920
    %v2062 = vadd.f32 %v2060, %v2061
    %2063 = vst.msk [vmem:[#allocation3 + $0x5] sm:$0x1] %vm1352, %v2062
    %2065 = vrot.lane.b32.xlu0 %v2031, 96
    %v2066 = vpop.permute.xlu0 %2065
    %2069 = vrot.lane.b32.xlu0 %v2062, 32
    %v2070 = vpop.permute.xlu0 %2069
    %v2072 = vsel %vm1211, %v2066, %v2070
    %v2074 = vsel %vm1219, %v2072, 0
    %2076 = vmatprep.subr.mxu0 %v1160
    %2077 = vmatpush1.msra.mxu0 %v1159
    %2078 = vmatprep.subr.mxu0 %v1162
    %2079 = vmatpush1.msra.mxu0 %v1161
    %2080 = vmatprep.subr.mxu0 %v1164
    %2081 = vmatpush1.msra.mxu0 %v1163
    %2082 = vmatprep.subr.mxu0 %v1166
    %2083 = vmatpush1.msra.mxu0 %v1165
    %2084 = vmatprep.subr.mxu0 %v1168
    %2085 = vmatpush1.msra.mxu0 %v1167
    %2086 = vmatprep.subr.mxu0 %v1170
    %2087 = vmatpush1.msra.mxu0 %v1169
    %2088 = vmatprep.subr.mxu0 %v1172
    %2089 = vmatpush1.msra.mxu0 %v1171
    %2090 = vmatprep.subr.mxu0 %v1174
    %2091 = vmatpush1.msra.mxu0 %v1173
    %2092 = vmatprep.subr.mxu0 0.0
    %2093 = vmatpush1.msra.mxu0 0.0
    %2094 = vmatprep.subr.mxu0 0.0
    %2095 = vmatpush1.msra.mxu0 0.0
    %2096 = vmatprep.subr.mxu0 0.0
    %2097 = vmatpush1.msra.mxu0 0.0
    %2098 = vmatprep.subr.mxu0 0.0
    %2099 = vmatpush1.msra.mxu0 0.0
    %2100 = vmatprep.subr.mxu0 0.0
    %2101 = vmatpush1.msra.mxu0 0.0
    %2102 = vmatprep.subr.mxu0 0.0
    %2103 = vmatpush1.msra.mxu0 0.0
    %2104 = vmatprep.subr.mxu0 0.0
    %2105 = vmatpush1.msra.mxu0 0.0
    %2106 = vmatprep.subr.mxu0 0.0
    %2107 = vmatpush1.msra.mxu0 0.0
    %2108 = vmatprep.subr.mxu0 0.0
    %2109 = vmatpush1.msra.mxu0 0.0
    %2110 = vmatprep.subr.mxu0 0.0
    %2111 = vmatpush1.msra.mxu0 0.0
    %2112 = vmatprep.subr.mxu0 0.0
    %2113 = vmatpush1.msra.mxu0 0.0
    %2114 = vmatprep.subr.mxu0 0.0
    %2115 = vmatpush1.msra.mxu0 0.0
    %2116 = vmatprep.subr.mxu0 0.0
    %2117 = vmatpush1.msra.mxu0 0.0
    %2118 = vmatprep.subr.mxu0 0.0
    %2119 = vmatpush1.msra.mxu0 0.0
    %2120 = vmatprep.subr.mxu0 0.0
    %2121 = vmatpush1.msra.mxu0 0.0
    %2122 = vmatprep.subr.mxu0 0.0
    %2123 = vmatpush1.msra.mxu0 0.0
    %2124 = vmatprep.subr.mxu0 0.0
    %2125 = vmatpush1.msra.mxu0 0.0
    %2126 = vmatprep.subr.mxu0 0.0
    %2127 = vmatpush1.msra.mxu0 0.0
    %2128 = vmatprep.subr.mxu0 0.0
    %2129 = vmatpush1.msra.mxu0 0.0
    %2130 = vmatprep.subr.mxu0 0.0
    %2131 = vmatpush1.msra.mxu0 0.0
    %2132 = vmatprep.subr.mxu0 0.0
    %2133 = vmatpush1.msra.mxu0 0.0
    %2134 = vmatprep.subr.mxu0 0.0
    %2135 = vmatpush1.msra.mxu0 0.0
    %2136 = vmatprep.subr.mxu0 0.0
    %2137 = vmatpush1.msra.mxu0 0.0
    %2138 = vmatprep.subr.mxu0 0.0
    %2139 = vmatpush1.msra.mxu0 0.0
    %2140 = vmatprep.mubr.f32.mxu0 0.0
    %2141 = vmatmul.mubr.f32.gmra.mrb[0].mxu0 %v2074
    %v2142 = vpop.f32.mrb[0].mxu0
    %v2143 = vadd.f32 %v1188, %v2142
    %v2144 = vpop.f32.mrb[0].mxu0
    %v2145 = vadd.f32 %v1216, %v2144
    %2146 = vdwg.mxu0
    %v2147 = vld [vmem:[#allocation2 + $0x7] sm:$0x1]
    %v2148 = vadd.f32 %v2147, %v2143
    %v2149 = vxor.u32 %v2148, 2147483648
    %v2150 = vmul.f32 %v2149, 1.442695
    %v2151 = vpow.pop %v2150
    %v2152 = vadd.f32 %v2151, 1.0
    %v2153 = vrcp.pop %v2152
    %v2154 = vmul.f32 1.0, %v2153
    %2156 = vrot.lane.b32.xlu0 %v2143, 64
    %v2157 = vpop.permute.xlu0 %2156
    %v2159 = vmul.f32 %v2154, %v2157
    %2161 = vrot.lane.b32.xlu0 %v2159, 64
    %v2162 = vpop.permute.xlu0 %2161
    %v2164 = vadd.f32 %v2147, %v2162
    %v2165 = vtanh.pop %v2164
    %v2166 = vsub.f32 1.0, %v2154
    %2168 = vrot.lane.b32.xlu0 %v2165, 96
    %v2169 = vpop.permute.xlu0 %2168
    %v2171 = vmul.f32 %v2166, %v2169
    %v2172 = vmul.f32 %v2154, %v2031
    %v2173 = vadd.f32 %v2171, %v2172
    %v2174 = vxor.u32 %v2143, 2147483648
    %v2175 = vmul.f32 %v2174, 1.442695
    %v2176 = vpow.pop %v2175
    %v2177 = vadd.f32 %v2176, 1.0
    %v2178 = vrcp.pop %v2177
    %v2179 = vmul.f32 1.0, %v2178
    %v2180 = vxor.u32 %v2145, 2147483648
    %v2181 = vmul.f32 %v2180, 1.442695
    %v2182 = vpow.pop %v2181
    %v2183 = vadd.f32 %v2182, 1.0
    %v2184 = vrcp.pop %v2183
    %v2185 = vmul.f32 1.0, %v2184
    %2187 = vrot.lane.b32.xlu0 %v2145, 32
    %v2188 = vpop.permute.xlu0 %2187
    %v2190 = vmul.f32 %v2179, %v2188
    %2192 = vrot.lane.b32.xlu0 %v2190, 64
    %v2193 = vpop.permute.xlu0 %2192
    %v2195 = vadd.f32 %v2145, %v2193
    %v2196 = vtanh.pop %v2195
    %v2197 = vsub.f32 1.0, %v2185
    %2199 = vrot.lane.b32.xlu0 %v2196, 96
    %v2200 = vpop.permute.xlu0 %2199
    %v2202 = vmul.f32 %v2197, %v2200
    %v2203 = vmul.f32 %v2185, %v2062
    %v2204 = vadd.f32 %v2202, %v2203
    %2205 = vst.msk [vmem:[#allocation3 + $0x6] sm:$0x1] %vm1352, %v2204
    %2207 = vrot.lane.b32.xlu0 %v2173, 96
    %v2208 = vpop.permute.xlu0 %2207
    %2211 = vrot.lane.b32.xlu0 %v2204, 32
    %v2212 = vpop.permute.xlu0 %2211
    %v2214 = vsel %vm1211, %v2208, %v2212
    %v2216 = vsel %vm1219, %v2214, 0
    %2218 = vmatprep.subr.mxu0 %v1160
    %2219 = vmatpush1.msra.mxu0 %v1159
    %2220 = vmatprep.subr.mxu0 %v1162
    %2221 = vmatpush1.msra.mxu0 %v1161
    %2222 = vmatprep.subr.mxu0 %v1164
    %2223 = vmatpush1.msra.mxu0 %v1163
    %2224 = vmatprep.subr.mxu0 %v1166
    %2225 = vmatpush1.msra.mxu0 %v1165
    %2226 = vmatprep.subr.mxu0 %v1168
    %2227 = vmatpush1.msra.mxu0 %v1167
    %2228 = vmatprep.subr.mxu0 %v1170
    %2229 = vmatpush1.msra.mxu0 %v1169
    %2230 = vmatprep.subr.mxu0 %v1172
    %2231 = vmatpush1.msra.mxu0 %v1171
    %2232 = vmatprep.subr.mxu0 %v1174
    %2233 = vmatpush1.msra.mxu0 %v1173
    %2234 = vmatprep.subr.mxu0 0.0
    %2235 = vmatpush1.msra.mxu0 0.0
    %2236 = vmatprep.subr.mxu0 0.0
    %2237 = vmatpush1.msra.mxu0 0.0
    %2238 = vmatprep.subr.mxu0 0.0
    %2239 = vmatpush1.msra.mxu0 0.0
    %2240 = vmatprep.subr.mxu0 0.0
    %2241 = vmatpush1.msra.mxu0 0.0
    %2242 = vmatprep.subr.mxu0 0.0
    %2243 = vmatpush1.msra.mxu0 0.0
    %2244 = vmatprep.subr.mxu0 0.0
    %2245 = vmatpush1.msra.mxu0 0.0
    %2246 = vmatprep.subr.mxu0 0.0
    %2247 = vmatpush1.msra.mxu0 0.0
    %2248 = vmatprep.subr.mxu0 0.0
    %2249 = vmatpush1.msra.mxu0 0.0
    %2250 = vmatprep.subr.mxu0 0.0
    %2251 = vmatpush1.msra.mxu0 0.0
    %2252 = vmatprep.subr.mxu0 0.0
    %2253 = vmatpush1.msra.mxu0 0.0
    %2254 = vmatprep.subr.mxu0 0.0
    %2255 = vmatpush1.msra.mxu0 0.0
    %2256 = vmatprep.subr.mxu0 0.0
    %2257 = vmatpush1.msra.mxu0 0.0
    %2258 = vmatprep.subr.mxu0 0.0
    %2259 = vmatpush1.msra.mxu0 0.0
    %2260 = vmatprep.subr.mxu0 0.0
    %2261 = vmatpush1.msra.mxu0 0.0
    %2262 = vmatprep.subr.mxu0 0.0
    %2263 = vmatpush1.msra.mxu0 0.0
    %2264 = vmatprep.subr.mxu0 0.0
    %2265 = vmatpush1.msra.mxu0 0.0
    %2266 = vmatprep.subr.mxu0 0.0
    %2267 = vmatpush1.msra.mxu0 0.0
    %2268 = vmatprep.subr.mxu0 0.0
    %2269 = vmatpush1.msra.mxu0 0.0
    %2270 = vmatprep.subr.mxu0 0.0
    %2271 = vmatpush1.msra.mxu0 0.0
    %2272 = vmatprep.subr.mxu0 0.0
    %2273 = vmatpush1.msra.mxu0 0.0
    %2274 = vmatprep.subr.mxu0 0.0
    %2275 = vmatpush1.msra.mxu0 0.0
    %2276 = vmatprep.subr.mxu0 0.0
    %2277 = vmatpush1.msra.mxu0 0.0
    %2278 = vmatprep.subr.mxu0 0.0
    %2279 = vmatpush1.msra.mxu0 0.0
    %2280 = vmatprep.subr.mxu0 0.0
    %2281 = vmatpush1.msra.mxu0 0.0
    %2282 = vmatprep.mubr.f32.mxu0 0.0
    %2283 = vmatmul.mubr.f32.gmra.mrb[0].mxu0 %v2216
    %v2284 = vpop.f32.mrb[0].mxu0
    %v2285 = vadd.f32 %v1188, %v2284
    %v2286 = vpop.f32.mrb[0].mxu0
    %v2287 = vadd.f32 %v1216, %v2286
    %2288 = vdwg.mxu0
    %v2289 = vld [vmem:[#allocation2 + $0x8] sm:$0x1]
    %v2290 = vadd.f32 %v2289, %v2285
    %v2291 = vxor.u32 %v2290, 2147483648
    %v2292 = vmul.f32 %v2291, 1.442695
    %v2293 = vpow.pop %v2292
    %v2294 = vadd.f32 %v2293, 1.0
    %v2295 = vrcp.pop %v2294
    %v2296 = vmul.f32 1.0, %v2295
    %2298 = vrot.lane.b32.xlu0 %v2285, 64
    %v2299 = vpop.permute.xlu0 %2298
    %v2301 = vmul.f32 %v2296, %v2299
    %2303 = vrot.lane.b32.xlu0 %v2301, 64
    %v2304 = vpop.permute.xlu0 %2303
    %v2306 = vadd.f32 %v2289, %v2304
    %v2307 = vtanh.pop %v2306
    %v2308 = vsub.f32 1.0, %v2296
    %2310 = vrot.lane.b32.xlu0 %v2307, 96
    %v2311 = vpop.permute.xlu0 %2310
    %v2313 = vmul.f32 %v2308, %v2311
    %v2314 = vmul.f32 %v2296, %v2173
    %v2315 = vadd.f32 %v2313, %v2314
    %v2316 = vxor.u32 %v2285, 2147483648
    %v2317 = vmul.f32 %v2316, 1.442695
    %v2318 = vpow.pop %v2317
    %v2319 = vadd.f32 %v2318, 1.0
    %v2320 = vrcp.pop %v2319
    %v2321 = vmul.f32 1.0, %v2320
    %v2322 = vxor.u32 %v2287, 2147483648
    %v2323 = vmul.f32 %v2322, 1.442695
    %v2324 = vpow.pop %v2323
    %v2325 = vadd.f32 %v2324, 1.0
    %v2326 = vrcp.pop %v2325
    %v2327 = vmul.f32 1.0, %v2326
    %2329 = vrot.lane.b32.xlu0 %v2287, 32
    %v2330 = vpop.permute.xlu0 %2329
    %v2332 = vmul.f32 %v2321, %v2330
    %2334 = vrot.lane.b32.xlu0 %v2332, 64
    %v2335 = vpop.permute.xlu0 %2334
    %v2337 = vadd.f32 %v2287, %v2335
    %v2338 = vtanh.pop %v2337
    %v2339 = vsub.f32 1.0, %v2327
    %2341 = vrot.lane.b32.xlu0 %v2338, 96
    %v2342 = vpop.permute.xlu0 %2341
    %v2344 = vmul.f32 %v2339, %v2342
    %v2345 = vmul.f32 %v2327, %v2204
    %v2346 = vadd.f32 %v2344, %v2345
    %2347 = vst.msk [vmem:[#allocation3 + $0x7] sm:$0x1] %vm1352, %v2346
    %2349 = vrot.lane.b32.xlu0 %v2315, 96
    %v2350 = vpop.permute.xlu0 %2349
    %2353 = vrot.lane.b32.xlu0 %v2346, 32
    %v2354 = vpop.permute.xlu0 %2353
    %v2356 = vsel %vm1211, %v2350, %v2354
    %v2358 = vsel %vm1219, %v2356, 0
    %2360 = vmatprep.subr.mxu0 %v1160
    %2361 = vmatpush1.msra.mxu0 %v1159
    %2362 = vmatprep.subr.mxu0 %v1162
    %2363 = vmatpush1.msra.mxu0 %v1161
    %2364 = vmatprep.subr.mxu0 %v1164
    %2365 = vmatpush1.msra.mxu0 %v1163
    %2366 = vmatprep.subr.mxu0 %v1166
    %2367 = vmatpush1.msra.mxu0 %v1165
    %2368 = vmatprep.subr.mxu0 %v1168
    %2369 = vmatpush1.msra.mxu0 %v1167
    %2370 = vmatprep.subr.mxu0 %v1170
    %2371 = vmatpush1.msra.mxu0 %v1169
    %2372 = vmatprep.subr.mxu0 %v1172
    %2373 = vmatpush1.msra.mxu0 %v1171
    %2374 = vmatprep.subr.mxu0 %v1174
    %2375 = vmatpush1.msra.mxu0 %v1173
    %2376 = vmatprep.subr.mxu0 0.0
    %2377 = vmatpush1.msra.mxu0 0.0
    %2378 = vmatprep.subr.mxu0 0.0
    %2379 = vmatpush1.msra.mxu0 0.0
    %2380 = vmatprep.subr.mxu0 0.0
    %2381 = vmatpush1.msra.mxu0 0.0
    %2382 = vmatprep.subr.mxu0 0.0
    %2383 = vmatpush1.msra.mxu0 0.0
    %2384 = vmatprep.subr.mxu0 0.0
    %2385 = vmatpush1.msra.mxu0 0.0
    %2386 = vmatprep.subr.mxu0 0.0
    %2387 = vmatpush1.msra.mxu0 0.0
    %2388 = vmatprep.subr.mxu0 0.0
    %2389 = vmatpush1.msra.mxu0 0.0
    %2390 = vmatprep.subr.mxu0 0.0
    %2391 = vmatpush1.msra.mxu0 0.0
    %2392 = vmatprep.subr.mxu0 0.0
    %2393 = vmatpush1.msra.mxu0 0.0
    %2394 = vmatprep.subr.mxu0 0.0
    %2395 = vmatpush1.msra.mxu0 0.0
    %2396 = vmatprep.subr.mxu0 0.0
    %2397 = vmatpush1.msra.mxu0 0.0
    %2398 = vmatprep.subr.mxu0 0.0
    %2399 = vmatpush1.msra.mxu0 0.0
    %2400 = vmatprep.subr.mxu0 0.0
    %2401 = vmatpush1.msra.mxu0 0.0
    %2402 = vmatprep.subr.mxu0 0.0
    %2403 = vmatpush1.msra.mxu0 0.0
    %2404 = vmatprep.subr.mxu0 0.0
    %2405 = vmatpush1.msra.mxu0 0.0
    %2406 = vmatprep.subr.mxu0 0.0
    %2407 = vmatpush1.msra.mxu0 0.0
    %2408 = vmatprep.subr.mxu0 0.0
    %2409 = vmatpush1.msra.mxu0 0.0
    %2410 = vmatprep.subr.mxu0 0.0
    %2411 = vmatpush1.msra.mxu0 0.0
    %2412 = vmatprep.subr.mxu0 0.0
    %2413 = vmatpush1.msra.mxu0 0.0
    %2414 = vmatprep.subr.mxu0 0.0
    %2415 = vmatpush1.msra.mxu0 0.0
    %2416 = vmatprep.subr.mxu0 0.0
    %2417 = vmatpush1.msra.mxu0 0.0
    %2418 = vmatprep.subr.mxu0 0.0
    %2419 = vmatpush1.msra.mxu0 0.0
    %2420 = vmatprep.subr.mxu0 0.0
    %2421 = vmatpush1.msra.mxu0 0.0
    %2422 = vmatprep.subr.mxu0 0.0
    %2423 = vmatpush1.msra.mxu0 0.0
    %2424 = vmatprep.mubr.f32.mxu0 0.0
    %2425 = vmatmul.mubr.f32.gmra.mrb[0].mxu0 %v2358
    %v2426 = vpop.f32.mrb[0].mxu0
    %v2427 = vadd.f32 %v1188, %v2426
    %v2428 = vpop.f32.mrb[0].mxu0
    %v2429 = vadd.f32 %v1216, %v2428
    %2430 = vdwg.mxu0
    %v2431 = vld [vmem:[#allocation2 + $0x9] sm:$0x1]
    %v2432 = vadd.f32 %v2431, %v2427
    %v2433 = vxor.u32 %v2432, 2147483648
    %v2434 = vmul.f32 %v2433, 1.442695
    %v2435 = vpow.pop %v2434
    %v2436 = vadd.f32 %v2435, 1.0
    %v2437 = vrcp.pop %v2436
    %v2438 = vmul.f32 1.0, %v2437
    %2440 = vrot.lane.b32.xlu0 %v2427, 64
    %v2441 = vpop.permute.xlu0 %2440
    %v2443 = vmul.f32 %v2438, %v2441
    %2445 = vrot.lane.b32.xlu0 %v2443, 64
    %v2446 = vpop.permute.xlu0 %2445
    %v2448 = vadd.f32 %v2431, %v2446
    %v2449 = vtanh.pop %v2448
    %v2450 = vsub.f32 1.0, %v2438
    %2452 = vrot.lane.b32.xlu0 %v2449, 96
    %v2453 = vpop.permute.xlu0 %2452
    %v2455 = vmul.f32 %v2450, %v2453
    %v2456 = vmul.f32 %v2438, %v2315
    %v2457 = vadd.f32 %v2455, %v2456
    %v2458 = vxor.u32 %v2427, 2147483648
    %v2459 = vmul.f32 %v2458, 1.442695
    %v2460 = vpow.pop %v2459
    %v2461 = vadd.f32 %v2460, 1.0
    %v2462 = vrcp.pop %v2461
    %v2463 = vmul.f32 1.0, %v2462
    %v2464 = vxor.u32 %v2429, 2147483648
    %v2465 = vmul.f32 %v2464, 1.442695
    %v2466 = vpow.pop %v2465
    %v2467 = vadd.f32 %v2466, 1.0
    %v2468 = vrcp.pop %v2467
    %v2469 = vmul.f32 1.0, %v2468
    %2471 = vrot.lane.b32.xlu0 %v2429, 32
    %v2472 = vpop.permute.xlu0 %2471
    %v2474 = vmul.f32 %v2463, %v2472
    %2476 = vrot.lane.b32.xlu0 %v2474, 64
    %v2477 = vpop.permute.xlu0 %2476
    %v2479 = vadd.f32 %v2429, %v2477
    %v2480 = vtanh.pop %v2479
    %v2481 = vsub.f32 1.0, %v2469
    %2483 = vrot.lane.b32.xlu0 %v2480, 96
    %v2484 = vpop.permute.xlu0 %2483
    %v2486 = vmul.f32 %v2481, %v2484
    %v2487 = vmul.f32 %v2469, %v2346
    %v2488 = vadd.f32 %v2486, %v2487
    %2489 = vst.msk [vmem:[#allocation3 + $0x8] sm:$0x1] %vm1352, %v2488
    %2491 = vrot.lane.b32.xlu0 %v2457, 96
    %v2492 = vpop.permute.xlu0 %2491
    %2495 = vrot.lane.b32.xlu0 %v2488, 32
    %v2496 = vpop.permute.xlu0 %2495
    %v2498 = vsel %vm1211, %v2492, %v2496
    %v2500 = vsel %vm1219, %v2498, 0
    %2502 = vmatprep.subr.mxu0 %v1160
    %2503 = vmatpush1.msra.mxu0 %v1159
    %2504 = vmatprep.subr.mxu0 %v1162
    %2505 = vmatpush1.msra.mxu0 %v1161
    %2506 = vmatprep.subr.mxu0 %v1164
    %2507 = vmatpush1.msra.mxu0 %v1163
    %2508 = vmatprep.subr.mxu0 %v1166
    %2509 = vmatpush1.msra.mxu0 %v1165
    %2510 = vmatprep.subr.mxu0 %v1168
    %2511 = vmatpush1.msra.mxu0 %v1167
    %2512 = vmatprep.subr.mxu0 %v1170
    %2513 = vmatpush1.msra.mxu0 %v1169
    %2514 = vmatprep.subr.mxu0 %v1172
    %2515 = vmatpush1.msra.mxu0 %v1171
    %2516 = vmatprep.subr.mxu0 %v1174
    %2517 = vmatpush1.msra.mxu0 %v1173
    %2518 = vmatprep.subr.mxu0 0.0
    %2519 = vmatpush1.msra.mxu0 0.0
    %2520 = vmatprep.subr.mxu0 0.0
    %2521 = vmatpush1.msra.mxu0 0.0
    %2522 = vmatprep.subr.mxu0 0.0
    %2523 = vmatpush1.msra.mxu0 0.0
    %2524 = vmatprep.subr.mxu0 0.0
    %2525 = vmatpush1.msra.mxu0 0.0
    %2526 = vmatprep.subr.mxu0 0.0
    %2527 = vmatpush1.msra.mxu0 0.0
    %2528 = vmatprep.subr.mxu0 0.0
    %2529 = vmatpush1.msra.mxu0 0.0
    %2530 = vmatprep.subr.mxu0 0.0
    %2531 = vmatpush1.msra.mxu0 0.0
    %2532 = vmatprep.subr.mxu0 0.0
    %2533 = vmatpush1.msra.mxu0 0.0
    %2534 = vmatprep.subr.mxu0 0.0
    %2535 = vmatpush1.msra.mxu0 0.0
    %2536 = vmatprep.subr.mxu0 0.0
    %2537 = vmatpush1.msra.mxu0 0.0
    %2538 = vmatprep.subr.mxu0 0.0
    %2539 = vmatpush1.msra.mxu0 0.0
    %2540 = vmatprep.subr.mxu0 0.0
    %2541 = vmatpush1.msra.mxu0 0.0
    %2542 = vmatprep.subr.mxu0 0.0
    %2543 = vmatpush1.msra.mxu0 0.0
    %2544 = vmatprep.subr.mxu0 0.0
    %2545 = vmatpush1.msra.mxu0 0.0
    %2546 = vmatprep.subr.mxu0 0.0
    %2547 = vmatpush1.msra.mxu0 0.0
    %2548 = vmatprep.subr.mxu0 0.0
    %2549 = vmatpush1.msra.mxu0 0.0
    %2550 = vmatprep.subr.mxu0 0.0
    %2551 = vmatpush1.msra.mxu0 0.0
    %2552 = vmatprep.subr.mxu0 0.0
    %2553 = vmatpush1.msra.mxu0 0.0
    %2554 = vmatprep.subr.mxu0 0.0
    %2555 = vmatpush1.msra.mxu0 0.0
    %2556 = vmatprep.subr.mxu0 0.0
    %2557 = vmatpush1.msra.mxu0 0.0
    %2558 = vmatprep.subr.mxu0 0.0
    %2559 = vmatpush1.msra.mxu0 0.0
    %2560 = vmatprep.subr.mxu0 0.0
    %2561 = vmatpush1.msra.mxu0 0.0
    %2562 = vmatprep.subr.mxu0 0.0
    %2563 = vmatpush1.msra.mxu0 0.0
    %2564 = vmatprep.subr.mxu0 0.0
    %2565 = vmatpush1.msra.mxu0 0.0
    %2566 = vmatprep.mubr.f32.mxu0 0.0
    %2567 = vmatmul.mubr.f32.gmra.mrb[0].mxu0 %v2500
    %v2568 = vpop.f32.mrb[0].mxu0
    %v2569 = vadd.f32 %v1188, %v2568
    %v2570 = vpop.f32.mrb[0].mxu0
    %v2571 = vadd.f32 %v1216, %v2570
    %2572 = vdwg.mxu0
    %v2573 = vld [vmem:[#allocation2 + $0xa] sm:$0x1]
    %v2574 = vadd.f32 %v2573, %v2569
    %v2575 = vxor.u32 %v2574, 2147483648
    %v2576 = vmul.f32 %v2575, 1.442695
    %v2577 = vpow.pop %v2576
    %v2578 = vadd.f32 %v2577, 1.0
    %v2579 = vrcp.pop %v2578
    %v2580 = vmul.f32 1.0, %v2579
    %2582 = vrot.lane.b32.xlu0 %v2569, 64
    %v2583 = vpop.permute.xlu0 %2582
    %v2585 = vmul.f32 %v2580, %v2583
    %2587 = vrot.lane.b32.xlu0 %v2585, 64
    %v2588 = vpop.permute.xlu0 %2587
    %v2590 = vadd.f32 %v2573, %v2588
    %v2591 = vtanh.pop %v2590
    %v2592 = vsub.f32 1.0, %v2580
    %2594 = vrot.lane.b32.xlu0 %v2591, 96
    %v2595 = vpop.permute.xlu0 %2594
    %v2597 = vmul.f32 %v2592, %v2595
    %v2598 = vmul.f32 %v2580, %v2457
    %v2599 = vadd.f32 %v2597, %v2598
    %v2600 = vxor.u32 %v2569, 2147483648
    %v2601 = vmul.f32 %v2600, 1.442695
    %v2602 = vpow.pop %v2601
    %v2603 = vadd.f32 %v2602, 1.0
    %v2604 = vrcp.pop %v2603
    %v2605 = vmul.f32 1.0, %v2604
    %v2606 = vxor.u32 %v2571, 2147483648
    %v2607 = vmul.f32 %v2606, 1.442695
    %v2608 = vpow.pop %v2607
    %v2609 = vadd.f32 %v2608, 1.0
    %v2610 = vrcp.pop %v2609
    %v2611 = vmul.f32 1.0, %v2610
    %2613 = vrot.lane.b32.xlu0 %v2571, 32
    %v2614 = vpop.permute.xlu0 %2613
    %v2616 = vmul.f32 %v2605, %v2614
    %2618 = vrot.lane.b32.xlu0 %v2616, 64
    %v2619 = vpop.permute.xlu0 %2618
    %v2621 = vadd.f32 %v2571, %v2619
    %v2622 = vtanh.pop %v2621
    %v2623 = vsub.f32 1.0, %v2611
    %2625 = vrot.lane.b32.xlu0 %v2622, 96
    %v2626 = vpop.permute.xlu0 %2625
    %v2628 = vmul.f32 %v2623, %v2626
    %v2629 = vmul.f32 %v2611, %v2488
    %v2630 = vadd.f32 %v2628, %v2629
    %2631 = vst.msk [vmem:[#allocation3 + $0x9] sm:$0x1] %vm1352, %v2630
    %2633 = vrot.lane.b32.xlu0 %v2599, 96
    %v2634 = vpop.permute.xlu0 %2633
    %2637 = vrot.lane.b32.xlu0 %v2630, 32
    %v2638 = vpop.permute.xlu0 %2637
    %v2640 = vsel %vm1211, %v2634, %v2638
    %v2642 = vsel %vm1219, %v2640, 0
    %2644 = vmatprep.subr.mxu0 %v1160
    %2645 = vmatpush1.msra.mxu0 %v1159
    %2646 = vmatprep.subr.mxu0 %v1162
    %2647 = vmatpush1.msra.mxu0 %v1161
    %2648 = vmatprep.subr.mxu0 %v1164
    %2649 = vmatpush1.msra.mxu0 %v1163
    %2650 = vmatprep.subr.mxu0 %v1166
    %2651 = vmatpush1.msra.mxu0 %v1165
    %2652 = vmatprep.subr.mxu0 %v1168
    %2653 = vmatpush1.msra.mxu0 %v1167
    %2654 = vmatprep.subr.mxu0 %v1170
    %2655 = vmatpush1.msra.mxu0 %v1169
    %2656 = vmatprep.subr.mxu0 %v1172
    %2657 = vmatpush1.msra.mxu0 %v1171
    %2658 = vmatprep.subr.mxu0 %v1174
    %2659 = vmatpush1.msra.mxu0 %v1173
    %2660 = vmatprep.subr.mxu0 0.0
    %2661 = vmatpush1.msra.mxu0 0.0
    %2662 = vmatprep.subr.mxu0 0.0
    %2663 = vmatpush1.msra.mxu0 0.0
    %2664 = vmatprep.subr.mxu0 0.0
    %2665 = vmatpush1.msra.mxu0 0.0
    %2666 = vmatprep.subr.mxu0 0.0
    %2667 = vmatpush1.msra.mxu0 0.0
    %2668 = vmatprep.subr.mxu0 0.0
    %2669 = vmatpush1.msra.mxu0 0.0
    %2670 = vmatprep.subr.mxu0 0.0
    %2671 = vmatpush1.msra.mxu0 0.0
    %2672 = vmatprep.subr.mxu0 0.0
    %2673 = vmatpush1.msra.mxu0 0.0
    %2674 = vmatprep.subr.mxu0 0.0
    %2675 = vmatpush1.msra.mxu0 0.0
    %2676 = vmatprep.subr.mxu0 0.0
    %2677 = vmatpush1.msra.mxu0 0.0
    %2678 = vmatprep.subr.mxu0 0.0
    %2679 = vmatpush1.msra.mxu0 0.0
    %2680 = vmatprep.subr.mxu0 0.0
    %2681 = vmatpush1.msra.mxu0 0.0
    %2682 = vmatprep.subr.mxu0 0.0
    %2683 = vmatpush1.msra.mxu0 0.0
    %2684 = vmatprep.subr.mxu0 0.0
    %2685 = vmatpush1.msra.mxu0 0.0
    %2686 = vmatprep.subr.mxu0 0.0
    %2687 = vmatpush1.msra.mxu0 0.0
    %2688 = vmatprep.subr.mxu0 0.0
    %2689 = vmatpush1.msra.mxu0 0.0
    %2690 = vmatprep.subr.mxu0 0.0
    %2691 = vmatpush1.msra.mxu0 0.0
    %2692 = vmatprep.subr.mxu0 0.0
    %2693 = vmatpush1.msra.mxu0 0.0
    %2694 = vmatprep.subr.mxu0 0.0
    %2695 = vmatpush1.msra.mxu0 0.0
    %2696 = vmatprep.subr.mxu0 0.0
    %2697 = vmatpush1.msra.mxu0 0.0
    %2698 = vmatprep.subr.mxu0 0.0
    %2699 = vmatpush1.msra.mxu0 0.0
    %2700 = vmatprep.subr.mxu0 0.0
    %2701 = vmatpush1.msra.mxu0 0.0
    %2702 = vmatprep.subr.mxu0 0.0
    %2703 = vmatpush1.msra.mxu0 0.0
    %2704 = vmatprep.subr.mxu0 0.0
    %2705 = vmatpush1.msra.mxu0 0.0
    %2706 = vmatprep.subr.mxu0 0.0
    %2707 = vmatpush1.msra.mxu0 0.0
    %2708 = vmatprep.mubr.f32.mxu0 0.0
    %2709 = vmatmul.mubr.f32.gmra.mrb[0].mxu0 %v2642
    %v2710 = vpop.f32.mrb[0].mxu0
    %v2711 = vadd.f32 %v1188, %v2710
    %v2712 = vpop.f32.mrb[0].mxu0
    %v2713 = vadd.f32 %v1216, %v2712
    %2714 = vdwg.mxu0
    %v2715 = vld [vmem:[#allocation2 + $0xb] sm:$0x1]
    %v2716 = vadd.f32 %v2715, %v2711
    %v2717 = vxor.u32 %v2716, 2147483648
    %v2718 = vmul.f32 %v2717, 1.442695
    %v2719 = vpow.pop %v2718
    %v2720 = vadd.f32 %v2719, 1.0
    %v2721 = vrcp.pop %v2720
    %v2722 = vmul.f32 1.0, %v2721
    %2724 = vrot.lane.b32.xlu0 %v2711, 64
    %v2725 = vpop.permute.xlu0 %2724
    %v2727 = vmul.f32 %v2722, %v2725
    %2729 = vrot.lane.b32.xlu0 %v2727, 64
    %v2730 = vpop.permute.xlu0 %2729
    %v2732 = vadd.f32 %v2715, %v2730
    %v2733 = vtanh.pop %v2732
    %v2734 = vsub.f32 1.0, %v2722
    %2736 = vrot.lane.b32.xlu0 %v2733, 96
    %v2737 = vpop.permute.xlu0 %2736
    %v2739 = vmul.f32 %v2734, %v2737
    %v2740 = vmul.f32 %v2722, %v2599
    %v2741 = vadd.f32 %v2739, %v2740
    %v2742 = vxor.u32 %v2711, 2147483648
    %v2743 = vmul.f32 %v2742, 1.442695
    %v2744 = vpow.pop %v2743
    %v2745 = vadd.f32 %v2744, 1.0
    %v2746 = vrcp.pop %v2745
    %v2747 = vmul.f32 1.0, %v2746
    %v2748 = vxor.u32 %v2713, 2147483648
    %v2749 = vmul.f32 %v2748, 1.442695
    %v2750 = vpow.pop %v2749
    %v2751 = vadd.f32 %v2750, 1.0
    %v2752 = vrcp.pop %v2751
    %v2753 = vmul.f32 1.0, %v2752
    %2755 = vrot.lane.b32.xlu0 %v2713, 32
    %v2756 = vpop.permute.xlu0 %2755
    %v2758 = vmul.f32 %v2747, %v2756
    %2760 = vrot.lane.b32.xlu0 %v2758, 64
    %v2761 = vpop.permute.xlu0 %2760
    %v2763 = vadd.f32 %v2713, %v2761
    %v2764 = vtanh.pop %v2763
    %v2765 = vsub.f32 1.0, %v2753
    %2767 = vrot.lane.b32.xlu0 %v2764, 96
    %v2768 = vpop.permute.xlu0 %2767
    %v2770 = vmul.f32 %v2765, %v2768
    %v2771 = vmul.f32 %v2753, %v2630
    %v2772 = vadd.f32 %v2770, %v2771
    %2773 = vst.msk [vmem:[#allocation3 + $0xa] sm:$0x1] %vm1352, %v2772
    %2775 = vrot.lane.b32.xlu0 %v2741, 96
    %v2776 = vpop.permute.xlu0 %2775
    %2779 = vrot.lane.b32.xlu0 %v2772, 32
    %v2780 = vpop.permute.xlu0 %2779
    %v2782 = vsel %vm1211, %v2776, %v2780
    %v2784 = vsel %vm1219, %v2782, 0
    %2786 = vmatprep.subr.mxu0 %v1160
    %2787 = vmatpush1.msra.mxu0 %v1159
    %2788 = vmatprep.subr.mxu0 %v1162
    %2789 = vmatpush1.msra.mxu0 %v1161
    %2790 = vmatprep.subr.mxu0 %v1164
    %2791 = vmatpush1.msra.mxu0 %v1163
    %2792 = vmatprep.subr.mxu0 %v1166
    %2793 = vmatpush1.msra.mxu0 %v1165
    %2794 = vmatprep.subr.mxu0 %v1168
    %2795 = vmatpush1.msra.mxu0 %v1167
    %2796 = vmatprep.subr.mxu0 %v1170
    %2797 = vmatpush1.msra.mxu0 %v1169
    %2798 = vmatprep.subr.mxu0 %v1172
    %2799 = vmatpush1.msra.mxu0 %v1171
    %2800 = vmatprep.subr.mxu0 %v1174
    %2801 = vmatpush1.msra.mxu0 %v1173
    %2802 = vmatprep.subr.mxu0 0.0
    %2803 = vmatpush1.msra.mxu0 0.0
    %2804 = vmatprep.subr.mxu0 0.0
    %2805 = vmatpush1.msra.mxu0 0.0
    %2806 = vmatprep.subr.mxu0 0.0
    %2807 = vmatpush1.msra.mxu0 0.0
    %2808 = vmatprep.subr.mxu0 0.0
    %2809 = vmatpush1.msra.mxu0 0.0
    %2810 = vmatprep.subr.mxu0 0.0
    %2811 = vmatpush1.msra.mxu0 0.0
    %2812 = vmatprep.subr.mxu0 0.0
    %2813 = vmatpush1.msra.mxu0 0.0
    %2814 = vmatprep.subr.mxu0 0.0
    %2815 = vmatpush1.msra.mxu0 0.0
    %2816 = vmatprep.subr.mxu0 0.0
    %2817 = vmatpush1.msra.mxu0 0.0
    %2818 = vmatprep.subr.mxu0 0.0
    %2819 = vmatpush1.msra.mxu0 0.0
    %2820 = vmatprep.subr.mxu0 0.0
    %2821 = vmatpush1.msra.mxu0 0.0
    %2822 = vmatprep.subr.mxu0 0.0
    %2823 = vmatpush1.msra.mxu0 0.0
    %2824 = vmatprep.subr.mxu0 0.0
    %2825 = vmatpush1.msra.mxu0 0.0
    %2826 = vmatprep.subr.mxu0 0.0
    %2827 = vmatpush1.msra.mxu0 0.0
    %2828 = vmatprep.subr.mxu0 0.0
    %2829 = vmatpush1.msra.mxu0 0.0
    %2830 = vmatprep.subr.mxu0 0.0
    %2831 = vmatpush1.msra.mxu0 0.0
    %2832 = vmatprep.subr.mxu0 0.0
    %2833 = vmatpush1.msra.mxu0 0.0
    %2834 = vmatprep.subr.mxu0 0.0
    %2835 = vmatpush1.msra.mxu0 0.0
    %2836 = vmatprep.subr.mxu0 0.0
    %2837 = vmatpush1.msra.mxu0 0.0
    %2838 = vmatprep.subr.mxu0 0.0
    %2839 = vmatpush1.msra.mxu0 0.0
    %2840 = vmatprep.subr.mxu0 0.0
    %2841 = vmatpush1.msra.mxu0 0.0
    %2842 = vmatprep.subr.mxu0 0.0
    %2843 = vmatpush1.msra.mxu0 0.0
    %2844 = vmatprep.subr.mxu0 0.0
    %2845 = vmatpush1.msra.mxu0 0.0
    %2846 = vmatprep.subr.mxu0 0.0
    %2847 = vmatpush1.msra.mxu0 0.0
    %2848 = vmatprep.subr.mxu0 0.0
    %2849 = vmatpush1.msra.mxu0 0.0
    %2850 = vmatprep.mubr.f32.mxu0 0.0
    %2851 = vmatmul.mubr.f32.gmra.mrb[0].mxu0 %v2784
    %v2852 = vpop.f32.mrb[0].mxu0
    %v2853 = vadd.f32 %v1188, %v2852
    %v2854 = vpop.f32.mrb[0].mxu0
    %v2855 = vadd.f32 %v1216, %v2854
    %2856 = vdwg.mxu0
    %v2857 = vld [vmem:[#allocation2 + $0xc] sm:$0x1]
    %v2858 = vadd.f32 %v2857, %v2853
    %v2859 = vxor.u32 %v2858, 2147483648
    %v2860 = vmul.f32 %v2859, 1.442695
    %v2861 = vpow.pop %v2860
    %v2862 = vadd.f32 %v2861, 1.0
    %v2863 = vrcp.pop %v2862
    %v2864 = vmul.f32 1.0, %v2863
    %2866 = vrot.lane.b32.xlu0 %v2853, 64
    %v2867 = vpop.permute.xlu0 %2866
    %v2869 = vmul.f32 %v2864, %v2867
    %2871 = vrot.lane.b32.xlu0 %v2869, 64
    %v2872 = vpop.permute.xlu0 %2871
    %v2874 = vadd.f32 %v2857, %v2872
    %v2875 = vtanh.pop %v2874
    %v2876 = vsub.f32 1.0, %v2864
    %2878 = vrot.lane.b32.xlu0 %v2875, 96
    %v2879 = vpop.permute.xlu0 %2878
    %v2881 = vmul.f32 %v2876, %v2879
    %v2882 = vmul.f32 %v2864, %v2741
    %v2883 = vadd.f32 %v2881, %v2882
    %v2884 = vxor.u32 %v2853, 2147483648
    %v2885 = vmul.f32 %v2884, 1.442695
    %v2886 = vpow.pop %v2885
    %v2887 = vadd.f32 %v2886, 1.0
    %v2888 = vrcp.pop %v2887
    %v2889 = vmul.f32 1.0, %v2888
    %v2890 = vxor.u32 %v2855, 2147483648
    %v2891 = vmul.f32 %v2890, 1.442695
    %v2892 = vpow.pop %v2891
    %v2893 = vadd.f32 %v2892, 1.0
    %v2894 = vrcp.pop %v2893
    %v2895 = vmul.f32 1.0, %v2894
    %2897 = vrot.lane.b32.xlu0 %v2855, 32
    %v2898 = vpop.permute.xlu0 %2897
    %v2900 = vmul.f32 %v2889, %v2898
    %2902 = vrot.lane.b32.xlu0 %v2900, 64
    %v2903 = vpop.permute.xlu0 %2902
    %v2905 = vadd.f32 %v2855, %v2903
    %v2906 = vtanh.pop %v2905
    %v2907 = vsub.f32 1.0, %v2895
    %2909 = vrot.lane.b32.xlu0 %v2906, 96
    %v2910 = vpop.permute.xlu0 %2909
    %v2912 = vmul.f32 %v2907, %v2910
    %v2913 = vmul.f32 %v2895, %v2772
    %v2914 = vadd.f32 %v2912, %v2913
    %2915 = vst.msk [vmem:[#allocation3 + $0xb] sm:$0x1] %vm1352, %v2914
    %2917 = vrot.lane.b32.xlu0 %v2883, 96
    %v2918 = vpop.permute.xlu0 %2917
    %2921 = vrot.lane.b32.xlu0 %v2914, 32
    %v2922 = vpop.permute.xlu0 %2921
    %v2924 = vsel %vm1211, %v2918, %v2922
    %v2926 = vsel %vm1219, %v2924, 0
    %2928 = vmatprep.subr.mxu0 %v1160
    %2929 = vmatpush1.msra.mxu0 %v1159
    %2930 = vmatprep.subr.mxu0 %v1162
    %2931 = vmatpush1.msra.mxu0 %v1161
    %2932 = vmatprep.subr.mxu0 %v1164
    %2933 = vmatpush1.msra.mxu0 %v1163
    %2934 = vmatprep.subr.mxu0 %v1166
    %2935 = vmatpush1.msra.mxu0 %v1165
    %2936 = vmatprep.subr.mxu0 %v1168
    %2937 = vmatpush1.msra.mxu0 %v1167
    %2938 = vmatprep.subr.mxu0 %v1170
    %2939 = vmatpush1.msra.mxu0 %v1169
    %2940 = vmatprep.subr.mxu0 %v1172
    %2941 = vmatpush1.msra.mxu0 %v1171
    %2942 = vmatprep.subr.mxu0 %v1174
    %2943 = vmatpush1.msra.mxu0 %v1173
    %2944 = vmatprep.subr.mxu0 0.0
    %2945 = vmatpush1.msra.mxu0 0.0
    %2946 = vmatprep.subr.mxu0 0.0
    %2947 = vmatpush1.msra.mxu0 0.0
    %2948 = vmatprep.subr.mxu0 0.0
    %2949 = vmatpush1.msra.mxu0 0.0
    %2950 = vmatprep.subr.mxu0 0.0
    %2951 = vmatpush1.msra.mxu0 0.0
    %2952 = vmatprep.subr.mxu0 0.0
    %2953 = vmatpush1.msra.mxu0 0.0
    %2954 = vmatprep.subr.mxu0 0.0
    %2955 = vmatpush1.msra.mxu0 0.0
    %2956 = vmatprep.subr.mxu0 0.0
    %2957 = vmatpush1.msra.mxu0 0.0
    %2958 = vmatprep.subr.mxu0 0.0
    %2959 = vmatpush1.msra.mxu0 0.0
    %2960 = vmatprep.subr.mxu0 0.0
    %2961 = vmatpush1.msra.mxu0 0.0
    %2962 = vmatprep.subr.mxu0 0.0
    %2963 = vmatpush1.msra.mxu0 0.0
    %2964 = vmatprep.subr.mxu0 0.0
    %2965 = vmatpush1.msra.mxu0 0.0
    %2966 = vmatprep.subr.mxu0 0.0
    %2967 = vmatpush1.msra.mxu0 0.0
    %2968 = vmatprep.subr.mxu0 0.0
    %2969 = vmatpush1.msra.mxu0 0.0
    %2970 = vmatprep.subr.mxu0 0.0
    %2971 = vmatpush1.msra.mxu0 0.0
    %2972 = vmatprep.subr.mxu0 0.0
    %2973 = vmatpush1.msra.mxu0 0.0
    %2974 = vmatprep.subr.mxu0 0.0
    %2975 = vmatpush1.msra.mxu0 0.0
    %2976 = vmatprep.subr.mxu0 0.0
    %2977 = vmatpush1.msra.mxu0 0.0
    %2978 = vmatprep.subr.mxu0 0.0
    %2979 = vmatpush1.msra.mxu0 0.0
    %2980 = vmatprep.subr.mxu0 0.0
    %2981 = vmatpush1.msra.mxu0 0.0
    %2982 = vmatprep.subr.mxu0 0.0
    %2983 = vmatpush1.msra.mxu0 0.0
    %2984 = vmatprep.subr.mxu0 0.0
    %2985 = vmatpush1.msra.mxu0 0.0
    %2986 = vmatprep.subr.mxu0 0.0
    %2987 = vmatpush1.msra.mxu0 0.0
    %2988 = vmatprep.subr.mxu0 0.0
    %2989 = vmatpush1.msra.mxu0 0.0
    %2990 = vmatprep.subr.mxu0 0.0
    %2991 = vmatpush1.msra.mxu0 0.0
    %2992 = vmatprep.mubr.f32.mxu0 0.0
    %2993 = vmatmul.mubr.f32.gmra.mrb[0].mxu0 %v2926
    %v2994 = vpop.f32.mrb[0].mxu0
    %v2995 = vadd.f32 %v1188, %v2994
    %v2996 = vpop.f32.mrb[0].mxu0
    %v2997 = vadd.f32 %v1216, %v2996
    %2998 = vdwg.mxu0
    %v2999 = vld [vmem:[#allocation2 + $0xd] sm:$0x1]
    %v3000 = vadd.f32 %v2999, %v2995
    %v3001 = vxor.u32 %v3000, 2147483648
    %v3002 = vmul.f32 %v3001, 1.442695
    %v3003 = vpow.pop %v3002
    %v3004 = vadd.f32 %v3003, 1.0
    %v3005 = vrcp.pop %v3004
    %v3006 = vmul.f32 1.0, %v3005
    %3008 = vrot.lane.b32.xlu0 %v2995, 64
    %v3009 = vpop.permute.xlu0 %3008
    %v3011 = vmul.f32 %v3006, %v3009
    %3013 = vrot.lane.b32.xlu0 %v3011, 64
    %v3014 = vpop.permute.xlu0 %3013
    %v3016 = vadd.f32 %v2999, %v3014
    %v3017 = vtanh.pop %v3016
    %v3018 = vsub.f32 1.0, %v3006
    %3020 = vrot.lane.b32.xlu0 %v3017, 96
    %v3021 = vpop.permute.xlu0 %3020
    %v3023 = vmul.f32 %v3018, %v3021
    %v3024 = vmul.f32 %v3006, %v2883
    %v3025 = vadd.f32 %v3023, %v3024
    %v3026 = vxor.u32 %v2995, 2147483648
    %v3027 = vmul.f32 %v3026, 1.442695
    %v3028 = vpow.pop %v3027
    %v3029 = vadd.f32 %v3028, 1.0
    %v3030 = vrcp.pop %v3029
    %v3031 = vmul.f32 1.0, %v3030
    %v3032 = vxor.u32 %v2997, 2147483648
    %v3033 = vmul.f32 %v3032, 1.442695
    %v3034 = vpow.pop %v3033
    %v3035 = vadd.f32 %v3034, 1.0
    %v3036 = vrcp.pop %v3035
    %v3037 = vmul.f32 1.0, %v3036
    %3039 = vrot.lane.b32.xlu0 %v2997, 32
    %v3040 = vpop.permute.xlu0 %3039
    %v3042 = vmul.f32 %v3031, %v3040
    %3044 = vrot.lane.b32.xlu0 %v3042, 64
    %v3045 = vpop.permute.xlu0 %3044
    %v3047 = vadd.f32 %v2997, %v3045
    %v3048 = vtanh.pop %v3047
    %v3049 = vsub.f32 1.0, %v3037
    %3051 = vrot.lane.b32.xlu0 %v3048, 96
    %v3052 = vpop.permute.xlu0 %3051
    %v3054 = vmul.f32 %v3049, %v3052
    %v3055 = vmul.f32 %v3037, %v2914
    %v3056 = vadd.f32 %v3054, %v3055
    %3057 = vst.msk [vmem:[#allocation3 + $0xc] sm:$0x1] %vm1352, %v3056
    %3059 = vrot.lane.b32.xlu0 %v3025, 96
    %v3060 = vpop.permute.xlu0 %3059
    %3063 = vrot.lane.b32.xlu0 %v3056, 32
    %v3064 = vpop.permute.xlu0 %3063
    %v3066 = vsel %vm1211, %v3060, %v3064
    %v3068 = vsel %vm1219, %v3066, 0
    %3070 = vmatprep.subr.mxu0 %v1160
    %3071 = vmatpush1.msra.mxu0 %v1159
    %3072 = vmatprep.subr.mxu0 %v1162
    %3073 = vmatpush1.msra.mxu0 %v1161
    %3074 = vmatprep.subr.mxu0 %v1164
    %3075 = vmatpush1.msra.mxu0 %v1163
    %3076 = vmatprep.subr.mxu0 %v1166
    %3077 = vmatpush1.msra.mxu0 %v1165
    %3078 = vmatprep.subr.mxu0 %v1168
    %3079 = vmatpush1.msra.mxu0 %v1167
    %3080 = vmatprep.subr.mxu0 %v1170
    %3081 = vmatpush1.msra.mxu0 %v1169
    %3082 = vmatprep.subr.mxu0 %v1172
    %3083 = vmatpush1.msra.mxu0 %v1171
    %3084 = vmatprep.subr.mxu0 %v1174
    %3085 = vmatpush1.msra.mxu0 %v1173
    %3086 = vmatprep.subr.mxu0 0.0
    %3087 = vmatpush1.msra.mxu0 0.0
    %3088 = vmatprep.subr.mxu0 0.0
    %3089 = vmatpush1.msra.mxu0 0.0
    %3090 = vmatprep.subr.mxu0 0.0
    %3091 = vmatpush1.msra.mxu0 0.0
    %3092 = vmatprep.subr.mxu0 0.0
    %3093 = vmatpush1.msra.mxu0 0.0
    %3094 = vmatprep.subr.mxu0 0.0
    %3095 = vmatpush1.msra.mxu0 0.0
    %3096 = vmatprep.subr.mxu0 0.0
    %3097 = vmatpush1.msra.mxu0 0.0
    %3098 = vmatprep.subr.mxu0 0.0
    %3099 = vmatpush1.msra.mxu0 0.0
    %3100 = vmatprep.subr.mxu0 0.0
    %3101 = vmatpush1.msra.mxu0 0.0
    %3102 = vmatprep.subr.mxu0 0.0
    %3103 = vmatpush1.msra.mxu0 0.0
    %3104 = vmatprep.subr.mxu0 0.0
    %3105 = vmatpush1.msra.mxu0 0.0
    %3106 = vmatprep.subr.mxu0 0.0
    %3107 = vmatpush1.msra.mxu0 0.0
    %3108 = vmatprep.subr.mxu0 0.0
    %3109 = vmatpush1.msra.mxu0 0.0
    %3110 = vmatprep.subr.mxu0 0.0
    %3111 = vmatpush1.msra.mxu0 0.0
    %3112 = vmatprep.subr.mxu0 0.0
    %3113 = vmatpush1.msra.mxu0 0.0
    %3114 = vmatprep.subr.mxu0 0.0
    %3115 = vmatpush1.msra.mxu0 0.0
    %3116 = vmatprep.subr.mxu0 0.0
    %3117 = vmatpush1.msra.mxu0 0.0
    %3118 = vmatprep.subr.mxu0 0.0
    %3119 = vmatpush1.msra.mxu0 0.0
    %3120 = vmatprep.subr.mxu0 0.0
    %3121 = vmatpush1.msra.mxu0 0.0
    %3122 = vmatprep.subr.mxu0 0.0
    %3123 = vmatpush1.msra.mxu0 0.0
    %3124 = vmatprep.subr.mxu0 0.0
    %3125 = vmatpush1.msra.mxu0 0.0
    %3126 = vmatprep.subr.mxu0 0.0
    %3127 = vmatpush1.msra.mxu0 0.0
    %3128 = vmatprep.subr.mxu0 0.0
    %3129 = vmatpush1.msra.mxu0 0.0
    %3130 = vmatprep.subr.mxu0 0.0
    %3131 = vmatpush1.msra.mxu0 0.0
    %3132 = vmatprep.subr.mxu0 0.0
    %3133 = vmatpush1.msra.mxu0 0.0
    %3134 = vmatprep.mubr.f32.mxu0 0.0
    %3135 = vmatmul.mubr.f32.gmra.mrb[0].mxu0 %v3068
    %v3136 = vpop.f32.mrb[0].mxu0
    %v3137 = vadd.f32 %v1188, %v3136
    %v3138 = vpop.f32.mrb[0].mxu0
    %v3139 = vadd.f32 %v1216, %v3138
    %3140 = vdwg.mxu0
    %v3141 = vld [vmem:[#allocation2 + $0xe] sm:$0x1]
    %v3142 = vadd.f32 %v3141, %v3137
    %v3143 = vxor.u32 %v3142, 2147483648
    %v3144 = vmul.f32 %v3143, 1.442695
    %v3145 = vpow.pop %v3144
    %v3146 = vadd.f32 %v3145, 1.0
    %v3147 = vrcp.pop %v3146
    %v3148 = vmul.f32 1.0, %v3147
    %3150 = vrot.lane.b32.xlu0 %v3137, 64
    %v3151 = vpop.permute.xlu0 %3150
    %v3153 = vmul.f32 %v3148, %v3151
    %3155 = vrot.lane.b32.xlu0 %v3153, 64
    %v3156 = vpop.permute.xlu0 %3155
    %v3158 = vadd.f32 %v3141, %v3156
    %v3159 = vtanh.pop %v3158
    %v3160 = vsub.f32 1.0, %v3148
    %3162 = vrot.lane.b32.xlu0 %v3159, 96
    %v3163 = vpop.permute.xlu0 %3162
    %v3165 = vmul.f32 %v3160, %v3163
    %v3166 = vmul.f32 %v3148, %v3025
    %v3167 = vadd.f32 %v3165, %v3166
    %v3168 = vxor.u32 %v3137, 2147483648
    %v3169 = vmul.f32 %v3168, 1.442695
    %v3170 = vpow.pop %v3169
    %v3171 = vadd.f32 %v3170, 1.0
    %v3172 = vrcp.pop %v3171
    %v3173 = vmul.f32 1.0, %v3172
    %v3174 = vxor.u32 %v3139, 2147483648
    %v3175 = vmul.f32 %v3174, 1.442695
    %v3176 = vpow.pop %v3175
    %v3177 = vadd.f32 %v3176, 1.0
    %v3178 = vrcp.pop %v3177
    %v3179 = vmul.f32 1.0, %v3178
    %3181 = vrot.lane.b32.xlu0 %v3139, 32
    %v3182 = vpop.permute.xlu0 %3181
    %v3184 = vmul.f32 %v3173, %v3182
    %3186 = vrot.lane.b32.xlu0 %v3184, 64
    %v3187 = vpop.permute.xlu0 %3186
    %v3189 = vadd.f32 %v3139, %v3187
    %v3190 = vtanh.pop %v3189
    %v3191 = vsub.f32 1.0, %v3179
    %3193 = vrot.lane.b32.xlu0 %v3190, 96
    %v3194 = vpop.permute.xlu0 %3193
    %v3196 = vmul.f32 %v3191, %v3194
    %v3197 = vmul.f32 %v3179, %v3056
    %v3198 = vadd.f32 %v3196, %v3197
    %3199 = vst.msk [vmem:[#allocation3 + $0xd] sm:$0x1] %vm1352, %v3198
    %3201 = vrot.lane.b32.xlu0 %v3167, 96
    %v3202 = vpop.permute.xlu0 %3201
    %3205 = vrot.lane.b32.xlu0 %v3198, 32
    %v3206 = vpop.permute.xlu0 %3205
    %v3208 = vsel %vm1211, %v3202, %v3206
    %v3210 = vsel %vm1219, %v3208, 0
    %3212 = vmatprep.subr.mxu0 %v1160
    %3213 = vmatpush1.msra.mxu0 %v1159
    %3214 = vmatprep.subr.mxu0 %v1162
    %3215 = vmatpush1.msra.mxu0 %v1161
    %3216 = vmatprep.subr.mxu0 %v1164
    %3217 = vmatpush1.msra.mxu0 %v1163
    %3218 = vmatprep.subr.mxu0 %v1166
    %3219 = vmatpush1.msra.mxu0 %v1165
    %3220 = vmatprep.subr.mxu0 %v1168
    %3221 = vmatpush1.msra.mxu0 %v1167
    %3222 = vmatprep.subr.mxu0 %v1170
    %3223 = vmatpush1.msra.mxu0 %v1169
    %3224 = vmatprep.subr.mxu0 %v1172
    %3225 = vmatpush1.msra.mxu0 %v1171
    %3226 = vmatprep.subr.mxu0 %v1174
    %3227 = vmatpush1.msra.mxu0 %v1173
    %3228 = vmatprep.subr.mxu0 0.0
    %3229 = vmatpush1.msra.mxu0 0.0
    %3230 = vmatprep.subr.mxu0 0.0
    %3231 = vmatpush1.msra.mxu0 0.0
    %3232 = vmatprep.subr.mxu0 0.0
    %3233 = vmatpush1.msra.mxu0 0.0
    %3234 = vmatprep.subr.mxu0 0.0
    %3235 = vmatpush1.msra.mxu0 0.0
    %3236 = vmatprep.subr.mxu0 0.0
    %3237 = vmatpush1.msra.mxu0 0.0
    %3238 = vmatprep.subr.mxu0 0.0
    %3239 = vmatpush1.msra.mxu0 0.0
    %3240 = vmatprep.subr.mxu0 0.0
    %3241 = vmatpush1.msra.mxu0 0.0
    %3242 = vmatprep.subr.mxu0 0.0
    %3243 = vmatpush1.msra.mxu0 0.0
    %3244 = vmatprep.subr.mxu0 0.0
    %3245 = vmatpush1.msra.mxu0 0.0
    %3246 = vmatprep.subr.mxu0 0.0
    %3247 = vmatpush1.msra.mxu0 0.0
    %3248 = vmatprep.subr.mxu0 0.0
    %3249 = vmatpush1.msra.mxu0 0.0
    %3250 = vmatprep.subr.mxu0 0.0
    %3251 = vmatpush1.msra.mxu0 0.0
    %3252 = vmatprep.subr.mxu0 0.0
    %3253 = vmatpush1.msra.mxu0 0.0
    %3254 = vmatprep.subr.mxu0 0.0
    %3255 = vmatpush1.msra.mxu0 0.0
    %3256 = vmatprep.subr.mxu0 0.0
    %3257 = vmatpush1.msra.mxu0 0.0
    %3258 = vmatprep.subr.mxu0 0.0
    %3259 = vmatpush1.msra.mxu0 0.0
    %3260 = vmatprep.subr.mxu0 0.0
    %3261 = vmatpush1.msra.mxu0 0.0
    %3262 = vmatprep.subr.mxu0 0.0
    %3263 = vmatpush1.msra.mxu0 0.0
    %3264 = vmatprep.subr.mxu0 0.0
    %3265 = vmatpush1.msra.mxu0 0.0
    %3266 = vmatprep.subr.mxu0 0.0
    %3267 = vmatpush1.msra.mxu0 0.0
    %3268 = vmatprep.subr.mxu0 0.0
    %3269 = vmatpush1.msra.mxu0 0.0
    %3270 = vmatprep.subr.mxu0 0.0
    %3271 = vmatpush1.msra.mxu0 0.0
    %3272 = vmatprep.subr.mxu0 0.0
    %3273 = vmatpush1.msra.mxu0 0.0
    %3274 = vmatprep.subr.mxu0 0.0
    %3275 = vmatpush1.msra.mxu0 0.0
    %3276 = vmatprep.mubr.f32.mxu0 0.0
    %3277 = vmatmul.mubr.f32.gmra.mrb[0].mxu0 %v3210
    %v3278 = vpop.f32.mrb[0].mxu0
    %v3279 = vadd.f32 %v1188, %v3278
    %v3280 = vpop.f32.mrb[0].mxu0
    %v3281 = vadd.f32 %v1216, %v3280
    %3282 = vdwg.mxu0
    %v3283 = vld [vmem:[#allocation2 + $0xf] sm:$0x1]
    %v3284 = vadd.f32 %v3283, %v3279
    %v3285 = vxor.u32 %v3284, 2147483648
    %v3286 = vmul.f32 %v3285, 1.442695
    %v3287 = vpow.pop %v3286
    %v3288 = vadd.f32 %v3287, 1.0
    %v3289 = vrcp.pop %v3288
    %v3290 = vmul.f32 1.0, %v3289
    %3292 = vrot.lane.b32.xlu0 %v3279, 64
    %v3293 = vpop.permute.xlu0 %3292
    %v3295 = vmul.f32 %v3290, %v3293
    %3297 = vrot.lane.b32.xlu0 %v3295, 64
    %v3298 = vpop.permute.xlu0 %3297
    %v3300 = vadd.f32 %v3283, %v3298
    %v3301 = vtanh.pop %v3300
    %v3302 = vsub.f32 1.0, %v3290
    %3304 = vrot.lane.b32.xlu0 %v3301, 96
    %v3305 = vpop.permute.xlu0 %3304
    %v3307 = vmul.f32 %v3302, %v3305
    %v3308 = vmul.f32 %v3290, %v3167
    %v3309 = vadd.f32 %v3307, %v3308
    %v3310 = vxor.u32 %v3279, 2147483648
    %v3311 = vmul.f32 %v3310, 1.442695
    %v3312 = vpow.pop %v3311
    %v3313 = vadd.f32 %v3312, 1.0
    %v3314 = vrcp.pop %v3313
    %v3315 = vmul.f32 1.0, %v3314
    %v3316 = vxor.u32 %v3281, 2147483648
    %v3317 = vmul.f32 %v3316, 1.442695
    %v3318 = vpow.pop %v3317
    %v3319 = vadd.f32 %v3318, 1.0
    %v3320 = vrcp.pop %v3319
    %v3321 = vmul.f32 1.0, %v3320
    %3323 = vrot.lane.b32.xlu0 %v3281, 32
    %v3324 = vpop.permute.xlu0 %3323
    %v3326 = vmul.f32 %v3315, %v3324
    %3328 = vrot.lane.b32.xlu0 %v3326, 64
    %v3329 = vpop.permute.xlu0 %3328
    %v3331 = vadd.f32 %v3281, %v3329
    %v3332 = vtanh.pop %v3331
    %v3333 = vsub.f32 1.0, %v3321
    %3335 = vrot.lane.b32.xlu0 %v3332, 96
    %v3336 = vpop.permute.xlu0 %3335
    %v3338 = vmul.f32 %v3333, %v3336
    %v3339 = vmul.f32 %v3321, %v3198
    %v3340 = vadd.f32 %v3338, %v3339
    %3341 = vst.msk [vmem:[#allocation3 + $0xe] sm:$0x1] %vm1352, %v3340
    %3343 = vrot.lane.b32.xlu0 %v3309, 96
    %v3344 = vpop.permute.xlu0 %3343
    %3347 = vrot.lane.b32.xlu0 %v3340, 32
    %v3348 = vpop.permute.xlu0 %3347
    %v3350 = vsel %vm1211, %v3344, %v3348
    %v3352 = vsel %vm1219, %v3350, 0
    %3354 = vmatprep.subr.mxu0 %v1160
    %3355 = vmatpush1.msra.mxu0 %v1159
    %3356 = vmatprep.subr.mxu0 %v1162
    %3357 = vmatpush1.msra.mxu0 %v1161
    %3358 = vmatprep.subr.mxu0 %v1164
    %3359 = vmatpush1.msra.mxu0 %v1163
    %3360 = vmatprep.subr.mxu0 %v1166
    %3361 = vmatpush1.msra.mxu0 %v1165
    %3362 = vmatprep.subr.mxu0 %v1168
    %3363 = vmatpush1.msra.mxu0 %v1167
    %3364 = vmatprep.subr.mxu0 %v1170
    %3365 = vmatpush1.msra.mxu0 %v1169
    %3366 = vmatprep.subr.mxu0 %v1172
    %3367 = vmatpush1.msra.mxu0 %v1171
    %3368 = vmatprep.subr.mxu0 %v1174
    %3369 = vmatpush1.msra.mxu0 %v1173
    %3370 = vmatprep.subr.mxu0 0.0
    %3371 = vmatpush1.msra.mxu0 0.0
    %3372 = vmatprep.subr.mxu0 0.0
    %3373 = vmatpush1.msra.mxu0 0.0
    %3374 = vmatprep.subr.mxu0 0.0
    %3375 = vmatpush1.msra.mxu0 0.0
    %3376 = vmatprep.subr.mxu0 0.0
    %3377 = vmatpush1.msra.mxu0 0.0
    %3378 = vmatprep.subr.mxu0 0.0
    %3379 = vmatpush1.msra.mxu0 0.0
    %3380 = vmatprep.subr.mxu0 0.0
    %3381 = vmatpush1.msra.mxu0 0.0
    %3382 = vmatprep.subr.mxu0 0.0
    %3383 = vmatpush1.msra.mxu0 0.0
    %3384 = vmatprep.subr.mxu0 0.0
    %3385 = vmatpush1.msra.mxu0 0.0
    %3386 = vmatprep.subr.mxu0 0.0
    %3387 = vmatpush1.msra.mxu0 0.0
    %3388 = vmatprep.subr.mxu0 0.0
    %3389 = vmatpush1.msra.mxu0 0.0
    %3390 = vmatprep.subr.mxu0 0.0
    %3391 = vmatpush1.msra.mxu0 0.0
    %3392 = vmatprep.subr.mxu0 0.0
    %3393 = vmatpush1.msra.mxu0 0.0
    %3394 = vmatprep.subr.mxu0 0.0
    %3395 = vmatpush1.msra.mxu0 0.0
    %3396 = vmatprep.subr.mxu0 0.0
    %3397 = vmatpush1.msra.mxu0 0.0
    %3398 = vmatprep.subr.mxu0 0.0
    %3399 = vmatpush1.msra.mxu0 0.0
    %3400 = vmatprep.subr.mxu0 0.0
    %3401 = vmatpush1.msra.mxu0 0.0
    %3402 = vmatprep.subr.mxu0 0.0
    %3403 = vmatpush1.msra.mxu0 0.0
    %3404 = vmatprep.subr.mxu0 0.0
    %3405 = vmatpush1.msra.mxu0 0.0
    %3406 = vmatprep.subr.mxu0 0.0
    %3407 = vmatpush1.msra.mxu0 0.0
    %3408 = vmatprep.subr.mxu0 0.0
    %3409 = vmatpush1.msra.mxu0 0.0
    %3410 = vmatprep.subr.mxu0 0.0
    %3411 = vmatpush1.msra.mxu0 0.0
    %3412 = vmatprep.subr.mxu0 0.0
    %3413 = vmatpush1.msra.mxu0 0.0
    %3414 = vmatprep.subr.mxu0 0.0
    %3415 = vmatpush1.msra.mxu0 0.0
    %3416 = vmatprep.subr.mxu0 0.0
    %3417 = vmatpush1.msra.mxu0 0.0
    %3418 = vmatprep.mubr.f32.mxu0 0.0
    %3419 = vmatmul.mubr.f32.gmra.mrb[0].mxu0 %v3352
    %v3420 = vpop.f32.mrb[0].mxu0
    %v3421 = vadd.f32 %v1188, %v3420
    %v3422 = vpop.f32.mrb[0].mxu0
    %v3423 = vadd.f32 %v1216, %v3422
    %3424 = vdwg.mxu0
    %v3425 = vxor.u32 %v3421, 2147483648
    %v3426 = vmul.f32 %v3425, 1.442695
    %v3427 = vpow.pop %v3426
    %v3428 = vadd.f32 %v3427, 1.0
    %v3429 = vrcp.pop %v3428
    %v3430 = vmul.f32 1.0, %v3429
    %v3431 = vxor.u32 %v3423, 2147483648
    %v3432 = vmul.f32 %v3431, 1.442695
    %v3433 = vpow.pop %v3432
    %v3434 = vadd.f32 %v3433, 1.0
    %v3435 = vrcp.pop %v3434
    %v3436 = vmul.f32 1.0, %v3435
    %3438 = vrot.lane.b32.xlu0 %v3423, 32
    %v3439 = vpop.permute.xlu0 %3438
    %v3441 = vmul.f32 %v3430, %v3439
    %3443 = vrot.lane.b32.xlu0 %v3441, 64
    %v3444 = vpop.permute.xlu0 %3443
    %v3446 = vadd.f32 %v3423, %v3444
    %v3447 = vtanh.pop %v3446
    %v3448 = vsub.f32 1.0, %v3436
    %3450 = vrot.lane.b32.xlu0 %v3447, 96
    %v3451 = vpop.permute.xlu0 %3450
    %v3453 = vmul.f32 %v3448, %v3451
    %v3454 = vmul.f32 %v3436, %v3340
    %v3455 = vadd.f32 %v3453, %v3454
    %3456 = vst.msk [vmem:[#allocation3 + $0xf] sm:$0x1] %vm1352, %v3455
    %v3457 = vld [vmem:[#allocation3] sm:$0xff]
    %v3458 = vld [vmem:[#allocation3 + $0x8] sm:$0xff]
    %v3459 = vld [vmem:[%s19] sm:$0xff]
    %v3460 = vld [vmem:[%s19 + $0x8] sm:$0xff]
    %v3461 = vld [vmem:[%s19 + $0x10] sm:$0xff]
    %v3462 = vld [vmem:[%s19 + $0x18] sm:$0xff]
    %v3464 = vsel %vm1211, %v3457, 0
    %v3467 = vsel %vm1211, %v3458, 0
    %3469 = vmatprep.subr.mxu0 0.0
    %3470 = vmatpush1.msra.mxu0 %v3459
    %3471 = vmatprep.subr.mxu0 0.0
    %3472 = vmatpush1.msra.mxu0 %v3460
    %3473 = vmatprep.subr.mxu0 0.0
    %3474 = vmatpush1.msra.mxu0 %v3461
    %3475 = vmatprep.subr.mxu0 0.0
    %3476 = vmatpush1.msra.mxu0 %v3462
    %3477 = vmatprep.subr.mxu0 0.0
    %3478 = vmatpush1.msra.mxu0 0.0
    %3479 = vmatprep.subr.mxu0 0.0
    %3480 = vmatpush1.msra.mxu0 0.0
    %3481 = vmatprep.subr.mxu0 0.0
    %3482 = vmatpush1.msra.mxu0 0.0
    %3483 = vmatprep.subr.mxu0 0.0
    %3484 = vmatpush1.msra.mxu0 0.0
    %3485 = vmatprep.subr.mxu0 0.0
    %3486 = vmatpush1.msra.mxu0 0.0
    %3487 = vmatprep.subr.mxu0 0.0
    %3488 = vmatpush1.msra.mxu0 0.0
    %3489 = vmatprep.subr.mxu0 0.0
    %3490 = vmatpush1.msra.mxu0 0.0
    %3491 = vmatprep.subr.mxu0 0.0
    %3492 = vmatpush1.msra.mxu0 0.0
    %3493 = vmatprep.subr.mxu0 0.0
    %3494 = vmatpush1.msra.mxu0 0.0
    %3495 = vmatprep.subr.mxu0 0.0
    %3496 = vmatpush1.msra.mxu0 0.0
    %3497 = vmatprep.subr.mxu0 0.0
    %3498 = vmatpush1.msra.mxu0 0.0
    %3499 = vmatprep.subr.mxu0 0.0
    %3500 = vmatpush1.msra.mxu0 0.0
    %3501 = vmatprep.subr.mxu0 0.0
    %3502 = vmatpush1.msra.mxu0 0.0
    %3503 = vmatprep.subr.mxu0 0.0
    %3504 = vmatpush1.msra.mxu0 0.0
    %3505 = vmatprep.subr.mxu0 0.0
    %3506 = vmatpush1.msra.mxu0 0.0
    %3507 = vmatprep.subr.mxu0 0.0
    %3508 = vmatpush1.msra.mxu0 0.0
    %3509 = vmatprep.subr.mxu0 0.0
    %3510 = vmatpush1.msra.mxu0 0.0
    %3511 = vmatprep.subr.mxu0 0.0
    %3512 = vmatpush1.msra.mxu0 0.0
    %3513 = vmatprep.subr.mxu0 0.0
    %3514 = vmatpush1.msra.mxu0 0.0
    %3515 = vmatprep.subr.mxu0 0.0
    %3516 = vmatpush1.msra.mxu0 0.0
    %3517 = vmatprep.subr.mxu0 0.0
    %3518 = vmatpush1.msra.mxu0 0.0
    %3519 = vmatprep.subr.mxu0 0.0
    %3520 = vmatpush1.msra.mxu0 0.0
    %3521 = vmatprep.subr.mxu0 0.0
    %3522 = vmatpush1.msra.mxu0 0.0
    %3523 = vmatprep.subr.mxu0 0.0
    %3524 = vmatpush1.msra.mxu0 0.0
    %3525 = vmatprep.subr.mxu0 0.0
    %3526 = vmatpush1.msra.mxu0 0.0
    %3527 = vmatprep.subr.mxu0 0.0
    %3528 = vmatpush1.msra.mxu0 0.0
    %3529 = vmatprep.subr.mxu0 0.0
    %3530 = vmatpush1.msra.mxu0 0.0
    %3531 = vmatprep.subr.mxu0 0.0
    %3532 = vmatpush1.msra.mxu0 0.0
    %3533 = vmatprep.mubr.f32.mxu0 0.0
    %3534 = vmatmul.mubr.f32.gmra.mrb[0].mxu0 %v3464
    %v3535 = vpop.f32.mrb[0].mxu0
    %v3536 = vadd.f32 0.0, %v3535
    %v3537 = vpop.f32.mrb[0].mxu0
    %3538 = vmatprep.mubr.f32.mxu0 0.0
    %3539 = vmatmul.mubr.f32.gmra.mrb[0].mxu0 %v3467
    %v3540 = vpop.f32.mrb[0].mxu0
    %v3541 = vadd.f32 0.0, %v3540
    %v3542 = vpop.f32.mrb[0].mxu0
    %3543 = vdwg.mxu0
    %vm3544 = vcmp.gt.f32.partialorder %v3536, 0.0
    %vm3545 = vcmp.gt.f32.partialorder %v3541, 0.0
    %v3546 = vmul.f32 %v3536, 0.01
    %v3547 = vmul.f32 %v3541, 0.01
    %v3548 = vsel %vm3544, %v3536, %v3546
    %v3549 = vsel %vm3545, %v3541, %v3547
    %v3550 = vld [vmem:[%s20] sm:$0xff]
    %v3551 = vld [vmem:[%s20 + $0x8] sm:$0xff]
    %v3552 = vld [vmem:[%s20 + $0x10] sm:$0xff]
    %v3553 = vld [vmem:[%s20 + $0x18] sm:$0xff]
    %v3554 = vld [vmem:[%s20 + $0x20] sm:$0xff]
    %v3555 = vld [vmem:[%s20 + $0x28] sm:$0xff]
    %v3556 = vld [vmem:[%s20 + $0x30] sm:$0xff]
    %v3557 = vld [vmem:[%s20 + $0x38] sm:$0xff]
    %v3558 = vld [vmem:[%s20 + $0x40] sm:$0xff]
    %v3559 = vld [vmem:[%s20 + $0x48] sm:$0xff]
    %v3560 = vld [vmem:[%s20 + $0x50] sm:$0xff]
    %v3561 = vld [vmem:[%s20 + $0x58] sm:$0xff]
    %v3562 = vld [vmem:[%s20 + $0x60] sm:$0xff]
    %v3563 = vld [vmem:[%s20 + $0x68] sm:$0xff]
    %v3564 = vld [vmem:[%s20 + $0x70] sm:$0xff]
    %v3565 = vld [vmem:[%s20 + $0x78] sm:$0xff]
    %3566 = vmatprep.subr.mxu0 0.0
    %3567 = vmatpush1.msra.mxu0 %v3550
    %3568 = vmatprep.subr.mxu0 0.0
    %3569 = vmatpush1.msra.mxu0 %v3551
    %3570 = vmatprep.subr.mxu0 0.0
    %3571 = vmatpush1.msra.mxu0 %v3552
    %3572 = vmatprep.subr.mxu0 0.0
    %3573 = vmatpush1.msra.mxu0 %v3553
    %3574 = vmatprep.subr.mxu0 0.0
    %3575 = vmatpush1.msra.mxu0 %v3554
    %3576 = vmatprep.subr.mxu0 0.0
    %3577 = vmatpush1.msra.mxu0 %v3555
    %3578 = vmatprep.subr.mxu0 0.0
    %3579 = vmatpush1.msra.mxu0 %v3556
    %3580 = vmatprep.subr.mxu0 0.0
    %3581 = vmatpush1.msra.mxu0 %v3557
    %3582 = vmatprep.subr.mxu0 0.0
    %3583 = vmatpush1.msra.mxu0 %v3558
    %3584 = vmatprep.subr.mxu0 0.0
    %3585 = vmatpush1.msra.mxu0 %v3559
    %3586 = vmatprep.subr.mxu0 0.0
    %3587 = vmatpush1.msra.mxu0 %v3560
    %3588 = vmatprep.subr.mxu0 0.0
    %3589 = vmatpush1.msra.mxu0 %v3561
    %3590 = vmatprep.subr.mxu0 0.0
    %3591 = vmatpush1.msra.mxu0 %v3562
    %3592 = vmatprep.subr.mxu0 0.0
    %3593 = vmatpush1.msra.mxu0 %v3563
    %3594 = vmatprep.subr.mxu0 0.0
    %3595 = vmatpush1.msra.mxu0 %v3564
    %3596 = vmatprep.subr.mxu0 0.0
    %3597 = vmatpush1.msra.mxu0 %v3565
    %3598 = vmatprep.subr.mxu0 0.0
    %3599 = vmatpush1.msra.mxu0 0.0
    %3600 = vmatprep.subr.mxu0 0.0
    %3601 = vmatpush1.msra.mxu0 0.0
    %3602 = vmatprep.subr.mxu0 0.0
    %3603 = vmatpush1.msra.mxu0 0.0
    %3604 = vmatprep.subr.mxu0 0.0
    %3605 = vmatpush1.msra.mxu0 0.0
    %3606 = vmatprep.subr.mxu0 0.0
    %3607 = vmatpush1.msra.mxu0 0.0
    %3608 = vmatprep.subr.mxu0 0.0
    %3609 = vmatpush1.msra.mxu0 0.0
    %3610 = vmatprep.subr.mxu0 0.0
    %3611 = vmatpush1.msra.mxu0 0.0
    %3612 = vmatprep.subr.mxu0 0.0
    %3613 = vmatpush1.msra.mxu0 0.0
    %3614 = vmatprep.subr.mxu0 0.0
    %3615 = vmatpush1.msra.mxu0 0.0
    %3616 = vmatprep.subr.mxu0 0.0
    %3617 = vmatpush1.msra.mxu0 0.0
    %3618 = vmatprep.subr.mxu0 0.0
    %3619 = vmatpush1.msra.mxu0 0.0
    %3620 = vmatprep.subr.mxu0 0.0
    %3621 = vmatpush1.msra.mxu0 0.0
    %3622 = vmatprep.subr.mxu0 0.0
    %3623 = vmatpush1.msra.mxu0 0.0
    %3624 = vmatprep.subr.mxu0 0.0
    %3625 = vmatpush1.msra.mxu0 0.0
    %3626 = vmatprep.subr.mxu0 0.0
    %3627 = vmatpush1.msra.mxu0 0.0
    %3628 = vmatprep.subr.mxu0 0.0
    %3629 = vmatpush1.msra.mxu0 0.0
    %3630 = vmatprep.mubr.f32.mxu0 0.0
    %3631 = vmatmul.mubr.f32.gmra.mrb[0].mxu0 %v3548
    %v3632 = vpop.f32.mrb[0].mxu0
    %v3633 = vadd.f32 0.0, %v3632
    %v3634 = vpop.f32.mrb[0].mxu0
    %3635 = vmatprep.mubr.f32.mxu0 0.0
    %3636 = vmatmul.mubr.f32.gmra.mrb[0].mxu0 %v3549
    %v3637 = vpop.f32.mrb[0].mxu0
    %v3638 = vadd.f32 0.0, %v3637
    %v3639 = vpop.f32.mrb[0].mxu0
    %3640 = vdwg.mxu0
    %vm3641 = vcmp.gt.f32.partialorder %v3633, 0.0
    %vm3642 = vcmp.gt.f32.partialorder %v3638, 0.0
    %v3643 = vmul.f32 %v3633, 0.01
    %v3644 = vmul.f32 %v3638, 0.01
    %v3645 = vsel %vm3641, %v3633, %v3643
    %v3646 = vsel %vm3642, %v3638, %v3644
    %v3647 = vld [vmem:[%s21] sm:$0xff]
    %v3648 = vld [vmem:[%s21 + $0x8] sm:$0xff]
    %v3649 = vld [vmem:[%s21 + $0x10] sm:$0xff]
    %v3650 = vld [vmem:[%s21 + $0x18] sm:$0xff]
    %v3651 = vld [vmem:[%s21 + $0x20] sm:$0xff]
    %v3652 = vld [vmem:[%s21 + $0x28] sm:$0xff]
    %v3653 = vld [vmem:[%s21 + $0x30] sm:$0xff]
    %v3654 = vld [vmem:[%s21 + $0x38] sm:$0xff]
    %v3656 = vsel %vm1219, %v3645, 0
    %v3659 = vsel %vm1219, %v3646, 0
    %3661 = vmatprep.subr.mxu0 0.0
    %3662 = vmatpush1.msra.mxu0 %v3647
    %3663 = vmatprep.subr.mxu0 0.0
    %3664 = vmatpush1.msra.mxu0 %v3648
    %3665 = vmatprep.subr.mxu0 0.0
    %3666 = vmatpush1.msra.mxu0 %v3649
    %3667 = vmatprep.subr.mxu0 0.0
    %3668 = vmatpush1.msra.mxu0 %v3650
    %3669 = vmatprep.subr.mxu0 0.0
    %3670 = vmatpush1.msra.mxu0 %v3651
    %3671 = vmatprep.subr.mxu0 0.0
    %3672 = vmatpush1.msra.mxu0 %v3652
    %3673 = vmatprep.subr.mxu0 0.0
    %3674 = vmatpush1.msra.mxu0 %v3653
    %3675 = vmatprep.subr.mxu0 0.0
    %3676 = vmatpush1.msra.mxu0 %v3654
    %3677 = vmatprep.subr.mxu0 0.0
    %3678 = vmatpush1.msra.mxu0 0.0
    %3679 = vmatprep.subr.mxu0 0.0
    %3680 = vmatpush1.msra.mxu0 0.0
    %3681 = vmatprep.subr.mxu0 0.0
    %3682 = vmatpush1.msra.mxu0 0.0
    %3683 = vmatprep.subr.mxu0 0.0
    %3684 = vmatpush1.msra.mxu0 0.0
    %3685 = vmatprep.subr.mxu0 0.0
    %3686 = vmatpush1.msra.mxu0 0.0
    %3687 = vmatprep.subr.mxu0 0.0
    %3688 = vmatpush1.msra.mxu0 0.0
    %3689 = vmatprep.subr.mxu0 0.0
    %3690 = vmatpush1.msra.mxu0 0.0
    %3691 = vmatprep.subr.mxu0 0.0
    %3692 = vmatpush1.msra.mxu0 0.0
    %3693 = vmatprep.subr.mxu0 0.0
    %3694 = vmatpush1.msra.mxu0 0.0
    %3695 = vmatprep.subr.mxu0 0.0
    %3696 = vmatpush1.msra.mxu0 0.0
    %3697 = vmatprep.subr.mxu0 0.0
    %3698 = vmatpush1.msra.mxu0 0.0
    %3699 = vmatprep.subr.mxu0 0.0
    %3700 = vmatpush1.msra.mxu0 0.0
    %3701 = vmatprep.subr.mxu0 0.0
    %3702 = vmatpush1.msra.mxu0 0.0
    %3703 = vmatprep.subr.mxu0 0.0
    %3704 = vmatpush1.msra.mxu0 0.0
    %3705 = vmatprep.subr.mxu0 0.0
    %3706 = vmatpush1.msra.mxu0 0.0
    %3707 = vmatprep.subr.mxu0 0.0
    %3708 = vmatpush1.msra.mxu0 0.0
    %3709 = vmatprep.subr.mxu0 0.0
    %3710 = vmatpush1.msra.mxu0 0.0
    %3711 = vmatprep.subr.mxu0 0.0
    %3712 = vmatpush1.msra.mxu0 0.0
    %3713 = vmatprep.subr.mxu0 0.0
    %3714 = vmatpush1.msra.mxu0 0.0
    %3715 = vmatprep.subr.mxu0 0.0
    %3716 = vmatpush1.msra.mxu0 0.0
    %3717 = vmatprep.subr.mxu0 0.0
    %3718 = vmatpush1.msra.mxu0 0.0
    %3719 = vmatprep.subr.mxu0 0.0
    %3720 = vmatpush1.msra.mxu0 0.0
    %3721 = vmatprep.subr.mxu0 0.0
    %3722 = vmatpush1.msra.mxu0 0.0
    %3723 = vmatprep.subr.mxu0 0.0
    %3724 = vmatpush1.msra.mxu0 0.0
    %3725 = vmatprep.mubr.f32.mxu0 0.0
    %3726 = vmatmul.mubr.f32.gmra.mrb[0].mxu0 %v3656
    %v3727 = vpop.f32.mrb[0].mxu0
    %v3728 = vadd.f32 0.0, %v3727
    %v3729 = vpop.f32.mrb[0].mxu0
    %3730 = vmatprep.mubr.f32.mxu0 0.0
    %3731 = vmatmul.mubr.f32.gmra.mrb[0].mxu0 %v3659
    %v3732 = vpop.f32.mrb[0].mxu0
    %v3733 = vadd.f32 0.0, %v3732
    %v3734 = vpop.f32.mrb[0].mxu0
    %3735 = vdwg.mxu0
    %vm3736 = vcmp.gt.f32.partialorder %v3728, 0.0
    %vm3737 = vcmp.gt.f32.partialorder %v3733, 0.0
    %v3738 = vmul.f32 %v3728, 0.01
    %v3739 = vmul.f32 %v3733, 0.01
    %v3740 = vsel %vm3736, %v3728, %v3738
    %v3741 = vsel %vm3737, %v3733, %v3739
    %vm3742 = vcmask 7168
    %v3743 = vsel %vm3742, %v3740, 0.0
    %v3744 = vsel %vm3742, %v3741, 0.0
    %v3745 = vadd.f32 %v3743, %v3744
    %3746 = vadd.xlane.f32.xlu0 %v3745
    %v3747 = vpop.xlane.xlu0 %3746
    %v3748 = vrot.slane %v3747, 4
    %v3749 = vadd.f32 %v3747, %v3748
    %v3750 = vrot.slane %v3749, 2
    %v3751 = vadd.f32 %v3749, %v3750
    %v3752 = vrot.slane %v3751, 1
    %v3753 = vadd.f32 %v3751, %v3752
    %s3754 = vtos %v3753
    %v3755 = vrcp.pop 16.0
    %s3756 = vtos %v3755
    %s3757 = smul.f32 %s3754, %s3756
    %v3758 = vstv %s3757
    %vm3759 = vcmask 0
    %3760 = vst.msk [vmem:[#allocation19] sm:$0x1] %vm3759, %v3758
    // Predicated region
    $region126: #{ds_predict_forward.1} parent=1 // pred_check
      _
    $region127: #{ds_predict_forward.1} parent=1 // pred_check_branch
      %3762 = sbr.rel (0) target = $region129
    $region128: #{ds_predict_forward.1} parent=1 // pred_region
      %s3764 = ssub.s32 16, 16
      %3765 = vsyncadd [#allocation6], %s3764
      %s3767 = sshll.u32 [#allocation19], 4
      %s3768 = int_to_ptr.vmem [resolvable:$true] %s3767
      %3770 = dma.vmem_to_hbm [thread:$0]  %s3768, 16, %s22, [#allocation6]
    $region129: #{ds_predict_forward.1} parent=1 // pred_fallthru
      _
    // Predicated region
    $region130: #{ds_predict_forward.1} parent=1 // pred_check
      _
    $region131: #{ds_predict_forward.1} parent=1 // pred_check_branch
      %3772 = sbr.rel (0) target = $region133
    $region132: #{ds_predict_forward.1} parent=1 // pred_region
      %3773 = dma.done [#allocation6], 16
    $region133: #{ds_predict_forward.1} parent=1 // pred_fallthru
      _
    %3774 = vsyncpa [#allocation5], 1
    %3775 = vsyncpa [#allocation8], 1
    %3776 = vsyncpa [#allocation11], 1
    %3777 = vsyncpa [#allocation14], 1
    %3778 = vsyncpa [#allocation17], 1
    %3779 = vsyncpa [#allocation6], 1

</llo_original>
